<compile_context>
chip_gen: v5e
topology: v5e:2x2
jax: 0.10.0
libtpu: 0.0.40
codegen_flags: <defaults>
</compile_context>

<pallas_src>
import functools
import jax
import jax.numpy as jnp
from jax.experimental import pallas as pl
from jax.experimental.pallas import tpu as pltpu

LANE = 128


def _round_up(x, m):
    return -(-x // m) * m


def _vmem_specs(n):
    return [pl.BlockSpec(memory_space=pltpu.MemorySpace.VMEM) for _ in range(n)]


# ----------------------------------------------------------------------------- kernel

def _fused_kernel(*refs, scales, b2, t_len, n_taps):
    """Entire BaseModel.forward in a single launch.

    refs = [ypad, yorig, basis_0..S-1, W_enc, b_enc, W_dec, b_dec]   (inputs)
         + [mag_0..S-1, y_synth]                                     (outputs)
         + [frames_scratch_0..S-1]                                   (VMEM scratch)
    scales: tuple of (n_fft, hop, kpad, n_frames, pad_offset) per scale (static).
    """
    n_s = len(scales)
    ypad_ref, yorig_ref = refs[0], refs[1]
    basis_refs = refs[2:2 + n_s]
    w_enc_ref, b_enc_ref, w_dec_ref, b_dec_ref = refs[2 + n_s:6 + n_s]
    mag_refs = refs[6 + n_s:6 + 2 * n_s]
    synth_ref = refs[6 + 2 * n_s]
    frame_scratch = refs[7 + 2 * n_s:]

    head_x = None
    for s, (n_fft, hop, kpad, n_frames, off) in enumerate(scales):
        fsc = frame_scratch[s]
        # ---- in-kernel framing: hop-strided windows of the padded signal written into a
        #      VMEM frames buffer (f-major rows: frame f of all B2 channels at f*b2).
        for f in range(n_frames):
            a = off + f * hop
            fsc[f * b2:(f + 1) * b2, :] = ypad_ref[:, a:a + n_fft]
        frames = fsc[...].astype(jnp.bfloat16)                         # MXU input dtype

        # ---- one MXU matmul per scale against the fused [cos | -sin] windowed basis.
        y = jnp.dot(frames, basis_refs[s][...],
                    preferred_element_type=jnp.float32)                # (F*B2, 2*kpad)
        re = y[:, :kpad]
        im = y[:, kpad:]
        # f32 VPU/EUP math (v5e has no bf16 elementwise path); eps keeps sqrt differentiable.
        mag = jnp.sqrt(re * re + im * im + 1e-12)
        mag_refs[s][...] = mag                                         # lane-dense f32 store

        if s == 0:
            # encode() input stays in VMEM: flatten (frame, bin) into lanes per channel row
            # by lane-concatenating the per-frame (B2, kpad) blocks read back from the
            # just-written (still VMEM-resident) output ref.
            head_x = jnp.concatenate(
                [mag_refs[0][f * b2:(f + 1) * b2, :] for f in range(n_frames)], axis=1)

    # ---- fused encode + decode heads (no intermediate HBM round trip, no 16-lane output).
    z = jnp.tanh(jnp.dot(head_x.astype(jnp.bfloat16), w_enc_ref[...],
                         preferred_element_type=jnp.float32) + b_enc_ref[...])
    taps = (jnp.dot(z.astype(jnp.bfloat16), w_dec_ref[...],
                    preferred_element_type=jnp.float32) + b_dec_ref[...])   # (B2, n_taps)

    # ---- causal FIR synth: load y_orig once, build shifted copies as values (the zero
    #      block folds in the causal mask), VPU multiply-accumulate, one lane-dense store.
    x = yorig_ref[...]                                                  # (B2, T) f32
    acc = taps[:, 0:1] * x
    if n_taps > 1:
        xp = jnp.concatenate(
            [jnp.zeros((b2, n_taps - 1), jnp.float32), x], axis=1)      # (B2, T + n_taps-1)
        for p in range(1, n_taps):
            sh = n_taps - 1 - p
            acc = acc + taps[:, p:p + 1] * xp[:, sh:sh + t_len]         # x[t-p], 0 for t<p
    synth_ref[...] = acc


# ----------------------------------------------------------------------------- wrapper

def fused_forward(ypad, yorig, bases, w_enc, b_enc, w_dec, b_dec, *,
                  scales, b2, t_len, n_taps):
    """Single pallas_call for STFT magnitudes (all scales) + heads + FIR synth."""
    n_s = len(bases)
    kernel = functools.partial(_fused_kernel, scales=tuple(scales), b2=b2,
                               t_len=t_len, n_taps=n_taps)
    out_shape = tuple(
        [jax.ShapeDtypeStruct((nf * b2, kpad), jnp.float32)
         for (_, _, kpad, nf, _) in scales]
        + [jax.ShapeDtypeStruct((b2, t_len), jnp.float32)])
    scratch = [pltpu.VMEM((nf * b2, n_fft), jnp.float32)
               for (n_fft, _, _, nf, _) in scales]
    return pl.pallas_call(
        kernel,
        out_shape=out_shape,
        in_specs=_vmem_specs(2 + n_s + 4),
        out_specs=tuple(_vmem_specs(n_s + 1)),
        scratch_shapes=scratch,
    )(ypad, yorig, *bases, w_enc, b_enc, w_dec, b_dec)


# ----------------------------------------------------------------------------- glue

def dft_bases_fused(n_fft, kpad):
    """Hann-windowed real DFT basis packed as [cos | -sin], each K block zero-padded to
    `kpad` lanes, cast to bf16 for the MXU (accumulation stays f32 in-kernel)."""
    n = jnp.arange(n_fft, dtype=jnp.float32)
    k = jnp.arange(n_fft // 2 + 1, dtype=jnp.float32)
    win = 0.5 - 0.5 * jnp.cos(2.0 * jnp.pi * n / n_fft)            # periodic Hann
    ang = 2.0 * jnp.pi * n[:, None] * k[None, :] / n_fft
    cos_b = win[:, None] * jnp.cos(ang)
    sin_b = -win[:, None] * jnp.sin(ang)
    K = n_fft // 2 + 1
    basis = jnp.zeros((n_fft, 2 * kpad), jnp.float32)
    basis = basis.at[:, :K].set(cos_b).at[:, kpad:kpad + K].set(sin_b)
    return basis.astype(jnp.bfloat16)


class BaseModelPallas:
    """Pallas re-implementation of BaseModel.forward (MultiscaleFFT + heads + FIR synth),
    fused into one TPU launch."""

    def __init__(self, config, key):
        self.fft_scales = list(config["fft_scales"])
        self.overlap = config["overlap"]
        self.scale = self.fft_scales[0]
        self.hidden = config["hidden_size"]
        self.n_taps = config["n_taps"]
        self.audio_len = config["audio_len"]

        self.hops = [int(s * (1.0 - self.overlap)) for s in self.fft_scales]
        self.kpads = [_round_up(s // 2 + 1, LANE) for s in self.fft_scales]
        self.nframes = [self.audio_len // h + 1 for h in self.hops]     # torch.stft center=True
        self.max_pad = max(self.fft_scales) // 2
        # one reflect-padded signal serves every scale: scale s reads window offset
        # max_pad - n_fft_s//2 (the shorter reflect pad is an interior slice of the longer).
        self.scales_meta = [
            (s, h, kp, nf, self.max_pad - s // 2)
            for s, h, kp, nf in zip(self.fft_scales, self.hops, self.kpads, self.nframes)]
        self.bases = [dft_bases_fused(s, kp) for s, kp in zip(self.fft_scales, self.kpads)]

        f0, kp0 = self.nframes[0], self.kpads[0]
        k0 = self.fft_scales[0] // 2 + 1
        self.f0, self.k0, self.kp0 = f0, k0, kp0

        k1, k2 = jax.random.split(key)
        # Reference-layout encoder weights: rows indexed k * F0 + f, i.e. the flattened
        # (freq_bins, seq_len) spectrogram that BaseModel.forward passes to encode().
        w_enc_ref = 0.02 * jax.random.normal(k1, (k0 * f0, self.hidden), jnp.float32)
        # Fold the (freq, time) transpose and the K -> K_pad zero-padding into the weight
        # layout so the kernel consumes the lane-dense (frame, K_pad) flattening directly.
        w_packed = jnp.zeros((f0 * kp0, self.hidden), jnp.float32)
        dst = (jnp.arange(f0)[:, None] * kp0 + jnp.arange(k0)[None, :]).reshape(-1)
        src = (jnp.arange(k0)[None, :] * f0 + jnp.arange(f0)[:, None]).reshape(-1)
        w_packed = w_packed.at[dst].set(w_enc_ref[src])
        self.W_enc = w_packed.astype(jnp.bfloat16)
        self.b_enc = jnp.zeros((1, self.hidden), jnp.float32)
        self.W_dec = (0.10 * jax.random.normal(k2, (self.hidden, self.n_taps), jnp.float32)
                      ).astype(jnp.bfloat16)
        self.b_dec = jnp.zeros((1, self.n_taps), jnp.float32).at[0, 0].set(1.0)

    def set_input(self, y, y_orig):
        self.y, self.y_orig = y, y_orig

    def forward(self):
        B, C, T = self.y.shape
        b2 = B * C
        y2 = self.y.reshape(b2, T)
        # reflect pad (torch.stft center=True) once, in the wrapper; everything after this
        # single cheap op happens inside the one fused kernel.
        ypad = jnp.pad(y2, ((0, 0), (self.max_pad, self.max_pad)), mode="reflect")
        outs = fused_forward(ypad, self.y_orig.reshape(b2, T), self.bases,
                             self.W_enc, self.b_enc, self.W_dec, self.b_dec,
                             scales=self.scales_meta, b2=b2, t_len=T, n_taps=self.n_taps)
        n_s = len(self.fft_scales)
        mags, y_synth = outs[:n_s], outs[n_s]
        # Internal kernel layout is frame-major (F_s*B2, K_pad); expose (B2, F_s, K_pad)
        # (freq lane-dense, zero-padded) as in the previous version.
        self.y_stfts = [m.reshape(nf, b2, kp).transpose(1, 0, 2)
                        for m, (_, _, kp, nf, _) in zip(mags, self.scales_meta)]
        return y_synth.reshape(B, C, T)


# ----------------------------------------------------------------------------- main

if __name__ == "__main__":
    config = {
        "fft_scales": [128, 64],
        "overlap": 0.75,
        "hidden_size": 32,
        "n_taps": 16,
        "audio_len": 512,
    }
    key = jax.random.PRNGKey(0)
    kparam, ky, ko = jax.random.split(key, 3)

    B, T = 2, config["audio_len"]
    y = jax.random.normal(ky, (B, 2, T), jnp.float32)
    y_orig = jax.random.normal(ko, (B, 2, T), jnp.float32)

    model = BaseModelPallas(config, kparam)
    model.set_input(y, y_orig)
    y_synth = model.forward()
    jax.block_until_ready(y_synth)

    assert y_synth.shape == (B, 2, T) and y_synth.dtype == jnp.float32
    assert bool(jnp.all(jnp.isfinite(y_synth)))
    print("KERNEL_OK")
</pallas_src>

<mosaic_0001>
module attributes {stable_mosaic.version = 11 : i64} {
  func.func @_fused_kernel(%arg0: memref<4x640xf32, #tpu.memory_space<vmem>>, %arg1: memref<4x512xf32, #tpu.memory_space<vmem>>, %arg2: memref<128x256xbf16, #tpu.memory_space<vmem>>, %arg3: memref<64x256xbf16, #tpu.memory_space<vmem>>, %arg4: memref<2176x32xbf16, #tpu.memory_space<vmem>>, %arg5: memref<1x32xf32, #tpu.memory_space<vmem>>, %arg6: memref<32x16xbf16, #tpu.memory_space<vmem>>, %arg7: memref<1x16xf32, #tpu.memory_space<vmem>>, %arg8: memref<68x128xf32, #tpu.memory_space<vmem>>, %arg9: memref<132x128xf32, #tpu.memory_space<vmem>>, %arg10: memref<4x512xf32, #tpu.memory_space<vmem>>, %arg11: memref<68x128xf32, #tpu.memory_space<vmem>>, %arg12: memref<132x64xf32, #tpu.memory_space<vmem>>) attributes {dimension_semantics = [], scalar_prefetch = 0 : i64, scratch_operands = 2 : i64, tpu.core_type = #tpu.core_type<tc>} {
    %c0 = arith.constant 0 : index
    %c0_0 = arith.constant 0 : index
    %0 = vector.load %arg0[%c0, %c0_0] : memref<4x640xf32, #tpu.memory_space<vmem>>, vector<4x128xf32>
    %c0_1 = arith.constant 0 : index
    %c0_2 = arith.constant 0 : index
    %1 = vector.load %arg11[%c0_1, %c0_2] : memref<68x128xf32, #tpu.memory_space<vmem>>, vector<4x128xf32>
    tpu.vector_store %arg11[%c0_1, %c0_2], %0 {strides = array<i32>} : memref<68x128xf32, #tpu.memory_space<vmem>>, vector<4x128xf32>,
    %c0_3 = arith.constant 0 : index
    %c32 = arith.constant 32 : index
    %2 = vector.load %arg0[%c0_3, %c32] : memref<4x640xf32, #tpu.memory_space<vmem>>, vector<4x128xf32>
    %c4 = arith.constant 4 : index
    %c0_4 = arith.constant 0 : index
    %3 = vector.load %arg11[%c4, %c0_4] : memref<68x128xf32, #tpu.memory_space<vmem>>, vector<4x128xf32>
    tpu.vector_store %arg11[%c4, %c0_4], %2 {strides = array<i32>} : memref<68x128xf32, #tpu.memory_space<vmem>>, vector<4x128xf32>,
    %c0_5 = arith.constant 0 : index
    %c64 = arith.constant 64 : index
    %4 = vector.load %arg0[%c0_5, %c64] : memref<4x640xf32, #tpu.memory_space<vmem>>, vector<4x128xf32>
    %c8 = arith.constant 8 : index
    %c0_6 = arith.constant 0 : index
    %5 = vector.load %arg11[%c8, %c0_6] : memref<68x128xf32, #tpu.memory_space<vmem>>, vector<4x128xf32>
    tpu.vector_store %arg11[%c8, %c0_6], %4 {strides = array<i32>} : memref<68x128xf32, #tpu.memory_space<vmem>>, vector<4x128xf32>,
    %c0_7 = arith.constant 0 : index
    %c96 = arith.constant 96 : index
    %6 = vector.load %arg0[%c0_7, %c96] : memref<4x640xf32, #tpu.memory_space<vmem>>, vector<4x128xf32>
    %c12 = arith.constant 12 : index
    %c0_8 = arith.constant 0 : index
    %7 = vector.load %arg11[%c12, %c0_8] : memref<68x128xf32, #tpu.memory_space<vmem>>, vector<4x128xf32>
    tpu.vector_store %arg11[%c12, %c0_8], %6 {strides = array<i32>} : memref<68x128xf32, #tpu.memory_space<vmem>>, vector<4x128xf32>,
    %c0_9 = arith.constant 0 : index
    %c128 = arith.constant 128 : index
    %8 = vector.load %arg0[%c0_9, %c128] : memref<4x640xf32, #tpu.memory_space<vmem>>, vector<4x128xf32>
    %c16 = arith.constant 16 : index
    %c0_10 = arith.constant 0 : index
    %9 = vector.load %arg11[%c16, %c0_10] : memref<68x128xf32, #tpu.memory_space<vmem>>, vector<4x128xf32>
    tpu.vector_store %arg11[%c16, %c0_10], %8 {strides = array<i32>} : memref<68x128xf32, #tpu.memory_space<vmem>>, vector<4x128xf32>,
    %c0_11 = arith.constant 0 : index
    %c160 = arith.constant 160 : index
    %10 = vector.load %arg0[%c0_11, %c160] : memref<4x640xf32, #tpu.memory_space<vmem>>, vector<4x128xf32>
    %c20 = arith.constant 20 : index
    %c0_12 = arith.constant 0 : index
    %11 = vector.load %arg11[%c20, %c0_12] : memref<68x128xf32, #tpu.memory_space<vmem>>, vector<4x128xf32>
    tpu.vector_store %arg11[%c20, %c0_12], %10 {strides = array<i32>} : memref<68x128xf32, #tpu.memory_space<vmem>>, vector<4x128xf32>,
    %c0_13 = arith.constant 0 : index
    %c192 = arith.constant 192 : index
    %12 = vector.load %arg0[%c0_13, %c192] : memref<4x640xf32, #tpu.memory_space<vmem>>, vector<4x128xf32>
    %c24 = arith.constant 24 : index
    %c0_14 = arith.constant 0 : index
    %13 = vector.load %arg11[%c24, %c0_14] : memref<68x128xf32, #tpu.memory_space<vmem>>, vector<4x128xf32>
    tpu.vector_store %arg11[%c24, %c0_14], %12 {strides = array<i32>} : memref<68x128xf32, #tpu.memory_space<vmem>>, vector<4x128xf32>,
    %c0_15 = arith.constant 0 : index
    %c224 = arith.constant 224 : index
    %14 = vector.load %arg0[%c0_15, %c224] : memref<4x640xf32, #tpu.memory_space<vmem>>, vector<4x128xf32>
    %c28 = arith.constant 28 : index
    %c0_16 = arith.constant 0 : index
    %15 = vector.load %arg11[%c28, %c0_16] : memref<68x128xf32, #tpu.memory_space<vmem>>, vector<4x128xf32>
    tpu.vector_store %arg11[%c28, %c0_16], %14 {strides = array<i32>} : memref<68x128xf32, #tpu.memory_space<vmem>>, vector<4x128xf32>,
    %c0_17 = arith.constant 0 : index
    %c256 = arith.constant 256 : index
    %16 = vector.load %arg0[%c0_17, %c256] : memref<4x640xf32, #tpu.memory_space<vmem>>, vector<4x128xf32>
    %c32_18 = arith.constant 32 : index
    %c0_19 = arith.constant 0 : index
    %17 = vector.load %arg11[%c32_18, %c0_19] : memref<68x128xf32, #tpu.memory_space<vmem>>, vector<4x128xf32>
    tpu.vector_store %arg11[%c32_18, %c0_19], %16 {strides = array<i32>} : memref<68x128xf32, #tpu.memory_space<vmem>>, vector<4x128xf32>,
    %c0_20 = arith.constant 0 : index
    %c288 = arith.constant 288 : index
    %18 = vector.load %arg0[%c0_20, %c288] : memref<4x640xf32, #tpu.memory_space<vmem>>, vector<4x128xf32>
    %c36 = arith.constant 36 : index
    %c0_21 = arith.constant 0 : index
    %19 = vector.load %arg11[%c36, %c0_21] : memref<68x128xf32, #tpu.memory_space<vmem>>, vector<4x128xf32>
    tpu.vector_store %arg11[%c36, %c0_21], %18 {strides = array<i32>} : memref<68x128xf32, #tpu.memory_space<vmem>>, vector<4x128xf32>,
    %c0_22 = arith.constant 0 : index
    %c320 = arith.constant 320 : index
    %20 = vector.load %arg0[%c0_22, %c320] : memref<4x640xf32, #tpu.memory_space<vmem>>, vector<4x128xf32>
    %c40 = arith.constant 40 : index
    %c0_23 = arith.constant 0 : index
    %21 = vector.load %arg11[%c40, %c0_23] : memref<68x128xf32, #tpu.memory_space<vmem>>, vector<4x128xf32>
    tpu.vector_store %arg11[%c40, %c0_23], %20 {strides = array<i32>} : memref<68x128xf32, #tpu.memory_space<vmem>>, vector<4x128xf32>,
    %c0_24 = arith.constant 0 : index
    %c352 = arith.constant 352 : index
    %22 = vector.load %arg0[%c0_24, %c352] : memref<4x640xf32, #tpu.memory_space<vmem>>, vector<4x128xf32>
    %c44 = arith.constant 44 : index
    %c0_25 = arith.constant 0 : index
    %23 = vector.load %arg11[%c44, %c0_25] : memref<68x128xf32, #tpu.memory_space<vmem>>, vector<4x128xf32>
    tpu.vector_store %arg11[%c44, %c0_25], %22 {strides = array<i32>} : memref<68x128xf32, #tpu.memory_space<vmem>>, vector<4x128xf32>,
    %c0_26 = arith.constant 0 : index
    %c384 = arith.constant 384 : index
    %24 = vector.load %arg0[%c0_26, %c384] : memref<4x640xf32, #tpu.memory_space<vmem>>, vector<4x128xf32>
    %c48 = arith.constant 48 : index
    %c0_27 = arith.constant 0 : index
    %25 = vector.load %arg11[%c48, %c0_27] : memref<68x128xf32, #tpu.memory_space<vmem>>, vector<4x128xf32>
    tpu.vector_store %arg11[%c48, %c0_27], %24 {strides = array<i32>} : memref<68x128xf32, #tpu.memory_space<vmem>>, vector<4x128xf32>,
    %c0_28 = arith.constant 0 : index
    %c416 = arith.constant 416 : index
    %26 = vector.load %arg0[%c0_28, %c416] : memref<4x640xf32, #tpu.memory_space<vmem>>, vector<4x128xf32>
    %c52 = arith.constant 52 : index
    %c0_29 = arith.constant 0 : index
    %27 = vector.load %arg11[%c52, %c0_29] : memref<68x128xf32, #tpu.memory_space<vmem>>, vector<4x128xf32>
    tpu.vector_store %arg11[%c52, %c0_29], %26 {strides = array<i32>} : memref<68x128xf32, #tpu.memory_space<vmem>>, vector<4x128xf32>,
    %c0_30 = arith.constant 0 : index
    %c448 = arith.constant 448 : index
    %28 = vector.load %arg0[%c0_30, %c448] : memref<4x640xf32, #tpu.memory_space<vmem>>, vector<4x128xf32>
    %c56 = arith.constant 56 : index
    %c0_31 = arith.constant 0 : index
    %29 = vector.load %arg11[%c56, %c0_31] : memref<68x128xf32, #tpu.memory_space<vmem>>, vector<4x128xf32>
    tpu.vector_store %arg11[%c56, %c0_31], %28 {strides = array<i32>} : memref<68x128xf32, #tpu.memory_space<vmem>>, vector<4x128xf32>,
    %c0_32 = arith.constant 0 : index
    %c480 = arith.constant 480 : index
    %30 = vector.load %arg0[%c0_32, %c480] : memref<4x640xf32, #tpu.memory_space<vmem>>, vector<4x128xf32>
    %c60 = arith.constant 60 : index
    %c0_33 = arith.constant 0 : index
    %31 = vector.load %arg11[%c60, %c0_33] : memref<68x128xf32, #tpu.memory_space<vmem>>, vector<4x128xf32>
    tpu.vector_store %arg11[%c60, %c0_33], %30 {strides = array<i32>} : memref<68x128xf32, #tpu.memory_space<vmem>>, vector<4x128xf32>,
    %c0_34 = arith.constant 0 : index
    %c512 = arith.constant 512 : index
    %32 = vector.load %arg0[%c0_34, %c512] : memref<4x640xf32, #tpu.memory_space<vmem>>, vector<4x128xf32>
    %c64_35 = arith.constant 64 : index
    %c0_36 = arith.constant 0 : index
    %33 = vector.load %arg11[%c64_35, %c0_36] : memref<68x128xf32, #tpu.memory_space<vmem>>, vector<4x128xf32>
    tpu.vector_store %arg11[%c64_35, %c0_36], %32 {strides = array<i32>} : memref<68x128xf32, #tpu.memory_space<vmem>>, vector<4x128xf32>,
    %c0_37 = arith.constant 0 : index
    %c0_38 = arith.constant 0 : index
    %34 = vector.load %arg11[%c0_37, %c0_38] : memref<68x128xf32, #tpu.memory_space<vmem>>, vector<68x128xf32>
    %35 = arith.truncf %34 : vector<68x128xf32> to vector<68x128xbf16>
    %c0_39 = arith.constant 0 : index
    %c0_40 = arith.constant 0 : index
    %36 = vector.load %arg2[%c0_39, %c0_40] : memref<128x256xbf16, #tpu.memory_space<vmem>>, vector<128x256xbf16>
    %cst = arith.constant dense<0.000000e+00> : vector<68x256xf32>
    %37 = tpu.matmul %35, %36, %cst {dimension_numbers = #tpu.dot_dimension_numbers<[1], [0], [0], [1], [0, 0, 1, 1], [], []>} : vector<68x128xbf16>, vector<128x256xbf16>, vector<68x256xf32> -> vector<68x256xf32>
    %38 = vector.extract_strided_slice %37 {offsets = [0, 0], sizes = [68, 128], strides = [1, 1]} : vector<68x256xf32> to vector<68x128xf32>
    %39 = vector.extract_strided_slice %37 {offsets = [0, 128], sizes = [68, 128], strides = [1, 1]} : vector<68x256xf32> to vector<68x128xf32>
    %40 = arith.mulf %38, %38 : vector<68x128xf32>
    %41 = arith.mulf %39, %39 : vector<68x128xf32>
    %42 = arith.addf %40, %41 : vector<68x128xf32>
    %cst_41 = arith.constant 9.99999996E-13 : f32
    %43 = vector.broadcast %cst_41 : f32 to vector<68x128xf32>
    %44 = arith.addf %42, %43 : vector<68x128xf32>
    %45 = math.sqrt %44 : vector<68x128xf32>
    %c0_42 = arith.constant 0 : index
    %c0_43 = arith.constant 0 : index
    %46 = vector.load %arg8[%c0_42, %c0_43] : memref<68x128xf32, #tpu.memory_space<vmem>>, vector<68x128xf32>
    tpu.vector_store %arg8[%c0_42, %c0_43], %45 {strides = array<i32>} : memref<68x128xf32, #tpu.memory_space<vmem>>, vector<68x128xf32>,
    %c0_44 = arith.constant 0 : index
    %c0_45 = arith.constant 0 : index
    %47 = vector.load %arg8[%c0_44, %c0_45] : memref<68x128xf32, #tpu.memory_space<vmem>>, vector<4x128xf32>
    %c4_46 = arith.constant 4 : index
    %c0_47 = arith.constant 0 : index
    %48 = vector.load %arg8[%c4_46, %c0_47] : memref<68x128xf32, #tpu.memory_space<vmem>>, vector<4x128xf32>
    %c8_48 = arith.constant 8 : index
    %c0_49 = arith.constant 0 : index
    %49 = vector.load %arg8[%c8_48, %c0_49] : memref<68x128xf32, #tpu.memory_space<vmem>>, vector<4x128xf32>
    %c12_50 = arith.constant 12 : index
    %c0_51 = arith.constant 0 : index
    %50 = vector.load %arg8[%c12_50, %c0_51] : memref<68x128xf32, #tpu.memory_space<vmem>>, vector<4x128xf32>
    %c16_52 = arith.constant 16 : index
    %c0_53 = arith.constant 0 : index
    %51 = vector.load %arg8[%c16_52, %c0_53] : memref<68x128xf32, #tpu.memory_space<vmem>>, vector<4x128xf32>
    %c20_54 = arith.constant 20 : index
    %c0_55 = arith.constant 0 : index
    %52 = vector.load %arg8[%c20_54, %c0_55] : memref<68x128xf32, #tpu.memory_space<vmem>>, vector<4x128xf32>
    %c24_56 = arith.constant 24 : index
    %c0_57 = arith.constant 0 : index
    %53 = vector.load %arg8[%c24_56, %c0_57] : memref<68x128xf32, #tpu.memory_space<vmem>>, vector<4x128xf32>
    %c28_58 = arith.constant 28 : index
    %c0_59 = arith.constant 0 : index
    %54 = vector.load %arg8[%c28_58, %c0_59] : memref<68x128xf32, #tpu.memory_space<vmem>>, vector<4x128xf32>
    %c32_60 = arith.constant 32 : index
    %c0_61 = arith.constant 0 : index
    %55 = vector.load %arg8[%c32_60, %c0_61] : memref<68x128xf32, #tpu.memory_space<vmem>>, vector<4x128xf32>
    %c36_62 = arith.constant 36 : index
    %c0_63 = arith.constant 0 : index
    %56 = vector.load %arg8[%c36_62, %c0_63] : memref<68x128xf32, #tpu.memory_space<vmem>>, vector<4x128xf32>
    %c40_64 = arith.constant 40 : index
    %c0_65 = arith.constant 0 : index
    %57 = vector.load %arg8[%c40_64, %c0_65] : memref<68x128xf32, #tpu.memory_space<vmem>>, vector<4x128xf32>
    %c44_66 = arith.constant 44 : index
    %c0_67 = arith.constant 0 : index
    %58 = vector.load %arg8[%c44_66, %c0_67] : memref<68x128xf32, #tpu.memory_space<vmem>>, vector<4x128xf32>
    %c48_68 = arith.constant 48 : index
    %c0_69 = arith.constant 0 : index
    %59 = vector.load %arg8[%c48_68, %c0_69] : memref<68x128xf32, #tpu.memory_space<vmem>>, vector<4x128xf32>
    %c52_70 = arith.constant 52 : index
    %c0_71 = arith.constant 0 : index
    %60 = vector.load %arg8[%c52_70, %c0_71] : memref<68x128xf32, #tpu.memory_space<vmem>>, vector<4x128xf32>
    %c56_72 = arith.constant 56 : index
    %c0_73 = arith.constant 0 : index
    %61 = vector.load %arg8[%c56_72, %c0_73] : memref<68x128xf32, #tpu.memory_space<vmem>>, vector<4x128xf32>
    %c60_74 = arith.constant 60 : index
    %c0_75 = arith.constant 0 : index
    %62 = vector.load %arg8[%c60_74, %c0_75] : memref<68x128xf32, #tpu.memory_space<vmem>>, vector<4x128xf32>
    %c64_76 = arith.constant 64 : index
    %c0_77 = arith.constant 0 : index
    %63 = vector.load %arg8[%c64_76, %c0_77] : memref<68x128xf32, #tpu.memory_space<vmem>>, vector<4x128xf32>
    %64 = tpu.concatenate %47, %48, %49, %50, %51, %52, %53, %54, %55, %56, %57, %58, %59, %60, %61, %62 in 1 : vector<4x128xf32>, vector<4x128xf32>, vector<4x128xf32>, vector<4x128xf32>, vector<4x128xf32>, vector<4x128xf32>, vector<4x128xf32>, vector<4x128xf32>, vector<4x128xf32>, vector<4x128xf32>, vector<4x128xf32>, vector<4x128xf32>, vector<4x128xf32>, vector<4x128xf32>, vector<4x128xf32>, vector<4x128xf32> -> vector<4x2048xf32>
    %65 = tpu.concatenate %64, %63 in 1 : vector<4x2048xf32>, vector<4x128xf32> -> vector<4x2176xf32>
    %c0_78 = arith.constant 0 : index
    %c32_79 = arith.constant 32 : index
    %66 = vector.load %arg0[%c0_78, %c32_79] : memref<4x640xf32, #tpu.memory_space<vmem>>, vector<4x64xf32>
    %c0_80 = arith.constant 0 : index
    %c0_81 = arith.constant 0 : index
    %67 = vector.load %arg12[%c0_80, %c0_81] : memref<132x64xf32, #tpu.memory_space<vmem>>, vector<4x64xf32>
    tpu.vector_store %arg12[%c0_80, %c0_81], %66 {strides = array<i32>} : memref<132x64xf32, #tpu.memory_space<vmem>>, vector<4x64xf32>,
    %c0_82 = arith.constant 0 : index
    %c48_83 = arith.constant 48 : index
    %68 = vector.load %arg0[%c0_82, %c48_83] : memref<4x640xf32, #tpu.memory_space<vmem>>, vector<4x64xf32>
    %c4_84 = arith.constant 4 : index
    %c0_85 = arith.constant 0 : index
    %69 = vector.load %arg12[%c4_84, %c0_85] : memref<132x64xf32, #tpu.memory_space<vmem>>, vector<4x64xf32>
    tpu.vector_store %arg12[%c4_84, %c0_85], %68 {strides = array<i32>} : memref<132x64xf32, #tpu.memory_space<vmem>>, vector<4x64xf32>,
    %c0_86 = arith.constant 0 : index
    %c64_87 = arith.constant 64 : index
    %70 = vector.load %arg0[%c0_86, %c64_87] : memref<4x640xf32, #tpu.memory_space<vmem>>, vector<4x64xf32>
    %c8_88 = arith.constant 8 : index
    %c0_89 = arith.constant 0 : index
    %71 = vector.load %arg12[%c8_88, %c0_89] : memref<132x64xf32, #tpu.memory_space<vmem>>, vector<4x64xf32>
    tpu.vector_store %arg12[%c8_88, %c0_89], %70 {strides = array<i32>} : memref<132x64xf32, #tpu.memory_space<vmem>>, vector<4x64xf32>,
    %c0_90 = arith.constant 0 : index
    %c80 = arith.constant 80 : index
    %72 = vector.load %arg0[%c0_90, %c80] : memref<4x640xf32, #tpu.memory_space<vmem>>, vector<4x64xf32>
    %c12_91 = arith.constant 12 : index
    %c0_92 = arith.constant 0 : index
    %73 = vector.load %arg12[%c12_91, %c0_92] : memref<132x64xf32, #tpu.memory_space<vmem>>, vector<4x64xf32>
    tpu.vector_store %arg12[%c12_91, %c0_92], %72 {strides = array<i32>} : memref<132x64xf32, #tpu.memory_space<vmem>>, vector<4x64xf32>,
    %c0_93 = arith.constant 0 : index
    %c96_94 = arith.constant 96 : index
    %74 = vector.load %arg0[%c0_93, %c96_94] : memref<4x640xf32, #tpu.memory_space<vmem>>, vector<4x64xf32>
    %c16_95 = arith.constant 16 : index
    %c0_96 = arith.constant 0 : index
    %75 = vector.load %arg12[%c16_95, %c0_96] : memref<132x64xf32, #tpu.memory_space<vmem>>, vector<4x64xf32>
    tpu.vector_store %arg12[%c16_95, %c0_96], %74 {strides = array<i32>} : memref<132x64xf32, #tpu.memory_space<vmem>>, vector<4x64xf32>,
    %c0_97 = arith.constant 0 : index
    %c112 = arith.constant 112 : index
    %76 = vector.load %arg0[%c0_97, %c112] : memref<4x640xf32, #tpu.memory_space<vmem>>, vector<4x64xf32>
    %c20_98 = arith.constant 20 : index
    %c0_99 = arith.constant 0 : index
    %77 = vector.load %arg12[%c20_98, %c0_99] : memref<132x64xf32, #tpu.memory_space<vmem>>, vector<4x64xf32>
    tpu.vector_store %arg12[%c20_98, %c0_99], %76 {strides = array<i32>} : memref<132x64xf32, #tpu.memory_space<vmem>>, vector<4x64xf32>,
    %c0_100 = arith.constant 0 : index
    %c128_101 = arith.constant 128 : index
    %78 = vector.load %arg0[%c0_100, %c128_101] : memref<4x640xf32, #tpu.memory_space<vmem>>, vector<4x64xf32>
    %c24_102 = arith.constant 24 : index
    %c0_103 = arith.constant 0 : index
    %79 = vector.load %arg12[%c24_102, %c0_103] : memref<132x64xf32, #tpu.memory_space<vmem>>, vector<4x64xf32>
    tpu.vector_store %arg12[%c24_102, %c0_103], %78 {strides = array<i32>} : memref<132x64xf32, #tpu.memory_space<vmem>>, vector<4x64xf32>,
    %c0_104 = arith.constant 0 : index
    %c144 = arith.constant 144 : index
    %80 = vector.load %arg0[%c0_104, %c144] : memref<4x640xf32, #tpu.memory_space<vmem>>, vector<4x64xf32>
    %c28_105 = arith.constant 28 : index
    %c0_106 = arith.constant 0 : index
    %81 = vector.load %arg12[%c28_105, %c0_106] : memref<132x64xf32, #tpu.memory_space<vmem>>, vector<4x64xf32>
    tpu.vector_store %arg12[%c28_105, %c0_106], %80 {strides = array<i32>} : memref<132x64xf32, #tpu.memory_space<vmem>>, vector<4x64xf32>,
    %c0_107 = arith.constant 0 : index
    %c160_108 = arith.constant 160 : index
    %82 = vector.load %arg0[%c0_107, %c160_108] : memref<4x640xf32, #tpu.memory_space<vmem>>, vector<4x64xf32>
    %c32_109 = arith.constant 32 : index
    %c0_110 = arith.constant 0 : index
    %83 = vector.load %arg12[%c32_109, %c0_110] : memref<132x64xf32, #tpu.memory_space<vmem>>, vector<4x64xf32>
    tpu.vector_store %arg12[%c32_109, %c0_110], %82 {strides = array<i32>} : memref<132x64xf32, #tpu.memory_space<vmem>>, vector<4x64xf32>,
    %c0_111 = arith.constant 0 : index
    %c176 = arith.constant 176 : index
    %84 = vector.load %arg0[%c0_111, %c176] : memref<4x640xf32, #tpu.memory_space<vmem>>, vector<4x64xf32>
    %c36_112 = arith.constant 36 : index
    %c0_113 = arith.constant 0 : index
    %85 = vector.load %arg12[%c36_112, %c0_113] : memref<132x64xf32, #tpu.memory_space<vmem>>, vector<4x64xf32>
    tpu.vector_store %arg12[%c36_112, %c0_113], %84 {strides = array<i32>} : memref<132x64xf32, #tpu.memory_space<vmem>>, vector<4x64xf32>,
    %c0_114 = arith.constant 0 : index
    %c192_115 = arith.constant 192 : index
    %86 = vector.load %arg0[%c0_114, %c192_115] : memref<4x640xf32, #tpu.memory_space<vmem>>, vector<4x64xf32>
    %c40_116 = arith.constant 40 : index
    %c0_117 = arith.constant 0 : index
    %87 = vector.load %arg12[%c40_116, %c0_117] : memref<132x64xf32, #tpu.memory_space<vmem>>, vector<4x64xf32>
    tpu.vector_store %arg12[%c40_116, %c0_117], %86 {strides = array<i32>} : memref<132x64xf32, #tpu.memory_space<vmem>>, vector<4x64xf32>,
    %c0_118 = arith.constant 0 : index
    %c208 = arith.constant 208 : index
    %88 = vector.load %arg0[%c0_118, %c208] : memref<4x640xf32, #tpu.memory_space<vmem>>, vector<4x64xf32>
    %c44_119 = arith.constant 44 : index
    %c0_120 = arith.constant 0 : index
    %89 = vector.load %arg12[%c44_119, %c0_120] : memref<132x64xf32, #tpu.memory_space<vmem>>, vector<4x64xf32>
    tpu.vector_store %arg12[%c44_119, %c0_120], %88 {strides = array<i32>} : memref<132x64xf32, #tpu.memory_space<vmem>>, vector<4x64xf32>,
    %c0_121 = arith.constant 0 : index
    %c224_122 = arith.constant 224 : index
    %90 = vector.load %arg0[%c0_121, %c224_122] : memref<4x640xf32, #tpu.memory_space<vmem>>, vector<4x64xf32>
    %c48_123 = arith.constant 48 : index
    %c0_124 = arith.constant 0 : index
    %91 = vector.load %arg12[%c48_123, %c0_124] : memref<132x64xf32, #tpu.memory_space<vmem>>, vector<4x64xf32>
    tpu.vector_store %arg12[%c48_123, %c0_124], %90 {strides = array<i32>} : memref<132x64xf32, #tpu.memory_space<vmem>>, vector<4x64xf32>,
    %c0_125 = arith.constant 0 : index
    %c240 = arith.constant 240 : index
    %92 = vector.load %arg0[%c0_125, %c240] : memref<4x640xf32, #tpu.memory_space<vmem>>, vector<4x64xf32>
    %c52_126 = arith.constant 52 : index
    %c0_127 = arith.constant 0 : index
    %93 = vector.load %arg12[%c52_126, %c0_127] : memref<132x64xf32, #tpu.memory_space<vmem>>, vector<4x64xf32>
    tpu.vector_store %arg12[%c52_126, %c0_127], %92 {strides = array<i32>} : memref<132x64xf32, #tpu.memory_space<vmem>>, vector<4x64xf32>,
    %c0_128 = arith.constant 0 : index
    %c256_129 = arith.constant 256 : index
    %94 = vector.load %arg0[%c0_128, %c256_129] : memref<4x640xf32, #tpu.memory_space<vmem>>, vector<4x64xf32>
    %c56_130 = arith.constant 56 : index
    %c0_131 = arith.constant 0 : index
    %95 = vector.load %arg12[%c56_130, %c0_131] : memref<132x64xf32, #tpu.memory_space<vmem>>, vector<4x64xf32>
    tpu.vector_store %arg12[%c56_130, %c0_131], %94 {strides = array<i32>} : memref<132x64xf32, #tpu.memory_space<vmem>>, vector<4x64xf32>,
    %c0_132 = arith.constant 0 : index
    %c272 = arith.constant 272 : index
    %96 = vector.load %arg0[%c0_132, %c272] : memref<4x640xf32, #tpu.memory_space<vmem>>, vector<4x64xf32>
    %c60_133 = arith.constant 60 : index
    %c0_134 = arith.constant 0 : index
    %97 = vector.load %arg12[%c60_133, %c0_134] : memref<132x64xf32, #tpu.memory_space<vmem>>, vector<4x64xf32>
    tpu.vector_store %arg12[%c60_133, %c0_134], %96 {strides = array<i32>} : memref<132x64xf32, #tpu.memory_space<vmem>>, vector<4x64xf32>,
    %c0_135 = arith.constant 0 : index
    %c288_136 = arith.constant 288 : index
    %98 = vector.load %arg0[%c0_135, %c288_136] : memref<4x640xf32, #tpu.memory_space<vmem>>, vector<4x64xf32>
    %c64_137 = arith.constant 64 : index
    %c0_138 = arith.constant 0 : index
    %99 = vector.load %arg12[%c64_137, %c0_138] : memref<132x64xf32, #tpu.memory_space<vmem>>, vector<4x64xf32>
    tpu.vector_store %arg12[%c64_137, %c0_138], %98 {strides = array<i32>} : memref<132x64xf32, #tpu.memory_space<vmem>>, vector<4x64xf32>,
    %c0_139 = arith.constant 0 : index
    %c304 = arith.constant 304 : index
    %100 = vector.load %arg0[%c0_139, %c304] : memref<4x640xf32, #tpu.memory_space<vmem>>, vector<4x64xf32>
    %c68 = arith.constant 68 : index
    %c0_140 = arith.constant 0 : index
    %101 = vector.load %arg12[%c68, %c0_140] : memref<132x64xf32, #tpu.memory_space<vmem>>, vector<4x64xf32>
    tpu.vector_store %arg12[%c68, %c0_140], %100 {strides = array<i32>} : memref<132x64xf32, #tpu.memory_space<vmem>>, vector<4x64xf32>,
    %c0_141 = arith.constant 0 : index
    %c320_142 = arith.constant 320 : index
    %102 = vector.load %arg0[%c0_141, %c320_142] : memref<4x640xf32, #tpu.memory_space<vmem>>, vector<4x64xf32>
    %c72 = arith.constant 72 : index
    %c0_143 = arith.constant 0 : index
    %103 = vector.load %arg12[%c72, %c0_143] : memref<132x64xf32, #tpu.memory_space<vmem>>, vector<4x64xf32>
    tpu.vector_store %arg12[%c72, %c0_143], %102 {strides = array<i32>} : memref<132x64xf32, #tpu.memory_space<vmem>>, vector<4x64xf32>,
    %c0_144 = arith.constant 0 : index
    %c336 = arith.constant 336 : index
    %104 = vector.load %arg0[%c0_144, %c336] : memref<4x640xf32, #tpu.memory_space<vmem>>, vector<4x64xf32>
    %c76 = arith.constant 76 : index
    %c0_145 = arith.constant 0 : index
    %105 = vector.load %arg12[%c76, %c0_145] : memref<132x64xf32, #tpu.memory_space<vmem>>, vector<4x64xf32>
    tpu.vector_store %arg12[%c76, %c0_145], %104 {strides = array<i32>} : memref<132x64xf32, #tpu.memory_space<vmem>>, vector<4x64xf32>,
    %c0_146 = arith.constant 0 : index
    %c352_147 = arith.constant 352 : index
    %106 = vector.load %arg0[%c0_146, %c352_147] : memref<4x640xf32, #tpu.memory_space<vmem>>, vector<4x64xf32>
    %c80_148 = arith.constant 80 : index
    %c0_149 = arith.constant 0 : index
    %107 = vector.load %arg12[%c80_148, %c0_149] : memref<132x64xf32, #tpu.memory_space<vmem>>, vector<4x64xf32>
    tpu.vector_store %arg12[%c80_148, %c0_149], %106 {strides = array<i32>} : memref<132x64xf32, #tpu.memory_space<vmem>>, vector<4x64xf32>,
    %c0_150 = arith.constant 0 : index
    %c368 = arith.constant 368 : index
    %108 = vector.load %arg0[%c0_150, %c368] : memref<4x640xf32, #tpu.memory_space<vmem>>, vector<4x64xf32>
    %c84 = arith.constant 84 : index
    %c0_151 = arith.constant 0 : index
    %109 = vector.load %arg12[%c84, %c0_151] : memref<132x64xf32, #tpu.memory_space<vmem>>, vector<4x64xf32>
    tpu.vector_store %arg12[%c84, %c0_151], %108 {strides = array<i32>} : memref<132x64xf32, #tpu.memory_space<vmem>>, vector<4x64xf32>,
    %c0_152 = arith.constant 0 : index
    %c384_153 = arith.constant 384 : index
    %110 = vector.load %arg0[%c0_152, %c384_153] : memref<4x640xf32, #tpu.memory_space<vmem>>, vector<4x64xf32>
    %c88 = arith.constant 88 : index
    %c0_154 = arith.constant 0 : index
    %111 = vector.load %arg12[%c88, %c0_154] : memref<132x64xf32, #tpu.memory_space<vmem>>, vector<4x64xf32>
    tpu.vector_store %arg12[%c88, %c0_154], %110 {strides = array<i32>} : memref<132x64xf32, #tpu.memory_space<vmem>>, vector<4x64xf32>,
    %c0_155 = arith.constant 0 : index
    %c400 = arith.constant 400 : index
    %112 = vector.load %arg0[%c0_155, %c400] : memref<4x640xf32, #tpu.memory_space<vmem>>, vector<4x64xf32>
    %c92 = arith.constant 92 : index
    %c0_156 = arith.constant 0 : index
    %113 = vector.load %arg12[%c92, %c0_156] : memref<132x64xf32, #tpu.memory_space<vmem>>, vector<4x64xf32>
    tpu.vector_store %arg12[%c92, %c0_156], %112 {strides = array<i32>} : memref<132x64xf32, #tpu.memory_space<vmem>>, vector<4x64xf32>,
    %c0_157 = arith.constant 0 : index
    %c416_158 = arith.constant 416 : index
    %114 = vector.load %arg0[%c0_157, %c416_158] : memref<4x640xf32, #tpu.memory_space<vmem>>, vector<4x64xf32>
    %c96_159 = arith.constant 96 : index
    %c0_160 = arith.constant 0 : index
    %115 = vector.load %arg12[%c96_159, %c0_160] : memref<132x64xf32, #tpu.memory_space<vmem>>, vector<4x64xf32>
    tpu.vector_store %arg12[%c96_159, %c0_160], %114 {strides = array<i32>} : memref<132x64xf32, #tpu.memory_space<vmem>>, vector<4x64xf32>,
    %c0_161 = arith.constant 0 : index
    %c432 = arith.constant 432 : index
    %116 = vector.load %arg0[%c0_161, %c432] : memref<4x640xf32, #tpu.memory_space<vmem>>, vector<4x64xf32>
    %c100 = arith.constant 100 : index
    %c0_162 = arith.constant 0 : index
    %117 = vector.load %arg12[%c100, %c0_162] : memref<132x64xf32, #tpu.memory_space<vmem>>, vector<4x64xf32>
    tpu.vector_store %arg12[%c100, %c0_162], %116 {strides = array<i32>} : memref<132x64xf32, #tpu.memory_space<vmem>>, vector<4x64xf32>,
    %c0_163 = arith.constant 0 : index
    %c448_164 = arith.constant 448 : index
    %118 = vector.load %arg0[%c0_163, %c448_164] : memref<4x640xf32, #tpu.memory_space<vmem>>, vector<4x64xf32>
    %c104 = arith.constant 104 : index
    %c0_165 = arith.constant 0 : index
    %119 = vector.load %arg12[%c104, %c0_165] : memref<132x64xf32, #tpu.memory_space<vmem>>, vector<4x64xf32>
    tpu.vector_store %arg12[%c104, %c0_165], %118 {strides = array<i32>} : memref<132x64xf32, #tpu.memory_space<vmem>>, vector<4x64xf32>,
    %c0_166 = arith.constant 0 : index
    %c464 = arith.constant 464 : index
    %120 = vector.load %arg0[%c0_166, %c464] : memref<4x640xf32, #tpu.memory_space<vmem>>, vector<4x64xf32>
    %c108 = arith.constant 108 : index
    %c0_167 = arith.constant 0 : index
    %121 = vector.load %arg12[%c108, %c0_167] : memref<132x64xf32, #tpu.memory_space<vmem>>, vector<4x64xf32>
    tpu.vector_store %arg12[%c108, %c0_167], %120 {strides = array<i32>} : memref<132x64xf32, #tpu.memory_space<vmem>>, vector<4x64xf32>,
    %c0_168 = arith.constant 0 : index
    %c480_169 = arith.constant 480 : index
    %122 = vector.load %arg0[%c0_168, %c480_169] : memref<4x640xf32, #tpu.memory_space<vmem>>, vector<4x64xf32>
    %c112_170 = arith.constant 112 : index
    %c0_171 = arith.constant 0 : index
    %123 = vector.load %arg12[%c112_170, %c0_171] : memref<132x64xf32, #tpu.memory_space<vmem>>, vector<4x64xf32>
    tpu.vector_store %arg12[%c112_170, %c0_171], %122 {strides = array<i32>} : memref<132x64xf32, #tpu.memory_space<vmem>>, vector<4x64xf32>,
    %c0_172 = arith.constant 0 : index
    %c496 = arith.constant 496 : index
    %124 = vector.load %arg0[%c0_172, %c496] : memref<4x640xf32, #tpu.memory_space<vmem>>, vector<4x64xf32>
    %c116 = arith.constant 116 : index
    %c0_173 = arith.constant 0 : index
    %125 = vector.load %arg12[%c116, %c0_173] : memref<132x64xf32, #tpu.memory_space<vmem>>, vector<4x64xf32>
    tpu.vector_store %arg12[%c116, %c0_173], %124 {strides = array<i32>} : memref<132x64xf32, #tpu.memory_space<vmem>>, vector<4x64xf32>,
    %c0_174 = arith.constant 0 : index
    %c512_175 = arith.constant 512 : index
    %126 = vector.load %arg0[%c0_174, %c512_175] : memref<4x640xf32, #tpu.memory_space<vmem>>, vector<4x64xf32>
    %c120 = arith.constant 120 : index
    %c0_176 = arith.constant 0 : index
    %127 = vector.load %arg12[%c120, %c0_176] : memref<132x64xf32, #tpu.memory_space<vmem>>, vector<4x64xf32>
    tpu.vector_store %arg12[%c120, %c0_176], %126 {strides = array<i32>} : memref<132x64xf32, #tpu.memory_space<vmem>>, vector<4x64xf32>,
    %c0_177 = arith.constant 0 : index
    %c528 = arith.constant 528 : index
    %128 = vector.load %arg0[%c0_177, %c528] : memref<4x640xf32, #tpu.memory_space<vmem>>, vector<4x64xf32>
    %c124 = arith.constant 124 : index
    %c0_178 = arith.constant 0 : index
    %129 = vector.load %arg12[%c124, %c0_178] : memref<132x64xf32, #tpu.memory_space<vmem>>, vector<4x64xf32>
    tpu.vector_store %arg12[%c124, %c0_178], %128 {strides = array<i32>} : memref<132x64xf32, #tpu.memory_space<vmem>>, vector<4x64xf32>,
    %c0_179 = arith.constant 0 : index
    %c544 = arith.constant 544 : index
    %130 = vector.load %arg0[%c0_179, %c544] : memref<4x640xf32, #tpu.memory_space<vmem>>, vector<4x64xf32>
    %c128_180 = arith.constant 128 : index
    %c0_181 = arith.constant 0 : index
    %131 = vector.load %arg12[%c128_180, %c0_181] : memref<132x64xf32, #tpu.memory_space<vmem>>, vector<4x64xf32>
    tpu.vector_store %arg12[%c128_180, %c0_181], %130 {strides = array<i32>} : memref<132x64xf32, #tpu.memory_space<vmem>>, vector<4x64xf32>,
    %c0_182 = arith.constant 0 : index
    %c0_183 = arith.constant 0 : index
    %132 = vector.load %arg12[%c0_182, %c0_183] : memref<132x64xf32, #tpu.memory_space<vmem>>, vector<132x64xf32>
    %133 = arith.truncf %132 : vector<132x64xf32> to vector<132x64xbf16>
    %c0_184 = arith.constant 0 : index
    %c0_185 = arith.constant 0 : index
    %134 = vector.load %arg3[%c0_184, %c0_185] : memref<64x256xbf16, #tpu.memory_space<vmem>>, vector<64x256xbf16>
    %cst_186 = arith.constant dense<0.000000e+00> : vector<132x256xf32>
    %135 = tpu.matmul %133, %134, %cst_186 {dimension_numbers = #tpu.dot_dimension_numbers<[1], [0], [0], [1], [0, 0, 1, 1], [], []>} : vector<132x64xbf16>, vector<64x256xbf16>, vector<132x256xf32> -> vector<132x256xf32>
    %136 = vector.extract_strided_slice %135 {offsets = [0, 0], sizes = [132, 128], strides = [1, 1]} : vector<132x256xf32> to vector<132x128xf32>
    %137 = vector.extract_strided_slice %135 {offsets = [0, 128], sizes = [132, 128], strides = [1, 1]} : vector<132x256xf32> to vector<132x128xf32>
    %138 = arith.mulf %136, %136 : vector<132x128xf32>
    %139 = arith.mulf %137, %137 : vector<132x128xf32>
    %140 = arith.addf %138, %139 : vector<132x128xf32>
    %cst_187 = arith.constant 9.99999996E-13 : f32
    %141 = vector.broadcast %cst_187 : f32 to vector<132x128xf32>
    %142 = arith.addf %140, %141 : vector<132x128xf32>
    %143 = math.sqrt %142 : vector<132x128xf32>
    %c0_188 = arith.constant 0 : index
    %c0_189 = arith.constant 0 : index
    %144 = vector.load %arg9[%c0_188, %c0_189] : memref<132x128xf32, #tpu.memory_space<vmem>>, vector<132x128xf32>
    tpu.vector_store %arg9[%c0_188, %c0_189], %143 {strides = array<i32>} : memref<132x128xf32, #tpu.memory_space<vmem>>, vector<132x128xf32>,
    %145 = arith.truncf %65 : vector<4x2176xf32> to vector<4x2176xbf16>
    %c0_190 = arith.constant 0 : index
    %c0_191 = arith.constant 0 : index
    %146 = vector.load %arg4[%c0_190, %c0_191] : memref<2176x32xbf16, #tpu.memory_space<vmem>>, vector<2176x32xbf16>
    %cst_192 = arith.constant dense<0.000000e+00> : vector<4x32xf32>
    %147 = tpu.matmul %145, %146, %cst_192 {dimension_numbers = #tpu.dot_dimension_numbers<[1], [0], [0], [1], [0, 0, 1, 1], [], []>} : vector<4x2176xbf16>, vector<2176x32xbf16>, vector<4x32xf32> -> vector<4x32xf32>
    %c0_193 = arith.constant 0 : index
    %c0_194 = arith.constant 0 : index
    %148 = vector.load %arg5[%c0_193, %c0_194] : memref<1x32xf32, #tpu.memory_space<vmem>>, vector<1x32xf32>
    %149 = vector.broadcast %148 : vector<1x32xf32> to vector<4x32xf32>
    %150 = arith.addf %147, %149 : vector<4x32xf32>
    %151 = math.tanh %150 : vector<4x32xf32>
    %152 = arith.truncf %151 : vector<4x32xf32> to vector<4x32xbf16>
    %c0_195 = arith.constant 0 : index
    %c0_196 = arith.constant 0 : index
    %153 = vector.load %arg6[%c0_195, %c0_196] : memref<32x16xbf16, #tpu.memory_space<vmem>>, vector<32x16xbf16>
    %cst_197 = arith.constant dense<0.000000e+00> : vector<4x16xf32>
    %154 = tpu.matmul %152, %153, %cst_197 {dimension_numbers = #tpu.dot_dimension_numbers<[1], [0], [0], [1], [0, 0, 1, 1], [], []>} : vector<4x32xbf16>, vector<32x16xbf16>, vector<4x16xf32> -> vector<4x16xf32>
    %c0_198 = arith.constant 0 : index
    %c0_199 = arith.constant 0 : index
    %155 = vector.load %arg7[%c0_198, %c0_199] : memref<1x16xf32, #tpu.memory_space<vmem>>, vector<1x16xf32>
    %156 = vector.broadcast %155 : vector<1x16xf32> to vector<4x16xf32>
    %157 = arith.addf %154, %156 : vector<4x16xf32>
    %c0_200 = arith.constant 0 : index
    %c0_201 = arith.constant 0 : index
    %158 = vector.load %arg1[%c0_200, %c0_201] : memref<4x512xf32, #tpu.memory_space<vmem>>, vector<4x512xf32>
    %159 = vector.extract_strided_slice %157 {offsets = [0, 0], sizes = [4, 1], strides = [1, 1]} : vector<4x16xf32> to vector<4x1xf32>
    %160 = vector.broadcast %159 : vector<4x1xf32> to vector<4x512xf32>
    %161 = arith.mulf %160, %158 : vector<4x512xf32>
    %cst_202 = arith.constant 0.000000e+00 : f32
    %162 = vector.broadcast %cst_202 : f32 to vector<4x15xf32>
    %163 = tpu.concatenate %162, %158 in 1 : vector<4x15xf32>, vector<4x512xf32> -> vector<4x527xf32>
    %164 = vector.extract_strided_slice %157 {offsets = [0, 1], sizes = [4, 1], strides = [1, 1]} : vector<4x16xf32> to vector<4x1xf32>
    %165 = vector.extract_strided_slice %163 {offsets = [0, 14], sizes = [4, 512], strides = [1, 1]} : vector<4x527xf32> to vector<4x512xf32>
    %166 = vector.broadcast %164 : vector<4x1xf32> to vector<4x512xf32>
    %167 = arith.mulf %166, %165 : vector<4x512xf32>
    %168 = arith.addf %161, %167 : vector<4x512xf32>
    %169 = vector.extract_strided_slice %157 {offsets = [0, 2], sizes = [4, 1], strides = [1, 1]} : vector<4x16xf32> to vector<4x1xf32>
    %170 = vector.extract_strided_slice %163 {offsets = [0, 13], sizes = [4, 512], strides = [1, 1]} : vector<4x527xf32> to vector<4x512xf32>
    %171 = vector.broadcast %169 : vector<4x1xf32> to vector<4x512xf32>
    %172 = arith.mulf %171, %170 : vector<4x512xf32>
    %173 = arith.addf %168, %172 : vector<4x512xf32>
    %174 = vector.extract_strided_slice %157 {offsets = [0, 3], sizes = [4, 1], strides = [1, 1]} : vector<4x16xf32> to vector<4x1xf32>
    %175 = vector.extract_strided_slice %163 {offsets = [0, 12], sizes = [4, 512], strides = [1, 1]} : vector<4x527xf32> to vector<4x512xf32>
    %176 = vector.broadcast %174 : vector<4x1xf32> to vector<4x512xf32>
    %177 = arith.mulf %176, %175 : vector<4x512xf32>
    %178 = arith.addf %173, %177 : vector<4x512xf32>
    %179 = vector.extract_strided_slice %157 {offsets = [0, 4], sizes = [4, 1], strides = [1, 1]} : vector<4x16xf32> to vector<4x1xf32>
    %180 = vector.extract_strided_slice %163 {offsets = [0, 11], sizes = [4, 512], strides = [1, 1]} : vector<4x527xf32> to vector<4x512xf32>
    %181 = vector.broadcast %179 : vector<4x1xf32> to vector<4x512xf32>
    %182 = arith.mulf %181, %180 : vector<4x512xf32>
    %183 = arith.addf %178, %182 : vector<4x512xf32>
    %184 = vector.extract_strided_slice %157 {offsets = [0, 5], sizes = [4, 1], strides = [1, 1]} : vector<4x16xf32> to vector<4x1xf32>
    %185 = vector.extract_strided_slice %163 {offsets = [0, 10], sizes = [4, 512], strides = [1, 1]} : vector<4x527xf32> to vector<4x512xf32>
    %186 = vector.broadcast %184 : vector<4x1xf32> to vector<4x512xf32>
    %187 = arith.mulf %186, %185 : vector<4x512xf32>
    %188 = arith.addf %183, %187 : vector<4x512xf32>
    %189 = vector.extract_strided_slice %157 {offsets = [0, 6], sizes = [4, 1], strides = [1, 1]} : vector<4x16xf32> to vector<4x1xf32>
    %190 = vector.extract_strided_slice %163 {offsets = [0, 9], sizes = [4, 512], strides = [1, 1]} : vector<4x527xf32> to vector<4x512xf32>
    %191 = vector.broadcast %189 : vector<4x1xf32> to vector<4x512xf32>
    %192 = arith.mulf %191, %190 : vector<4x512xf32>
    %193 = arith.addf %188, %192 : vector<4x512xf32>
    %194 = vector.extract_strided_slice %157 {offsets = [0, 7], sizes = [4, 1], strides = [1, 1]} : vector<4x16xf32> to vector<4x1xf32>
    %195 = vector.extract_strided_slice %163 {offsets = [0, 8], sizes = [4, 512], strides = [1, 1]} : vector<4x527xf32> to vector<4x512xf32>
    %196 = vector.broadcast %194 : vector<4x1xf32> to vector<4x512xf32>
    %197 = arith.mulf %196, %195 : vector<4x512xf32>
    %198 = arith.addf %193, %197 : vector<4x512xf32>
    %199 = vector.extract_strided_slice %157 {offsets = [0, 8], sizes = [4, 1], strides = [1, 1]} : vector<4x16xf32> to vector<4x1xf32>
    %200 = vector.extract_strided_slice %163 {offsets = [0, 7], sizes = [4, 512], strides = [1, 1]} : vector<4x527xf32> to vector<4x512xf32>
    %201 = vector.broadcast %199 : vector<4x1xf32> to vector<4x512xf32>
    %202 = arith.mulf %201, %200 : vector<4x512xf32>
    %203 = arith.addf %198, %202 : vector<4x512xf32>
    %204 = vector.extract_strided_slice %157 {offsets = [0, 9], sizes = [4, 1], strides = [1, 1]} : vector<4x16xf32> to vector<4x1xf32>
    %205 = vector.extract_strided_slice %163 {offsets = [0, 6], sizes = [4, 512], strides = [1, 1]} : vector<4x527xf32> to vector<4x512xf32>
    %206 = vector.broadcast %204 : vector<4x1xf32> to vector<4x512xf32>
    %207 = arith.mulf %206, %205 : vector<4x512xf32>
    %208 = arith.addf %203, %207 : vector<4x512xf32>
    %209 = vector.extract_strided_slice %157 {offsets = [0, 10], sizes = [4, 1], strides = [1, 1]} : vector<4x16xf32> to vector<4x1xf32>
    %210 = vector.extract_strided_slice %163 {offsets = [0, 5], sizes = [4, 512], strides = [1, 1]} : vector<4x527xf32> to vector<4x512xf32>
    %211 = vector.broadcast %209 : vector<4x1xf32> to vector<4x512xf32>
    %212 = arith.mulf %211, %210 : vector<4x512xf32>
    %213 = arith.addf %208, %212 : vector<4x512xf32>
    %214 = vector.extract_strided_slice %157 {offsets = [0, 11], sizes = [4, 1], strides = [1, 1]} : vector<4x16xf32> to vector<4x1xf32>
    %215 = vector.extract_strided_slice %163 {offsets = [0, 4], sizes = [4, 512], strides = [1, 1]} : vector<4x527xf32> to vector<4x512xf32>
    %216 = vector.broadcast %214 : vector<4x1xf32> to vector<4x512xf32>
    %217 = arith.mulf %216, %215 : vector<4x512xf32>
    %218 = arith.addf %213, %217 : vector<4x512xf32>
    %219 = vector.extract_strided_slice %157 {offsets = [0, 12], sizes = [4, 1], strides = [1, 1]} : vector<4x16xf32> to vector<4x1xf32>
    %220 = vector.extract_strided_slice %163 {offsets = [0, 3], sizes = [4, 512], strides = [1, 1]} : vector<4x527xf32> to vector<4x512xf32>
    %221 = vector.broadcast %219 : vector<4x1xf32> to vector<4x512xf32>
    %222 = arith.mulf %221, %220 : vector<4x512xf32>
    %223 = arith.addf %218, %222 : vector<4x512xf32>
    %224 = vector.extract_strided_slice %157 {offsets = [0, 13], sizes = [4, 1], strides = [1, 1]} : vector<4x16xf32> to vector<4x1xf32>
    %225 = vector.extract_strided_slice %163 {offsets = [0, 2], sizes = [4, 512], strides = [1, 1]} : vector<4x527xf32> to vector<4x512xf32>
    %226 = vector.broadcast %224 : vector<4x1xf32> to vector<4x512xf32>
    %227 = arith.mulf %226, %225 : vector<4x512xf32>
    %228 = arith.addf %223, %227 : vector<4x512xf32>
    %229 = vector.extract_strided_slice %157 {offsets = [0, 14], sizes = [4, 1], strides = [1, 1]} : vector<4x16xf32> to vector<4x1xf32>
    %230 = vector.extract_strided_slice %163 {offsets = [0, 1], sizes = [4, 512], strides = [1, 1]} : vector<4x527xf32> to vector<4x512xf32>
    %231 = vector.broadcast %229 : vector<4x1xf32> to vector<4x512xf32>
    %232 = arith.mulf %231, %230 : vector<4x512xf32>
    %233 = arith.addf %228, %232 : vector<4x512xf32>
    %234 = vector.extract_strided_slice %157 {offsets = [0, 15], sizes = [4, 1], strides = [1, 1]} : vector<4x16xf32> to vector<4x1xf32>
    %235 = vector.extract_strided_slice %163 {offsets = [0, 0], sizes = [4, 512], strides = [1, 1]} : vector<4x527xf32> to vector<4x512xf32>
    %236 = vector.broadcast %234 : vector<4x1xf32> to vector<4x512xf32>
    %237 = arith.mulf %236, %235 : vector<4x512xf32>
    %238 = arith.addf %233, %237 : vector<4x512xf32>
    %c0_203 = arith.constant 0 : index
    %c0_204 = arith.constant 0 : index
    %239 = vector.load %arg10[%c0_203, %c0_204] : memref<4x512xf32, #tpu.memory_space<vmem>>, vector<4x512xf32>
    tpu.vector_store %arg10[%c0_203, %c0_204], %238 {strides = array<i32>} : memref<4x512xf32, #tpu.memory_space<vmem>>, vector<4x512xf32>,
    return
  }
}

</mosaic_0001>

<llo_original>
// kernel: tpu_custom_call.1
$region0: #{tpu_custom_call.1}
  #allocation0 [shape = 'u32[]', space=smem, size = 0x4, offset = 0x4, fixed_abs, tag = 'smem constant byte address 0x4 - core index']
  #allocation1 [shape = 'u32[72,128]{1,0:T(1,128)}', space=vmem, size = 0x9000, scoped, tag = 'internal scratch']
  #allocation2 [shape = 'f32[68,128]{1,0:T(8,128)}', space=vmem, size = 0x9000, scoped, tag = 'scratch operand']
  #allocation3 [shape = 'f32[132,64]{1,0:T(8,128)}', space=vmem, size = 0x11000, scoped, tag = 'scratch operand']
  %s0 = inlined_call_operand.vmem [shape: f32[4,640], index: 0, kind: input, shape index: {}]
  %s1 = inlined_call_operand.vmem [shape: f32[4,512], index: 1, kind: input, shape index: {}]
  %s2 = inlined_call_operand.vmem [shape: bf16[128,256], index: 2, kind: input, shape index: {}]
  %s3 = inlined_call_operand.vmem [shape: bf16[64,256], index: 3, kind: input, shape index: {}]
  %s4 = inlined_call_operand.vmem [shape: bf16[2176,32], index: 4, kind: input, shape index: {}]
  %s5 = inlined_call_operand.vmem [shape: f32[1,32], index: 5, kind: input, shape index: {}]
  %s6 = inlined_call_operand.vmem [shape: bf16[32,16], index: 6, kind: input, shape index: {}]
  %s7 = inlined_call_operand.vmem [shape: f32[1,16], index: 7, kind: input, shape index: {}]
  %s8 = inlined_call_operand.hbm [shape: f32[68,128], index: 8, kind: output, shape index: {0}]
  %s9 = inlined_call_operand.hbm [shape: f32[132,128], index: 9, kind: output, shape index: {1}]
  %s10 = inlined_call_operand.hbm [shape: f32[4,512], index: 10, kind: output, shape index: {2}]
  %11 = xla_tuple %s8, %s9, %s10
  %s12 = sld [smem:[#allocation0]]
  $region58: #{tpu_custom_call.1} parent=0
    _
  %s14 = ssub.s32 1, %s12
  %s15 = scalar_select 0, %s14, %s12
  $region1: #{tpu_custom_call.1} parent=0
    #allocation4 [shape = 'u8[36864]{0}', space=vmem, size = 0x9000, scoped, tag = 'output window, operand 0, single buffered']
    #allocation5 [shape = 's32[1]{0}', space=sflag, size = 0x4, scoped, tag = 'scoped memory for tpu_custom_call.1']
    #allocation6 [shape = 'u8[69632]{0}', space=vmem, size = 0x11000, scoped, tag = 'output window, operand 1, single buffered']
    #allocation7 [shape = 's32[1]{0}', space=sflag, size = 0x4, scoped, tag = 'scoped memory for tpu_custom_call.1']
    #allocation8 [shape = 'u8[8192]{0}', space=vmem, size = 0x2000, scoped, tag = 'output window, operand 2, single buffered']
    %16 = vsyncpa [#allocation5], 0
    %17 = vsyncpa [#allocation7], 0
    // Predicated region
    $region2: #{tpu_custom_call.1} parent=1 // pred_check
      _
    $region3: #{tpu_custom_call.1} parent=1 // pred_check_branch
      %19 = sbr.rel (0) target = $region5
    $region4: #{tpu_custom_call.1} parent=1 // pred_region
      _
    $region5: #{tpu_custom_call.1} parent=1 // pred_fallthru
      _
    // Predicated region
    $region6: #{tpu_custom_call.1} parent=1 // pred_check
      _
    $region7: #{tpu_custom_call.1} parent=1 // pred_check_branch
      %21 = sbr.rel (0) target = $region9
    $region8: #{tpu_custom_call.1} parent=1 // pred_region
      _
    $region9: #{tpu_custom_call.1} parent=1 // pred_fallthru
      _
    // Predicated region
    $region10: #{tpu_custom_call.1} parent=1 // pred_check
      _
    $region11: #{tpu_custom_call.1} parent=1 // pred_check_branch
      %23 = sbr.rel (0) target = $region13
    $region12: #{tpu_custom_call.1} parent=1 // pred_region
      _
    $region13: #{tpu_custom_call.1} parent=1 // pred_fallthru
      _
    // Predicated region
    $region14: #{tpu_custom_call.1} parent=1 // pred_check
      _
    $region15: #{tpu_custom_call.1} parent=1 // pred_check_branch
      %25 = sbr.rel (0) target = $region17
    $region16: #{tpu_custom_call.1} parent=1 // pred_region
      _
    $region17: #{tpu_custom_call.1} parent=1 // pred_fallthru
      _
    // Predicated region
    $region18: #{tpu_custom_call.1} parent=1 // pred_check
      _
    $region19: #{tpu_custom_call.1} parent=1 // pred_check_branch
      %27 = sbr.rel (0) target = $region21
    $region20: #{tpu_custom_call.1} parent=1 // pred_region
      _
    $region21: #{tpu_custom_call.1} parent=1 // pred_fallthru
      _
    // Predicated region
    $region22: #{tpu_custom_call.1} parent=1 // pred_check
      _
    $region23: #{tpu_custom_call.1} parent=1 // pred_check_branch
      %29 = sbr.rel (0) target = $region25
    $region24: #{tpu_custom_call.1} parent=1 // pred_region
      _
    $region25: #{tpu_custom_call.1} parent=1 // pred_fallthru
      _
    // Predicated region
    $region26: #{tpu_custom_call.1} parent=1 // pred_check
      _
    $region27: #{tpu_custom_call.1} parent=1 // pred_check_branch
      %31 = sbr.rel (0) target = $region29
    $region28: #{tpu_custom_call.1} parent=1 // pred_region
      _
    $region29: #{tpu_custom_call.1} parent=1 // pred_fallthru
      _
    // Predicated region
    $region30: #{tpu_custom_call.1} parent=1 // pred_check
      _
    $region31: #{tpu_custom_call.1} parent=1 // pred_check_branch
      %33 = sbr.rel (0) target = $region33
    $region32: #{tpu_custom_call.1} parent=1 // pred_region
      _
    $region33: #{tpu_custom_call.1} parent=1 // pred_fallthru
      _
    %v35 = vld [vmem:[%s0] sm:$0xf]
    %36 = vst [vmem:[#allocation2] sm:$0xf] %v35
    %v37 = vld [vmem:[%s0] sm:$0xff]
    %39 = vst [vmem:[#allocation1] ss:$2 sm:$0xff] %v37
    %v40 = vld.sshfl [vmem:[#allocation1] sm:$0xff pattern:$0x75316420]
    %v41 = vld.sshfl [vmem:[#allocation1 + $0x8] sm:$0xff pattern:$0x75316420]
    %42 = vrot.lane.b32.xlu0 %v40, 96
    %v43 = vpop.permute.xlu0 %42
    %44 = vrot.lane.b32.xlu0 %v41, 96
    %v45 = vpop.permute.xlu0 %44
    %vm46 = vcmask 785408
    %v47 = vsel %vm46, %v43, %v45
    %49 = vst [vmem:[#allocation2 + $0x4] sm:$0xf] %v47
    %v50 = vld [vmem:[%s0] sm:$0xff]
    %52 = vst [vmem:[#allocation1] ss:$2 sm:$0xff] %v50
    %v53 = vld.sshfl [vmem:[#allocation1] sm:$0xff pattern:$0x75316420]
    %v54 = vld.sshfl [vmem:[#allocation1 + $0x8] sm:$0xff pattern:$0x75316420]
    %55 = vrot.lane.b32.xlu0 %v53, 64
    %v56 = vpop.permute.xlu0 %55
    %57 = vrot.lane.b32.xlu0 %v54, 64
    %v58 = vpop.permute.xlu0 %57
    %vm59 = vcmask 523264
    %v60 = vsel %vm59, %v56, %v58
    %62 = vst [vmem:[#allocation2 + $0x8] sm:$0xf] %v60
    %v63 = vld [vmem:[%s0] sm:$0xff]
    %65 = vst [vmem:[#allocation1] ss:$2 sm:$0xff] %v63
    %v66 = vld.sshfl [vmem:[#allocation1] sm:$0xff pattern:$0x75316420]
    %v67 = vld.sshfl [vmem:[#allocation1 + $0x8] sm:$0xff pattern:$0x75316420]
    %68 = vrot.lane.b32.xlu0 %v66, 32
    %v69 = vpop.permute.xlu0 %68
    %70 = vrot.lane.b32.xlu0 %v67, 32
    %v71 = vpop.permute.xlu0 %70
    %vm72 = vcmask 261120
    %v73 = vsel %vm72, %v69, %v71
    %75 = vst [vmem:[#allocation2 + $0xc] sm:$0xf] %v73
    %v76 = vld [vmem:[%s0 + $0x4] sm:$0xf]
    %77 = vst [vmem:[#allocation2 + $0x10] sm:$0xf] %v76
    %v78 = vld [vmem:[%s0 + $0x4] sm:$0xff]
    %80 = vst [vmem:[#allocation1] ss:$2 sm:$0xff] %v78
    %v81 = vld.sshfl [vmem:[#allocation1] sm:$0xff pattern:$0x75316420]
    %v82 = vld.sshfl [vmem:[#allocation1 + $0x8] sm:$0xff pattern:$0x75316420]
    %83 = vrot.lane.b32.xlu0 %v81, 96
    %v84 = vpop.permute.xlu0 %83
    %85 = vrot.lane.b32.xlu0 %v82, 96
    %v86 = vpop.permute.xlu0 %85
    %v87 = vsel %vm46, %v84, %v86
    %89 = vst [vmem:[#allocation2 + $0x14] sm:$0xf] %v87
    %v90 = vld [vmem:[%s0 + $0x4] sm:$0xff]
    %92 = vst [vmem:[#allocation1] ss:$2 sm:$0xff] %v90
    %v93 = vld.sshfl [vmem:[#allocation1] sm:$0xff pattern:$0x75316420]
    %v94 = vld.sshfl [vmem:[#allocation1 + $0x8] sm:$0xff pattern:$0x75316420]
    %95 = vrot.lane.b32.xlu0 %v93, 64
    %v96 = vpop.permute.xlu0 %95
    %97 = vrot.lane.b32.xlu0 %v94, 64
    %v98 = vpop.permute.xlu0 %97
    %v99 = vsel %vm59, %v96, %v98
    %101 = vst [vmem:[#allocation2 + $0x18] sm:$0xf] %v99
    %v102 = vld [vmem:[%s0 + $0x4] sm:$0xff]
    %104 = vst [vmem:[#allocation1] ss:$2 sm:$0xff] %v102
    %v105 = vld.sshfl [vmem:[#allocation1] sm:$0xff pattern:$0x75316420]
    %v106 = vld.sshfl [vmem:[#allocation1 + $0x8] sm:$0xff pattern:$0x75316420]
    %107 = vrot.lane.b32.xlu0 %v105, 32
    %v108 = vpop.permute.xlu0 %107
    %109 = vrot.lane.b32.xlu0 %v106, 32
    %v110 = vpop.permute.xlu0 %109
    %v111 = vsel %vm72, %v108, %v110
    %113 = vst [vmem:[#allocation2 + $0x1c] sm:$0xf] %v111
    %v114 = vld [vmem:[%s0 + $0x8] sm:$0xf]
    %115 = vst [vmem:[#allocation2 + $0x20] sm:$0xf] %v114
    %v116 = vld [vmem:[%s0 + $0x8] sm:$0xff]
    %118 = vst [vmem:[#allocation1] ss:$2 sm:$0xff] %v116
    %v119 = vld.sshfl [vmem:[#allocation1] sm:$0xff pattern:$0x75316420]
    %v120 = vld.sshfl [vmem:[#allocation1 + $0x8] sm:$0xff pattern:$0x75316420]
    %121 = vrot.lane.b32.xlu0 %v119, 96
    %v122 = vpop.permute.xlu0 %121
    %123 = vrot.lane.b32.xlu0 %v120, 96
    %v124 = vpop.permute.xlu0 %123
    %v125 = vsel %vm46, %v122, %v124
    %127 = vst [vmem:[#allocation2 + $0x24] sm:$0xf] %v125
    %v128 = vld [vmem:[%s0 + $0x8] sm:$0xff]
    %130 = vst [vmem:[#allocation1] ss:$2 sm:$0xff] %v128
    %v131 = vld.sshfl [vmem:[#allocation1] sm:$0xff pattern:$0x75316420]
    %v132 = vld.sshfl [vmem:[#allocation1 + $0x8] sm:$0xff pattern:$0x75316420]
    %133 = vrot.lane.b32.xlu0 %v131, 64
    %v134 = vpop.permute.xlu0 %133
    %135 = vrot.lane.b32.xlu0 %v132, 64
    %v136 = vpop.permute.xlu0 %135
    %v137 = vsel %vm59, %v134, %v136
    %139 = vst [vmem:[#allocation2 + $0x28] sm:$0xf] %v137
    %v140 = vld [vmem:[%s0 + $0x8] sm:$0xff]
    %142 = vst [vmem:[#allocation1] ss:$2 sm:$0xff] %v140
    %v143 = vld.sshfl [vmem:[#allocation1] sm:$0xff pattern:$0x75316420]
    %v144 = vld.sshfl [vmem:[#allocation1 + $0x8] sm:$0xff pattern:$0x75316420]
    %145 = vrot.lane.b32.xlu0 %v143, 32
    %v146 = vpop.permute.xlu0 %145
    %147 = vrot.lane.b32.xlu0 %v144, 32
    %v148 = vpop.permute.xlu0 %147
    %v149 = vsel %vm72, %v146, %v148
    %151 = vst [vmem:[#allocation2 + $0x2c] sm:$0xf] %v149
    %v152 = vld [vmem:[%s0 + $0xc] sm:$0xf]
    %153 = vst [vmem:[#allocation2 + $0x30] sm:$0xf] %v152
    %v154 = vld [vmem:[%s0 + $0xc] sm:$0xff]
    %156 = vst [vmem:[#allocation1] ss:$2 sm:$0xff] %v154
    %v157 = vld.sshfl [vmem:[#allocation1] sm:$0xff pattern:$0x75316420]
    %v158 = vld.sshfl [vmem:[#allocation1 + $0x8] sm:$0xff pattern:$0x75316420]
    %159 = vrot.lane.b32.xlu0 %v157, 96
    %v160 = vpop.permute.xlu0 %159
    %161 = vrot.lane.b32.xlu0 %v158, 96
    %v162 = vpop.permute.xlu0 %161
    %v163 = vsel %vm46, %v160, %v162
    %165 = vst [vmem:[#allocation2 + $0x34] sm:$0xf] %v163
    %v166 = vld [vmem:[%s0 + $0xc] sm:$0xff]
    %168 = vst [vmem:[#allocation1] ss:$2 sm:$0xff] %v166
    %v169 = vld.sshfl [vmem:[#allocation1] sm:$0xff pattern:$0x75316420]
    %v170 = vld.sshfl [vmem:[#allocation1 + $0x8] sm:$0xff pattern:$0x75316420]
    %171 = vrot.lane.b32.xlu0 %v169, 64
    %v172 = vpop.permute.xlu0 %171
    %173 = vrot.lane.b32.xlu0 %v170, 64
    %v174 = vpop.permute.xlu0 %173
    %v175 = vsel %vm59, %v172, %v174
    %177 = vst [vmem:[#allocation2 + $0x38] sm:$0xf] %v175
    %v178 = vld [vmem:[%s0 + $0xc] sm:$0xff]
    %180 = vst [vmem:[#allocation1] ss:$2 sm:$0xff] %v178
    %v181 = vld.sshfl [vmem:[#allocation1] sm:$0xff pattern:$0x75316420]
    %v182 = vld.sshfl [vmem:[#allocation1 + $0x8] sm:$0xff pattern:$0x75316420]
    %183 = vrot.lane.b32.xlu0 %v181, 32
    %v184 = vpop.permute.xlu0 %183
    %185 = vrot.lane.b32.xlu0 %v182, 32
    %v186 = vpop.permute.xlu0 %185
    %v187 = vsel %vm72, %v184, %v186
    %189 = vst [vmem:[#allocation2 + $0x3c] sm:$0xf] %v187
    %v190 = vld [vmem:[%s0 + $0x10] sm:$0xf]
    %191 = vst [vmem:[#allocation2 + $0x40] sm:$0xf] %v190
    %v192 = vld [vmem:[#allocation2] sm:$0xff]
    %v193 = vld [vmem:[#allocation2 + $0x8] sm:$0xff]
    %v194 = vld [vmem:[#allocation2 + $0x10] sm:$0xff]
    %v195 = vld [vmem:[#allocation2 + $0x18] sm:$0xff]
    %v196 = vld [vmem:[#allocation2 + $0x20] sm:$0xff]
    %v197 = vld [vmem:[#allocation2 + $0x28] sm:$0xff]
    %v198 = vld [vmem:[#allocation2 + $0x30] sm:$0xff]
    %v199 = vld [vmem:[#allocation2 + $0x38] sm:$0xff]
    %v200 = vld [vmem:[#allocation2 + $0x40] sm:$0xf]
    %v201 = vpack.c.bf16 %v193, %v192
    %v202 = vpack.c.bf16 %v195, %v194
    %v203 = vpack.c.bf16 %v197, %v196
    %v204 = vpack.c.bf16 %v199, %v198
    %v205 = vpack.c.bf16 %v200, %v200
    %v206 = vld [vmem:[%s2] sm:$0xff]
    %v207 = vld [vmem:[%s2 + $0x8] sm:$0xff]
    %v208 = vld [vmem:[%s2 + $0x10] sm:$0xff]
    %v209 = vld [vmem:[%s2 + $0x18] sm:$0xff]
    %v210 = vld [vmem:[%s2 + $0x20] sm:$0xff]
    %v211 = vld [vmem:[%s2 + $0x28] sm:$0xff]
    %v212 = vld [vmem:[%s2 + $0x30] sm:$0xff]
    %v213 = vld [vmem:[%s2 + $0x38] sm:$0xff]
    %v214 = vld [vmem:[%s2 + $0x40] sm:$0xff]
    %v215 = vld [vmem:[%s2 + $0x48] sm:$0xff]
    %v216 = vld [vmem:[%s2 + $0x50] sm:$0xff]
    %v217 = vld [vmem:[%s2 + $0x58] sm:$0xff]
    %v218 = vld [vmem:[%s2 + $0x60] sm:$0xff]
    %v219 = vld [vmem:[%s2 + $0x68] sm:$0xff]
    %v220 = vld [vmem:[%s2 + $0x70] sm:$0xff]
    %v221 = vld [vmem:[%s2 + $0x78] sm:$0xff]
    %v238 = vunpack.c.l.b16 %v206
    %v239 = vunpack.c.h.b16 %v206
    %v240 = vunpack.c.l.b16 %v207
    %v241 = vunpack.c.h.b16 %v207
    %v242 = vunpack.c.l.b16 %v208
    %v243 = vunpack.c.h.b16 %v208
    %v244 = vunpack.c.l.b16 %v209
    %v245 = vunpack.c.h.b16 %v209
    %v246 = vunpack.c.l.b16 %v210
    %v247 = vunpack.c.h.b16 %v210
    %v248 = vunpack.c.l.b16 %v211
    %v249 = vunpack.c.h.b16 %v211
    %v250 = vunpack.c.l.b16 %v212
    %v251 = vunpack.c.h.b16 %v212
    %v252 = vunpack.c.l.b16 %v213
    %v253 = vunpack.c.h.b16 %v213
    %v254 = vunpack.c.l.b16 %v214
    %v255 = vunpack.c.h.b16 %v214
    %v256 = vunpack.c.l.b16 %v215
    %v257 = vunpack.c.h.b16 %v215
    %v258 = vunpack.c.l.b16 %v216
    %v259 = vunpack.c.h.b16 %v216
    %v260 = vunpack.c.l.b16 %v217
    %v261 = vunpack.c.h.b16 %v217
    %v262 = vunpack.c.l.b16 %v218
    %v263 = vunpack.c.h.b16 %v218
    %v264 = vunpack.c.l.b16 %v219
    %v265 = vunpack.c.h.b16 %v219
    %v266 = vunpack.c.l.b16 %v220
    %v267 = vunpack.c.h.b16 %v220
    %v268 = vunpack.c.l.b16 %v221
    %v269 = vunpack.c.h.b16 %v221
    %v270 = vpack.c.b16 %v240, %v238
    %v271 = vpack.c.b16 %v241, %v239
    %v272 = vpack.c.b16 %v244, %v242
    %v273 = vpack.c.b16 %v245, %v243
    %v274 = vpack.c.b16 %v248, %v246
    %v275 = vpack.c.b16 %v249, %v247
    %v276 = vpack.c.b16 %v252, %v250
    %v277 = vpack.c.b16 %v253, %v251
    %v278 = vpack.c.b16 %v256, %v254
    %v279 = vpack.c.b16 %v257, %v255
    %v280 = vpack.c.b16 %v260, %v258
    %v281 = vpack.c.b16 %v261, %v259
    %v282 = vpack.c.b16 %v264, %v262
    %v283 = vpack.c.b16 %v265, %v263
    %v284 = vpack.c.b16 %v268, %v266
    %v285 = vpack.c.b16 %v269, %v267
    %302 = vmatpush.bf16.msra.mxu0 %v284
    %303 = vmatpush.bf16.msra.mxu0 %v282
    %304 = vmatpush.bf16.msra.mxu0 %v280
    %305 = vmatpush.bf16.msra.mxu0 %v278
    %306 = vmatpush.bf16.msra.mxu0 %v276
    %307 = vmatpush.bf16.msra.mxu0 %v274
    %308 = vmatpush.bf16.msra.mxu0 %v272
    %309 = vmatpush.bf16.msra.mxu0 %v270
    %310 = vmatmul.bf16.gmra.mxu0 %v201
    %v311 = vpop.f32.mrf.mxu0
    %v312 = vadd.f32 0.0, %v311
    %v313 = vpop.f32.mrf.mxu0
    %v314 = vadd.f32 0.0, %v313
    %315 = vmatmul.bf16.gmra.mxu0 %v202
    %v316 = vpop.f32.mrf.mxu0
    %v317 = vadd.f32 0.0, %v316
    %v318 = vpop.f32.mrf.mxu0
    %v319 = vadd.f32 0.0, %v318
    %320 = vmatmul.bf16.gmra.mxu0 %v203
    %v321 = vpop.f32.mrf.mxu0
    %v322 = vadd.f32 0.0, %v321
    %v323 = vpop.f32.mrf.mxu0
    %v324 = vadd.f32 0.0, %v323
    %325 = vmatmul.bf16.gmra.mxu0 %v204
    %v326 = vpop.f32.mrf.mxu0
    %v327 = vadd.f32 0.0, %v326
    %v328 = vpop.f32.mrf.mxu0
    %v329 = vadd.f32 0.0, %v328
    %330 = vmatmul.bf16.gmra.mxu0 %v205
    %v331 = vpop.f32.mrf.mxu0
    %v332 = vadd.f32 0.0, %v331
    %v333 = vpop.f32.mrf.mxu0
    %334 = vdwg.mxu0
    %335 = vmatpush.bf16.msra.mxu0 %v285
    %336 = vmatpush.bf16.msra.mxu0 %v283
    %337 = vmatpush.bf16.msra.mxu0 %v281
    %338 = vmatpush.bf16.msra.mxu0 %v279
    %339 = vmatpush.bf16.msra.mxu0 %v277
    %340 = vmatpush.bf16.msra.mxu0 %v275
    %341 = vmatpush.bf16.msra.mxu0 %v273
    %342 = vmatpush.bf16.msra.mxu0 %v271
    %343 = vmatmul.bf16.gmra.mxu0 %v201
    %v344 = vpop.f32.mrf.mxu0
    %v345 = vadd.f32 0.0, %v344
    %v346 = vpop.f32.mrf.mxu0
    %v347 = vadd.f32 0.0, %v346
    %348 = vmatmul.bf16.gmra.mxu0 %v202
    %v349 = vpop.f32.mrf.mxu0
    %v350 = vadd.f32 0.0, %v349
    %v351 = vpop.f32.mrf.mxu0
    %v352 = vadd.f32 0.0, %v351
    %353 = vmatmul.bf16.gmra.mxu0 %v203
    %v354 = vpop.f32.mrf.mxu0
    %v355 = vadd.f32 0.0, %v354
    %v356 = vpop.f32.mrf.mxu0
    %v357 = vadd.f32 0.0, %v356
    %358 = vmatmul.bf16.gmra.mxu0 %v204
    %v359 = vpop.f32.mrf.mxu0
    %v360 = vadd.f32 0.0, %v359
    %v361 = vpop.f32.mrf.mxu0
    %v362 = vadd.f32 0.0, %v361
    %363 = vmatmul.bf16.gmra.mxu0 %v205
    %v364 = vpop.f32.mrf.mxu0
    %v365 = vadd.f32 0.0, %v364
    %v366 = vpop.f32.mrf.mxu0
    %367 = vdwg.mxu0
    %v368 = vmul.f32 %v312, %v312
    %v369 = vmul.f32 %v314, %v314
    %v370 = vmul.f32 %v317, %v317
    %v371 = vmul.f32 %v319, %v319
    %v372 = vmul.f32 %v322, %v322
    %v373 = vmul.f32 %v324, %v324
    %v374 = vmul.f32 %v327, %v327
    %v375 = vmul.f32 %v329, %v329
    %v376 = vmul.f32 %v332, %v332
    %v377 = vmul.f32 %v345, %v345
    %v378 = vmul.f32 %v347, %v347
    %v379 = vmul.f32 %v350, %v350
    %v380 = vmul.f32 %v352, %v352
    %v381 = vmul.f32 %v355, %v355
    %v382 = vmul.f32 %v357, %v357
    %v383 = vmul.f32 %v360, %v360
    %v384 = vmul.f32 %v362, %v362
    %v385 = vmul.f32 %v365, %v365
    %v386 = vadd.f32 %v368, %v377
    %v387 = vadd.f32 %v369, %v378
    %v388 = vadd.f32 %v370, %v379
    %v389 = vadd.f32 %v371, %v380
    %v390 = vadd.f32 %v372, %v381
    %v391 = vadd.f32 %v373, %v382
    %v392 = vadd.f32 %v374, %v383
    %v393 = vadd.f32 %v375, %v384
    %v394 = vadd.f32 %v376, %v385
    %v395 = vadd.f32 %v386, 1e-12
    %v396 = vadd.f32 %v387, 1e-12
    %v397 = vadd.f32 %v388, 1e-12
    %v398 = vadd.f32 %v389, 1e-12
    %v399 = vadd.f32 %v390, 1e-12
    %v400 = vadd.f32 %v391, 1e-12
    %v401 = vadd.f32 %v392, 1e-12
    %v402 = vadd.f32 %v393, 1e-12
    %v403 = vadd.f32 %v394, 1e-12
    %v404 = vrsqrt.pop %v395
    %v405 = vmul.f32 %v404, %v395
    %v406 = vmul.f32 %v405, %v404
    %v407 = vmul.f32 0.5, %v406
    %v408 = vsub.f32 1.5, %v407
    %v409 = vmul.f32 %v404, %v408
    %v410 = vmul.f32 %v395, %v409
    %vm411 = vcmp.eq.f32.partialorder %v395, inf
    %v412 = vsel %vm411, %v395, %v410
    %vm413 = vcmp.eq.f32.partialorder %v395, 0.0
    %v414 = vand.u32 %v395, 2147483648
    %v415 = vsel %vm413, %v414, %v412
    %v416 = vrsqrt.pop %v396
    %v417 = vmul.f32 %v416, %v396
    %v418 = vmul.f32 %v417, %v416
    %v419 = vmul.f32 0.5, %v418
    %v420 = vsub.f32 1.5, %v419
    %v421 = vmul.f32 %v416, %v420
    %v422 = vmul.f32 %v396, %v421
    %vm423 = vcmp.eq.f32.partialorder %v396, inf
    %v424 = vsel %vm423, %v396, %v422
    %vm425 = vcmp.eq.f32.partialorder %v396, 0.0
    %v426 = vand.u32 %v396, 2147483648
    %v427 = vsel %vm425, %v426, %v424
    %v428 = vrsqrt.pop %v397
    %v429 = vmul.f32 %v428, %v397
    %v430 = vmul.f32 %v429, %v428
    %v431 = vmul.f32 0.5, %v430
    %v432 = vsub.f32 1.5, %v431
    %v433 = vmul.f32 %v428, %v432
    %v434 = vmul.f32 %v397, %v433
    %vm435 = vcmp.eq.f32.partialorder %v397, inf
    %v436 = vsel %vm435, %v397, %v434
    %vm437 = vcmp.eq.f32.partialorder %v397, 0.0
    %v438 = vand.u32 %v397, 2147483648
    %v439 = vsel %vm437, %v438, %v436
    %v440 = vrsqrt.pop %v398
    %v441 = vmul.f32 %v440, %v398
    %v442 = vmul.f32 %v441, %v440
    %v443 = vmul.f32 0.5, %v442
    %v444 = vsub.f32 1.5, %v443
    %v445 = vmul.f32 %v440, %v444
    %v446 = vmul.f32 %v398, %v445
    %vm447 = vcmp.eq.f32.partialorder %v398, inf
    %v448 = vsel %vm447, %v398, %v446
    %vm449 = vcmp.eq.f32.partialorder %v398, 0.0
    %v450 = vand.u32 %v398, 2147483648
    %v451 = vsel %vm449, %v450, %v448
    %v452 = vrsqrt.pop %v399
    %v453 = vmul.f32 %v452, %v399
    %v454 = vmul.f32 %v453, %v452
    %v455 = vmul.f32 0.5, %v454
    %v456 = vsub.f32 1.5, %v455
    %v457 = vmul.f32 %v452, %v456
    %v458 = vmul.f32 %v399, %v457
    %vm459 = vcmp.eq.f32.partialorder %v399, inf
    %v460 = vsel %vm459, %v399, %v458
    %vm461 = vcmp.eq.f32.partialorder %v399, 0.0
    %v462 = vand.u32 %v399, 2147483648
    %v463 = vsel %vm461, %v462, %v460
    %v464 = vrsqrt.pop %v400
    %v465 = vmul.f32 %v464, %v400
    %v466 = vmul.f32 %v465, %v464
    %v467 = vmul.f32 0.5, %v466
    %v468 = vsub.f32 1.5, %v467
    %v469 = vmul.f32 %v464, %v468
    %v470 = vmul.f32 %v400, %v469
    %vm471 = vcmp.eq.f32.partialorder %v400, inf
    %v472 = vsel %vm471, %v400, %v470
    %vm473 = vcmp.eq.f32.partialorder %v400, 0.0
    %v474 = vand.u32 %v400, 2147483648
    %v475 = vsel %vm473, %v474, %v472
    %v476 = vrsqrt.pop %v401
    %v477 = vmul.f32 %v476, %v401
    %v478 = vmul.f32 %v477, %v476
    %v479 = vmul.f32 0.5, %v478
    %v480 = vsub.f32 1.5, %v479
    %v481 = vmul.f32 %v476, %v480
    %v482 = vmul.f32 %v401, %v481
    %vm483 = vcmp.eq.f32.partialorder %v401, inf
    %v484 = vsel %vm483, %v401, %v482
    %vm485 = vcmp.eq.f32.partialorder %v401, 0.0
    %v486 = vand.u32 %v401, 2147483648
    %v487 = vsel %vm485, %v486, %v484
    %v488 = vrsqrt.pop %v402
    %v489 = vmul.f32 %v488, %v402
    %v490 = vmul.f32 %v489, %v488
    %v491 = vmul.f32 0.5, %v490
    %v492 = vsub.f32 1.5, %v491
    %v493 = vmul.f32 %v488, %v492
    %v494 = vmul.f32 %v402, %v493
    %vm495 = vcmp.eq.f32.partialorder %v402, inf
    %v496 = vsel %vm495, %v402, %v494
    %vm497 = vcmp.eq.f32.partialorder %v402, 0.0
    %v498 = vand.u32 %v402, 2147483648
    %v499 = vsel %vm497, %v498, %v496
    %v500 = vrsqrt.pop %v403
    %v501 = vmul.f32 %v500, %v403
    %v502 = vmul.f32 %v501, %v500
    %v503 = vmul.f32 0.5, %v502
    %v504 = vsub.f32 1.5, %v503
    %v505 = vmul.f32 %v500, %v504
    %v506 = vmul.f32 %v403, %v505
    %vm507 = vcmp.eq.f32.partialorder %v403, inf
    %v508 = vsel %vm507, %v403, %v506
    %vm509 = vcmp.eq.f32.partialorder %v403, 0.0
    %v510 = vand.u32 %v403, 2147483648
    %v511 = vsel %vm509, %v510, %v508
    %512 = vst [vmem:[#allocation4] sm:$0xff] %v415
    %513 = vst [vmem:[#allocation4 + $0x8] sm:$0xff] %v427
    %514 = vst [vmem:[#allocation4 + $0x10] sm:$0xff] %v439
    %515 = vst [vmem:[#allocation4 + $0x18] sm:$0xff] %v451
    %516 = vst [vmem:[#allocation4 + $0x20] sm:$0xff] %v463
    %517 = vst [vmem:[#allocation4 + $0x28] sm:$0xff] %v475
    %518 = vst [vmem:[#allocation4 + $0x30] sm:$0xff] %v487
    %519 = vst [vmem:[#allocation4 + $0x38] sm:$0xff] %v499
    %520 = vst [vmem:[#allocation4 + $0x40] sm:$0xf] %v511
    %v521 = vld [vmem:[#allocation4] sm:$0xf]
    %v522 = vld [vmem:[#allocation4 + $0x4] sm:$0xf]
    %v523 = vld [vmem:[#allocation4 + $0x8] sm:$0xf]
    %v524 = vld [vmem:[#allocation4 + $0xc] sm:$0xf]
    %v525 = vld [vmem:[#allocation4 + $0x10] sm:$0xf]
    %v526 = vld [vmem:[#allocation4 + $0x14] sm:$0xf]
    %v527 = vld [vmem:[#allocation4 + $0x18] sm:$0xf]
    %v528 = vld [vmem:[#allocation4 + $0x1c] sm:$0xf]
    %v529 = vld [vmem:[#allocation4 + $0x20] sm:$0xf]
    %v530 = vld [vmem:[#allocation4 + $0x24] sm:$0xf]
    %v531 = vld [vmem:[#allocation4 + $0x28] sm:$0xf]
    %v532 = vld [vmem:[#allocation4 + $0x2c] sm:$0xf]
    %v533 = vld [vmem:[#allocation4 + $0x30] sm:$0xf]
    %v534 = vld [vmem:[#allocation4 + $0x34] sm:$0xf]
    %v535 = vld [vmem:[#allocation4 + $0x38] sm:$0xf]
    %v536 = vld [vmem:[#allocation4 + $0x3c] sm:$0xf]
    %v537 = vld [vmem:[#allocation4 + $0x40] sm:$0xf]
    %v538 = vld [vmem:[%s0] sm:$0xf]
    %540 = vst [vmem:[#allocation1] ss:$2 sm:$0xff] %v538
    %v541 = vld.sshfl [vmem:[#allocation1] sm:$0xff pattern:$0x75316420]
    %542 = vrot.lane.b32.xlu0 %v541, 96
    %v543 = vpop.permute.xlu0 %542
    %vm545 = vcmask 519168
    %546 = vst.msk [vmem:[#allocation3] sm:$0xf] %vm545, %v543
    %v547 = vld [vmem:[%s0] sm:$0xf]
    %549 = vst [vmem:[#allocation1] ss:$2 sm:$0xff] %v547
    %v550 = vld.sshfl [vmem:[#allocation1] sm:$0xff pattern:$0x75316420]
    %551 = vrot.lane.b32.xlu0 %v550, 80
    %v552 = vpop.permute.xlu0 %551
    %554 = vst.msk [vmem:[#allocation3 + $0x4] sm:$0xf] %vm545, %v552
    %v555 = vld [vmem:[%s0] sm:$0xf]
    %557 = vst [vmem:[#allocation1] ss:$2 sm:$0xff] %v555
    %v558 = vld.sshfl [vmem:[#allocation1] sm:$0xff pattern:$0x75316420]
    %559 = vrot.lane.b32.xlu0 %v558, 64
    %v560 = vpop.permute.xlu0 %559
    %562 = vst.msk [vmem:[#allocation3 + $0x8] sm:$0xf] %vm545, %v560
    %v563 = vld [vmem:[%s0] sm:$0xff]
    %565 = vst [vmem:[#allocation1] ss:$2 sm:$0xff] %v563
    %v566 = vld.sshfl [vmem:[#allocation1] sm:$0xff pattern:$0x75316420]
    %v567 = vld.sshfl [vmem:[#allocation1 + $0x8] sm:$0xff pattern:$0x75316420]
    %568 = vrot.lane.b32.xlu0 %v566, 48
    %v569 = vpop.permute.xlu0 %568
    %570 = vrot.lane.b32.xlu0 %v567, 48
    %v571 = vpop.permute.xlu0 %570
    %vm572 = vcmask 392192
    %v573 = vsel %vm572, %v569, %v571
    %575 = vst.msk [vmem:[#allocation3 + $0xc] sm:$0xf] %vm545, %v573
    %v576 = vld [vmem:[%s0] sm:$0xff]
    %578 = vst [vmem:[#allocation1] ss:$2 sm:$0xff] %v576
    %v579 = vld.sshfl [vmem:[#allocation1] sm:$0xff pattern:$0x75316420]
    %v580 = vld.sshfl [vmem:[#allocation1 + $0x8] sm:$0xff pattern:$0x75316420]
    %581 = vrot.lane.b32.xlu0 %v579, 32
    %v582 = vpop.permute.xlu0 %581
    %583 = vrot.lane.b32.xlu0 %v580, 32
    %v584 = vpop.permute.xlu0 %583
    %v585 = vsel %vm72, %v582, %v584
    %587 = vst.msk [vmem:[#allocation3 + $0x10] sm:$0xf] %vm545, %v585
    %v588 = vld [vmem:[%s0] sm:$0xff]
    %590 = vst [vmem:[#allocation1] ss:$2 sm:$0xff] %v588
    %v591 = vld.sshfl [vmem:[#allocation1] sm:$0xff pattern:$0x75316420]
    %v592 = vld.sshfl [vmem:[#allocation1 + $0x8] sm:$0xff pattern:$0x75316420]
    %593 = vrot.lane.b32.xlu0 %v591, 16
    %v594 = vpop.permute.xlu0 %593
    %595 = vrot.lane.b32.xlu0 %v592, 16
    %v596 = vpop.permute.xlu0 %595
    %vm597 = vcmask 130048
    %v598 = vsel %vm597, %v594, %v596
    %600 = vst.msk [vmem:[#allocation3 + $0x14] sm:$0xf] %vm545, %v598
    %v601 = vld [vmem:[%s0 + $0x4] sm:$0xf]
    %602 = vst.msk [vmem:[#allocation3 + $0x18] sm:$0xf] %vm545, %v601
    %v603 = vld [vmem:[%s0 + $0x4] sm:$0xf]
    %605 = vst [vmem:[#allocation1] ss:$2 sm:$0xff] %v603
    %v606 = vld.sshfl [vmem:[#allocation1] sm:$0xff pattern:$0x75316420]
    %607 = vrot.lane.b32.xlu0 %v606, 112
    %v608 = vpop.permute.xlu0 %607
    %610 = vst.msk [vmem:[#allocation3 + $0x1c] sm:$0xf] %vm545, %v608
    %v611 = vld [vmem:[%s0 + $0x4] sm:$0xf]
    %613 = vst [vmem:[#allocation1] ss:$2 sm:$0xff] %v611
    %v614 = vld.sshfl [vmem:[#allocation1] sm:$0xff pattern:$0x75316420]
    %615 = vrot.lane.b32.xlu0 %v614, 96
    %v616 = vpop.permute.xlu0 %615
    %618 = vst.msk [vmem:[#allocation3 + $0x20] sm:$0xf] %vm545, %v616
    %v619 = vld [vmem:[%s0 + $0x4] sm:$0xf]
    %621 = vst [vmem:[#allocation1] ss:$2 sm:$0xff] %v619
    %v622 = vld.sshfl [vmem:[#allocation1] sm:$0xff pattern:$0x75316420]
    %623 = vrot.lane.b32.xlu0 %v622, 80
    %v624 = vpop.permute.xlu0 %623
    %626 = vst.msk [vmem:[#allocation3 + $0x24] sm:$0xf] %vm545, %v624
    %v627 = vld [vmem:[%s0 + $0x4] sm:$0xf]
    %629 = vst [vmem:[#allocation1] ss:$2 sm:$0xff] %v627
    %v630 = vld.sshfl [vmem:[#allocation1] sm:$0xff pattern:$0x75316420]
    %631 = vrot.lane.b32.xlu0 %v630, 64
    %v632 = vpop.permute.xlu0 %631
    %634 = vst.msk [vmem:[#allocation3 + $0x28] sm:$0xf] %vm545, %v632
    %v635 = vld [vmem:[%s0 + $0x4] sm:$0xff]
    %637 = vst [vmem:[#allocation1] ss:$2 sm:$0xff] %v635
    %v638 = vld.sshfl [vmem:[#allocation1] sm:$0xff pattern:$0x75316420]
    %v639 = vld.sshfl [vmem:[#allocation1 + $0x8] sm:$0xff pattern:$0x75316420]
    %640 = vrot.lane.b32.xlu0 %v638, 48
    %v641 = vpop.permute.xlu0 %640
    %642 = vrot.lane.b32.xlu0 %v639, 48
    %v643 = vpop.permute.xlu0 %642
    %v644 = vsel %vm572, %v641, %v643
    %646 = vst.msk [vmem:[#allocation3 + $0x2c] sm:$0xf] %vm545, %v644
    %v647 = vld [vmem:[%s0 + $0x4] sm:$0xff]
    %649 = vst [vmem:[#allocation1] ss:$2 sm:$0xff] %v647
    %v650 = vld.sshfl [vmem:[#allocation1] sm:$0xff pattern:$0x75316420]
    %v651 = vld.sshfl [vmem:[#allocation1 + $0x8] sm:$0xff pattern:$0x75316420]
    %652 = vrot.lane.b32.xlu0 %v650, 32
    %v653 = vpop.permute.xlu0 %652
    %654 = vrot.lane.b32.xlu0 %v651, 32
    %v655 = vpop.permute.xlu0 %654
    %v656 = vsel %vm72, %v653, %v655
    %658 = vst.msk [vmem:[#allocation3 + $0x30] sm:$0xf] %vm545, %v656
    %v659 = vld [vmem:[%s0 + $0x4] sm:$0xff]
    %661 = vst [vmem:[#allocation1] ss:$2 sm:$0xff] %v659
    %v662 = vld.sshfl [vmem:[#allocation1] sm:$0xff pattern:$0x75316420]
    %v663 = vld.sshfl [vmem:[#allocation1 + $0x8] sm:$0xff pattern:$0x75316420]
    %664 = vrot.lane.b32.xlu0 %v662, 16
    %v665 = vpop.permute.xlu0 %664
    %666 = vrot.lane.b32.xlu0 %v663, 16
    %v667 = vpop.permute.xlu0 %666
    %v668 = vsel %vm597, %v665, %v667
    %670 = vst.msk [vmem:[#allocation3 + $0x34] sm:$0xf] %vm545, %v668
    %v671 = vld [vmem:[%s0 + $0x8] sm:$0xf]
    %672 = vst.msk [vmem:[#allocation3 + $0x38] sm:$0xf] %vm545, %v671
    %v673 = vld [vmem:[%s0 + $0x8] sm:$0xf]
    %675 = vst [vmem:[#allocation1] ss:$2 sm:$0xff] %v673
    %v676 = vld.sshfl [vmem:[#allocation1] sm:$0xff pattern:$0x75316420]
    %677 = vrot.lane.b32.xlu0 %v676, 112
    %v678 = vpop.permute.xlu0 %677
    %680 = vst.msk [vmem:[#allocation3 + $0x3c] sm:$0xf] %vm545, %v678
    %v681 = vld [vmem:[%s0 + $0x8] sm:$0xf]
    %683 = vst [vmem:[#allocation1] ss:$2 sm:$0xff] %v681
    %v684 = vld.sshfl [vmem:[#allocation1] sm:$0xff pattern:$0x75316420]
    %685 = vrot.lane.b32.xlu0 %v684, 96
    %v686 = vpop.permute.xlu0 %685
    %688 = vst.msk [vmem:[#allocation3 + $0x40] sm:$0xf] %vm545, %v686
    %v689 = vld [vmem:[%s0 + $0x8] sm:$0xf]
    %691 = vst [vmem:[#allocation1] ss:$2 sm:$0xff] %v689
    %v692 = vld.sshfl [vmem:[#allocation1] sm:$0xff pattern:$0x75316420]
    %693 = vrot.lane.b32.xlu0 %v692, 80
    %v694 = vpop.permute.xlu0 %693
    %696 = vst.msk [vmem:[#allocation3 + $0x44] sm:$0xf] %vm545, %v694
    %v697 = vld [vmem:[%s0 + $0x8] sm:$0xf]
    %699 = vst [vmem:[#allocation1] ss:$2 sm:$0xff] %v697
    %v700 = vld.sshfl [vmem:[#allocation1] sm:$0xff pattern:$0x75316420]
    %701 = vrot.lane.b32.xlu0 %v700, 64
    %v702 = vpop.permute.xlu0 %701
    %704 = vst.msk [vmem:[#allocation3 + $0x48] sm:$0xf] %vm545, %v702
    %v705 = vld [vmem:[%s0 + $0x8] sm:$0xff]
    %707 = vst [vmem:[#allocation1] ss:$2 sm:$0xff] %v705
    %v708 = vld.sshfl [vmem:[#allocation1] sm:$0xff pattern:$0x75316420]
    %v709 = vld.sshfl [vmem:[#allocation1 + $0x8] sm:$0xff pattern:$0x75316420]
    %710 = vrot.lane.b32.xlu0 %v708, 48
    %v711 = vpop.permute.xlu0 %710
    %712 = vrot.lane.b32.xlu0 %v709, 48
    %v713 = vpop.permute.xlu0 %712
    %v714 = vsel %vm572, %v711, %v713
    %716 = vst.msk [vmem:[#allocation3 + $0x4c] sm:$0xf] %vm545, %v714
    %v717 = vld [vmem:[%s0 + $0x8] sm:$0xff]
    %719 = vst [vmem:[#allocation1] ss:$2 sm:$0xff] %v717
    %v720 = vld.sshfl [vmem:[#allocation1] sm:$0xff pattern:$0x75316420]
    %v721 = vld.sshfl [vmem:[#allocation1 + $0x8] sm:$0xff pattern:$0x75316420]
    %722 = vrot.lane.b32.xlu0 %v720, 32
    %v723 = vpop.permute.xlu0 %722
    %724 = vrot.lane.b32.xlu0 %v721, 32
    %v725 = vpop.permute.xlu0 %724
    %v726 = vsel %vm72, %v723, %v725
    %728 = vst.msk [vmem:[#allocation3 + $0x50] sm:$0xf] %vm545, %v726
    %v729 = vld [vmem:[%s0 + $0x8] sm:$0xff]
    %731 = vst [vmem:[#allocation1] ss:$2 sm:$0xff] %v729
    %v732 = vld.sshfl [vmem:[#allocation1] sm:$0xff pattern:$0x75316420]
    %v733 = vld.sshfl [vmem:[#allocation1 + $0x8] sm:$0xff pattern:$0x75316420]
    %734 = vrot.lane.b32.xlu0 %v732, 16
    %v735 = vpop.permute.xlu0 %734
    %736 = vrot.lane.b32.xlu0 %v733, 16
    %v737 = vpop.permute.xlu0 %736
    %v738 = vsel %vm597, %v735, %v737
    %740 = vst.msk [vmem:[#allocation3 + $0x54] sm:$0xf] %vm545, %v738
    %v741 = vld [vmem:[%s0 + $0xc] sm:$0xf]
    %742 = vst.msk [vmem:[#allocation3 + $0x58] sm:$0xf] %vm545, %v741
    %v743 = vld [vmem:[%s0 + $0xc] sm:$0xf]
    %745 = vst [vmem:[#allocation1] ss:$2 sm:$0xff] %v743
    %v746 = vld.sshfl [vmem:[#allocation1] sm:$0xff pattern:$0x75316420]
    %747 = vrot.lane.b32.xlu0 %v746, 112
    %v748 = vpop.permute.xlu0 %747
    %750 = vst.msk [vmem:[#allocation3 + $0x5c] sm:$0xf] %vm545, %v748
    %v751 = vld [vmem:[%s0 + $0xc] sm:$0xf]
    %753 = vst [vmem:[#allocation1] ss:$2 sm:$0xff] %v751
    %v754 = vld.sshfl [vmem:[#allocation1] sm:$0xff pattern:$0x75316420]
    %755 = vrot.lane.b32.xlu0 %v754, 96
    %v756 = vpop.permute.xlu0 %755
    %758 = vst.msk [vmem:[#allocation3 + $0x60] sm:$0xf] %vm545, %v756
    %v759 = vld [vmem:[%s0 + $0xc] sm:$0xf]
    %761 = vst [vmem:[#allocation1] ss:$2 sm:$0xff] %v759
    %v762 = vld.sshfl [vmem:[#allocation1] sm:$0xff pattern:$0x75316420]
    %763 = vrot.lane.b32.xlu0 %v762, 80
    %v764 = vpop.permute.xlu0 %763
    %766 = vst.msk [vmem:[#allocation3 + $0x64] sm:$0xf] %vm545, %v764
    %v767 = vld [vmem:[%s0 + $0xc] sm:$0xf]
    %769 = vst [vmem:[#allocation1] ss:$2 sm:$0xff] %v767
    %v770 = vld.sshfl [vmem:[#allocation1] sm:$0xff pattern:$0x75316420]
    %771 = vrot.lane.b32.xlu0 %v770, 64
    %v772 = vpop.permute.xlu0 %771
    %774 = vst.msk [vmem:[#allocation3 + $0x68] sm:$0xf] %vm545, %v772
    %v775 = vld [vmem:[%s0 + $0xc] sm:$0xff]
    %777 = vst [vmem:[#allocation1] ss:$2 sm:$0xff] %v775
    %v778 = vld.sshfl [vmem:[#allocation1] sm:$0xff pattern:$0x75316420]
    %v779 = vld.sshfl [vmem:[#allocation1 + $0x8] sm:$0xff pattern:$0x75316420]
    %780 = vrot.lane.b32.xlu0 %v778, 48
    %v781 = vpop.permute.xlu0 %780
    %782 = vrot.lane.b32.xlu0 %v779, 48
    %v783 = vpop.permute.xlu0 %782
    %v784 = vsel %vm572, %v781, %v783
    %786 = vst.msk [vmem:[#allocation3 + $0x6c] sm:$0xf] %vm545, %v784
    %v787 = vld [vmem:[%s0 + $0xc] sm:$0xff]
    %789 = vst [vmem:[#allocation1] ss:$2 sm:$0xff] %v787
    %v790 = vld.sshfl [vmem:[#allocation1] sm:$0xff pattern:$0x75316420]
    %v791 = vld.sshfl [vmem:[#allocation1 + $0x8] sm:$0xff pattern:$0x75316420]
    %792 = vrot.lane.b32.xlu0 %v790, 32
    %v793 = vpop.permute.xlu0 %792
    %794 = vrot.lane.b32.xlu0 %v791, 32
    %v795 = vpop.permute.xlu0 %794
    %v796 = vsel %vm72, %v793, %v795
    %798 = vst.msk [vmem:[#allocation3 + $0x70] sm:$0xf] %vm545, %v796
    %v799 = vld [vmem:[%s0 + $0xc] sm:$0xff]
    %801 = vst [vmem:[#allocation1] ss:$2 sm:$0xff] %v799
    %v802 = vld.sshfl [vmem:[#allocation1] sm:$0xff pattern:$0x75316420]
    %v803 = vld.sshfl [vmem:[#allocation1 + $0x8] sm:$0xff pattern:$0x75316420]
    %804 = vrot.lane.b32.xlu0 %v802, 16
    %v805 = vpop.permute.xlu0 %804
    %806 = vrot.lane.b32.xlu0 %v803, 16
    %v807 = vpop.permute.xlu0 %806
    %v808 = vsel %vm597, %v805, %v807
    %810 = vst.msk [vmem:[#allocation3 + $0x74] sm:$0xf] %vm545, %v808
    %v811 = vld [vmem:[%s0 + $0x10] sm:$0xf]
    %812 = vst.msk [vmem:[#allocation3 + $0x78] sm:$0xf] %vm545, %v811
    %v813 = vld [vmem:[%s0 + $0x10] sm:$0xf]
    %815 = vst [vmem:[#allocation1] ss:$2 sm:$0xff] %v813
    %v816 = vld.sshfl [vmem:[#allocation1] sm:$0xff pattern:$0x75316420]
    %817 = vrot.lane.b32.xlu0 %v816, 112
    %v818 = vpop.permute.xlu0 %817
    %820 = vst.msk [vmem:[#allocation3 + $0x7c] sm:$0xf] %vm545, %v818
    %v821 = vld [vmem:[%s0 + $0x10] sm:$0xf]
    %823 = vst [vmem:[#allocation1] ss:$2 sm:$0xff] %v821
    %v824 = vld.sshfl [vmem:[#allocation1] sm:$0xff pattern:$0x75316420]
    %825 = vrot.lane.b32.xlu0 %v824, 96
    %v826 = vpop.permute.xlu0 %825
    %828 = vst.msk [vmem:[#allocation3 + $0x80] sm:$0xf] %vm545, %v826
    %v829 = vld [vmem:[#allocation3] sm:$0xff]
    %v830 = vld [vmem:[#allocation3 + $0x8] sm:$0xff]
    %v831 = vld [vmem:[#allocation3 + $0x10] sm:$0xff]
    %v832 = vld [vmem:[#allocation3 + $0x18] sm:$0xff]
    %v833 = vld [vmem:[#allocation3 + $0x20] sm:$0xff]
    %v834 = vld [vmem:[#allocation3 + $0x28] sm:$0xff]
    %v835 = vld [vmem:[#allocation3 + $0x30] sm:$0xff]
    %v836 = vld [vmem:[#allocation3 + $0x38] sm:$0xff]
    %v837 = vld [vmem:[#allocation3 + $0x40] sm:$0xff]
    %v838 = vld [vmem:[#allocation3 + $0x48] sm:$0xff]
    %v839 = vld [vmem:[#allocation3 + $0x50] sm:$0xff]
    %v840 = vld [vmem:[#allocation3 + $0x58] sm:$0xff]
    %v841 = vld [vmem:[#allocation3 + $0x60] sm:$0xff]
    %v842 = vld [vmem:[#allocation3 + $0x68] sm:$0xff]
    %v843 = vld [vmem:[#allocation3 + $0x70] sm:$0xff]
    %v844 = vld [vmem:[#allocation3 + $0x78] sm:$0xff]
    %v845 = vld [vmem:[#allocation3 + $0x80] sm:$0xf]
    %v846 = vpack.c.bf16 %v830, %v829
    %v847 = vpack.c.bf16 %v832, %v831
    %v848 = vpack.c.bf16 %v834, %v833
    %v849 = vpack.c.bf16 %v836, %v835
    %v850 = vpack.c.bf16 %v838, %v837
    %v851 = vpack.c.bf16 %v840, %v839
    %v852 = vpack.c.bf16 %v842, %v841
    %v853 = vpack.c.bf16 %v844, %v843
    %v854 = vpack.c.bf16 %v845, %v845
    %v855 = vld [vmem:[%s3] sm:$0xff]
    %v856 = vld [vmem:[%s3 + $0x8] sm:$0xff]
    %v857 = vld [vmem:[%s3 + $0x10] sm:$0xff]
    %v858 = vld [vmem:[%s3 + $0x18] sm:$0xff]
    %v859 = vld [vmem:[%s3 + $0x20] sm:$0xff]
    %v860 = vld [vmem:[%s3 + $0x28] sm:$0xff]
    %v861 = vld [vmem:[%s3 + $0x30] sm:$0xff]
    %v862 = vld [vmem:[%s3 + $0x38] sm:$0xff]
    %v871 = vunpack.c.l.b16 %v855
    %v872 = vunpack.c.h.b16 %v855
    %v873 = vunpack.c.l.b16 %v856
    %v874 = vunpack.c.h.b16 %v856
    %v875 = vunpack.c.l.b16 %v857
    %v876 = vunpack.c.h.b16 %v857
    %v877 = vunpack.c.l.b16 %v858
    %v878 = vunpack.c.h.b16 %v858
    %v879 = vunpack.c.l.b16 %v859
    %v880 = vunpack.c.h.b16 %v859
    %v881 = vunpack.c.l.b16 %v860
    %v882 = vunpack.c.h.b16 %v860
    %v883 = vunpack.c.l.b16 %v861
    %v884 = vunpack.c.h.b16 %v861
    %v885 = vunpack.c.l.b16 %v862
    %v886 = vunpack.c.h.b16 %v862
    %v887 = vpack.c.b16 %v873, %v871
    %v888 = vpack.c.b16 %v874, %v872
    %v889 = vpack.c.b16 %v877, %v875
    %v890 = vpack.c.b16 %v878, %v876
    %v891 = vpack.c.b16 %v881, %v879
    %v892 = vpack.c.b16 %v882, %v880
    %v893 = vpack.c.b16 %v885, %v883
    %v894 = vpack.c.b16 %v886, %v884
    %v904 = vsel %vm59, %v846, 0
    %v907 = vsel %vm59, %v847, 0
    %v910 = vsel %vm59, %v848, 0
    %v913 = vsel %vm59, %v849, 0
    %v916 = vsel %vm59, %v850, 0
    %v919 = vsel %vm59, %v851, 0
    %v922 = vsel %vm59, %v852, 0
    %v925 = vsel %vm59, %v853, 0
    %v928 = vsel %vm59, %v854, 0
    %930 = vmatpush.bf16.msra.mxu0 0
    %931 = vmatpush.bf16.msra.mxu0 0
    %932 = vmatpush.bf16.msra.mxu0 0
    %933 = vmatpush.bf16.msra.mxu0 0
    %934 = vmatpush.bf16.msra.mxu0 %v893
    %935 = vmatpush.bf16.msra.mxu0 %v891
    %936 = vmatpush.bf16.msra.mxu0 %v889
    %937 = vmatpush.bf16.msra.mxu0 %v887
    %938 = vmatmul.bf16.gmra.mxu0 %v904
    %v939 = vpop.f32.mrf.mxu0
    %v940 = vadd.f32 0.0, %v939
    %v941 = vpop.f32.mrf.mxu0
    %v942 = vadd.f32 0.0, %v941
    %943 = vmatmul.bf16.gmra.mxu0 %v907
    %v944 = vpop.f32.mrf.mxu0
    %v945 = vadd.f32 0.0, %v944
    %v946 = vpop.f32.mrf.mxu0
    %v947 = vadd.f32 0.0, %v946
    %948 = vmatmul.bf16.gmra.mxu0 %v910
    %v949 = vpop.f32.mrf.mxu0
    %v950 = vadd.f32 0.0, %v949
    %v951 = vpop.f32.mrf.mxu0
    %v952 = vadd.f32 0.0, %v951
    %953 = vmatmul.bf16.gmra.mxu0 %v913
    %v954 = vpop.f32.mrf.mxu0
    %v955 = vadd.f32 0.0, %v954
    %v956 = vpop.f32.mrf.mxu0
    %v957 = vadd.f32 0.0, %v956
    %958 = vmatmul.bf16.gmra.mxu0 %v916
    %v959 = vpop.f32.mrf.mxu0
    %v960 = vadd.f32 0.0, %v959
    %v961 = vpop.f32.mrf.mxu0
    %v962 = vadd.f32 0.0, %v961
    %963 = vmatmul.bf16.gmra.mxu0 %v919
    %v964 = vpop.f32.mrf.mxu0
    %v965 = vadd.f32 0.0, %v964
    %v966 = vpop.f32.mrf.mxu0
    %v967 = vadd.f32 0.0, %v966
    %968 = vmatmul.bf16.gmra.mxu0 %v922
    %v969 = vpop.f32.mrf.mxu0
    %v970 = vadd.f32 0.0, %v969
    %v971 = vpop.f32.mrf.mxu0
    %v972 = vadd.f32 0.0, %v971
    %973 = vmatmul.bf16.gmra.mxu0 %v925
    %v974 = vpop.f32.mrf.mxu0
    %v975 = vadd.f32 0.0, %v974
    %v976 = vpop.f32.mrf.mxu0
    %v977 = vadd.f32 0.0, %v976
    %978 = vmatmul.bf16.gmra.mxu0 %v928
    %v979 = vpop.f32.mrf.mxu0
    %v980 = vadd.f32 0.0, %v979
    %v981 = vpop.f32.mrf.mxu0
    %982 = vdwg.mxu0
    %983 = vmatpush.bf16.msra.mxu0 0
    %984 = vmatpush.bf16.msra.mxu0 0
    %985 = vmatpush.bf16.msra.mxu0 0
    %986 = vmatpush.bf16.msra.mxu0 0
    %987 = vmatpush.bf16.msra.mxu0 %v894
    %988 = vmatpush.bf16.msra.mxu0 %v892
    %989 = vmatpush.bf16.msra.mxu0 %v890
    %990 = vmatpush.bf16.msra.mxu0 %v888
    %991 = vmatmul.bf16.gmra.mxu0 %v904
    %v992 = vpop.f32.mrf.mxu0
    %v993 = vadd.f32 0.0, %v992
    %v994 = vpop.f32.mrf.mxu0
    %v995 = vadd.f32 0.0, %v994
    %996 = vmatmul.bf16.gmra.mxu0 %v907
    %v997 = vpop.f32.mrf.mxu0
    %v998 = vadd.f32 0.0, %v997
    %v999 = vpop.f32.mrf.mxu0
    %v1000 = vadd.f32 0.0, %v999
    %1001 = vmatmul.bf16.gmra.mxu0 %v910
    %v1002 = vpop.f32.mrf.mxu0
    %v1003 = vadd.f32 0.0, %v1002
    %v1004 = vpop.f32.mrf.mxu0
    %v1005 = vadd.f32 0.0, %v1004
    %1006 = vmatmul.bf16.gmra.mxu0 %v913
    %v1007 = vpop.f32.mrf.mxu0
    %v1008 = vadd.f32 0.0, %v1007
    %v1009 = vpop.f32.mrf.mxu0
    %v1010 = vadd.f32 0.0, %v1009
    %1011 = vmatmul.bf16.gmra.mxu0 %v916
    %v1012 = vpop.f32.mrf.mxu0
    %v1013 = vadd.f32 0.0, %v1012
    %v1014 = vpop.f32.mrf.mxu0
    %v1015 = vadd.f32 0.0, %v1014
    %1016 = vmatmul.bf16.gmra.mxu0 %v919
    %v1017 = vpop.f32.mrf.mxu0
    %v1018 = vadd.f32 0.0, %v1017
    %v1019 = vpop.f32.mrf.mxu0
    %v1020 = vadd.f32 0.0, %v1019
    %1021 = vmatmul.bf16.gmra.mxu0 %v922
    %v1022 = vpop.f32.mrf.mxu0
    %v1023 = vadd.f32 0.0, %v1022
    %v1024 = vpop.f32.mrf.mxu0
    %v1025 = vadd.f32 0.0, %v1024
    %1026 = vmatmul.bf16.gmra.mxu0 %v925
    %v1027 = vpop.f32.mrf.mxu0
    %v1028 = vadd.f32 0.0, %v1027
    %v1029 = vpop.f32.mrf.mxu0
    %v1030 = vadd.f32 0.0, %v1029
    %1031 = vmatmul.bf16.gmra.mxu0 %v928
    %v1032 = vpop.f32.mrf.mxu0
    %v1033 = vadd.f32 0.0, %v1032
    %v1034 = vpop.f32.mrf.mxu0
    %1035 = vdwg.mxu0
    %v1036 = vmul.f32 %v940, %v940
    %v1037 = vmul.f32 %v942, %v942
    %v1038 = vmul.f32 %v945, %v945
    %v1039 = vmul.f32 %v947, %v947
    %v1040 = vmul.f32 %v950, %v950
    %v1041 = vmul.f32 %v952, %v952
    %v1042 = vmul.f32 %v955, %v955
    %v1043 = vmul.f32 %v957, %v957
    %v1044 = vmul.f32 %v960, %v960
    %v1045 = vmul.f32 %v962, %v962
    %v1046 = vmul.f32 %v965, %v965
    %v1047 = vmul.f32 %v967, %v967
    %v1048 = vmul.f32 %v970, %v970
    %v1049 = vmul.f32 %v972, %v972
    %v1050 = vmul.f32 %v975, %v975
    %v1051 = vmul.f32 %v977, %v977
    %v1052 = vmul.f32 %v980, %v980
    %v1053 = vmul.f32 %v993, %v993
    %v1054 = vmul.f32 %v995, %v995
    %v1055 = vmul.f32 %v998, %v998
    %v1056 = vmul.f32 %v1000, %v1000
    %v1057 = vmul.f32 %v1003, %v1003
    %v1058 = vmul.f32 %v1005, %v1005
    %v1059 = vmul.f32 %v1008, %v1008
    %v1060 = vmul.f32 %v1010, %v1010
    %v1061 = vmul.f32 %v1013, %v1013
    %v1062 = vmul.f32 %v1015, %v1015
    %v1063 = vmul.f32 %v1018, %v1018
    %v1064 = vmul.f32 %v1020, %v1020
    %v1065 = vmul.f32 %v1023, %v1023
    %v1066 = vmul.f32 %v1025, %v1025
    %v1067 = vmul.f32 %v1028, %v1028
    %v1068 = vmul.f32 %v1030, %v1030
    %v1069 = vmul.f32 %v1033, %v1033
    %v1070 = vadd.f32 %v1036, %v1053
    %v1071 = vadd.f32 %v1037, %v1054
    %v1072 = vadd.f32 %v1038, %v1055
    %v1073 = vadd.f32 %v1039, %v1056
    %v1074 = vadd.f32 %v1040, %v1057
    %v1075 = vadd.f32 %v1041, %v1058
    %v1076 = vadd.f32 %v1042, %v1059
    %v1077 = vadd.f32 %v1043, %v1060
    %v1078 = vadd.f32 %v1044, %v1061
    %v1079 = vadd.f32 %v1045, %v1062
    %v1080 = vadd.f32 %v1046, %v1063
    %v1081 = vadd.f32 %v1047, %v1064
    %v1082 = vadd.f32 %v1048, %v1065
    %v1083 = vadd.f32 %v1049, %v1066
    %v1084 = vadd.f32 %v1050, %v1067
    %v1085 = vadd.f32 %v1051, %v1068
    %v1086 = vadd.f32 %v1052, %v1069
    %v1087 = vadd.f32 %v1070, 1e-12
    %v1088 = vadd.f32 %v1071, 1e-12
    %v1089 = vadd.f32 %v1072, 1e-12
    %v1090 = vadd.f32 %v1073, 1e-12
    %v1091 = vadd.f32 %v1074, 1e-12
    %v1092 = vadd.f32 %v1075, 1e-12
    %v1093 = vadd.f32 %v1076, 1e-12
    %v1094 = vadd.f32 %v1077, 1e-12
    %v1095 = vadd.f32 %v1078, 1e-12
    %v1096 = vadd.f32 %v1079, 1e-12
    %v1097 = vadd.f32 %v1080, 1e-12
    %v1098 = vadd.f32 %v1081, 1e-12
    %v1099 = vadd.f32 %v1082, 1e-12
    %v1100 = vadd.f32 %v1083, 1e-12
    %v1101 = vadd.f32 %v1084, 1e-12
    %v1102 = vadd.f32 %v1085, 1e-12
    %v1103 = vadd.f32 %v1086, 1e-12
    %v1104 = vrsqrt.pop %v1087
    %v1105 = vmul.f32 %v1104, %v1087
    %v1106 = vmul.f32 %v1105, %v1104
    %v1107 = vmul.f32 0.5, %v1106
    %v1108 = vsub.f32 1.5, %v1107
    %v1109 = vmul.f32 %v1104, %v1108
    %v1110 = vmul.f32 %v1087, %v1109
    %vm1111 = vcmp.eq.f32.partialorder %v1087, inf
    %v1112 = vsel %vm1111, %v1087, %v1110
    %vm1113 = vcmp.eq.f32.partialorder %v1087, 0.0
    %v1114 = vand.u32 %v1087, 2147483648
    %v1115 = vsel %vm1113, %v1114, %v1112
    %v1116 = vrsqrt.pop %v1088
    %v1117 = vmul.f32 %v1116, %v1088
    %v1118 = vmul.f32 %v1117, %v1116
    %v1119 = vmul.f32 0.5, %v1118
    %v1120 = vsub.f32 1.5, %v1119
    %v1121 = vmul.f32 %v1116, %v1120
    %v1122 = vmul.f32 %v1088, %v1121
    %vm1123 = vcmp.eq.f32.partialorder %v1088, inf
    %v1124 = vsel %vm1123, %v1088, %v1122
    %vm1125 = vcmp.eq.f32.partialorder %v1088, 0.0
    %v1126 = vand.u32 %v1088, 2147483648
    %v1127 = vsel %vm1125, %v1126, %v1124
    %v1128 = vrsqrt.pop %v1089
    %v1129 = vmul.f32 %v1128, %v1089
    %v1130 = vmul.f32 %v1129, %v1128
    %v1131 = vmul.f32 0.5, %v1130
    %v1132 = vsub.f32 1.5, %v1131
    %v1133 = vmul.f32 %v1128, %v1132
    %v1134 = vmul.f32 %v1089, %v1133
    %vm1135 = vcmp.eq.f32.partialorder %v1089, inf
    %v1136 = vsel %vm1135, %v1089, %v1134
    %vm1137 = vcmp.eq.f32.partialorder %v1089, 0.0
    %v1138 = vand.u32 %v1089, 2147483648
    %v1139 = vsel %vm1137, %v1138, %v1136
    %v1140 = vrsqrt.pop %v1090
    %v1141 = vmul.f32 %v1140, %v1090
    %v1142 = vmul.f32 %v1141, %v1140
    %v1143 = vmul.f32 0.5, %v1142
    %v1144 = vsub.f32 1.5, %v1143
    %v1145 = vmul.f32 %v1140, %v1144
    %v1146 = vmul.f32 %v1090, %v1145
    %vm1147 = vcmp.eq.f32.partialorder %v1090, inf
    %v1148 = vsel %vm1147, %v1090, %v1146
    %vm1149 = vcmp.eq.f32.partialorder %v1090, 0.0
    %v1150 = vand.u32 %v1090, 2147483648
    %v1151 = vsel %vm1149, %v1150, %v1148
    %v1152 = vrsqrt.pop %v1091
    %v1153 = vmul.f32 %v1152, %v1091
    %v1154 = vmul.f32 %v1153, %v1152
    %v1155 = vmul.f32 0.5, %v1154
    %v1156 = vsub.f32 1.5, %v1155
    %v1157 = vmul.f32 %v1152, %v1156
    %v1158 = vmul.f32 %v1091, %v1157
    %vm1159 = vcmp.eq.f32.partialorder %v1091, inf
    %v1160 = vsel %vm1159, %v1091, %v1158
    %vm1161 = vcmp.eq.f32.partialorder %v1091, 0.0
    %v1162 = vand.u32 %v1091, 2147483648
    %v1163 = vsel %vm1161, %v1162, %v1160
    %v1164 = vrsqrt.pop %v1092
    %v1165 = vmul.f32 %v1164, %v1092
    %v1166 = vmul.f32 %v1165, %v1164
    %v1167 = vmul.f32 0.5, %v1166
    %v1168 = vsub.f32 1.5, %v1167
    %v1169 = vmul.f32 %v1164, %v1168
    %v1170 = vmul.f32 %v1092, %v1169
    %vm1171 = vcmp.eq.f32.partialorder %v1092, inf
    %v1172 = vsel %vm1171, %v1092, %v1170
    %vm1173 = vcmp.eq.f32.partialorder %v1092, 0.0
    %v1174 = vand.u32 %v1092, 2147483648
    %v1175 = vsel %vm1173, %v1174, %v1172
    %v1176 = vrsqrt.pop %v1093
    %v1177 = vmul.f32 %v1176, %v1093
    %v1178 = vmul.f32 %v1177, %v1176
    %v1179 = vmul.f32 0.5, %v1178
    %v1180 = vsub.f32 1.5, %v1179
    %v1181 = vmul.f32 %v1176, %v1180
    %v1182 = vmul.f32 %v1093, %v1181
    %vm1183 = vcmp.eq.f32.partialorder %v1093, inf
    %v1184 = vsel %vm1183, %v1093, %v1182
    %vm1185 = vcmp.eq.f32.partialorder %v1093, 0.0
    %v1186 = vand.u32 %v1093, 2147483648
    %v1187 = vsel %vm1185, %v1186, %v1184
    %v1188 = vrsqrt.pop %v1094
    %v1189 = vmul.f32 %v1188, %v1094
    %v1190 = vmul.f32 %v1189, %v1188
    %v1191 = vmul.f32 0.5, %v1190
    %v1192 = vsub.f32 1.5, %v1191
    %v1193 = vmul.f32 %v1188, %v1192
    %v1194 = vmul.f32 %v1094, %v1193
    %vm1195 = vcmp.eq.f32.partialorder %v1094, inf
    %v1196 = vsel %vm1195, %v1094, %v1194
    %vm1197 = vcmp.eq.f32.partialorder %v1094, 0.0
    %v1198 = vand.u32 %v1094, 2147483648
    %v1199 = vsel %vm1197, %v1198, %v1196
    %v1200 = vrsqrt.pop %v1095
    %v1201 = vmul.f32 %v1200, %v1095
    %v1202 = vmul.f32 %v1201, %v1200
    %v1203 = vmul.f32 0.5, %v1202
    %v1204 = vsub.f32 1.5, %v1203
    %v1205 = vmul.f32 %v1200, %v1204
    %v1206 = vmul.f32 %v1095, %v1205
    %vm1207 = vcmp.eq.f32.partialorder %v1095, inf
    %v1208 = vsel %vm1207, %v1095, %v1206
    %vm1209 = vcmp.eq.f32.partialorder %v1095, 0.0
    %v1210 = vand.u32 %v1095, 2147483648
    %v1211 = vsel %vm1209, %v1210, %v1208
    %v1212 = vrsqrt.pop %v1096
    %v1213 = vmul.f32 %v1212, %v1096
    %v1214 = vmul.f32 %v1213, %v1212
    %v1215 = vmul.f32 0.5, %v1214
    %v1216 = vsub.f32 1.5, %v1215
    %v1217 = vmul.f32 %v1212, %v1216
    %v1218 = vmul.f32 %v1096, %v1217
    %vm1219 = vcmp.eq.f32.partialorder %v1096, inf
    %v1220 = vsel %vm1219, %v1096, %v1218
    %vm1221 = vcmp.eq.f32.partialorder %v1096, 0.0
    %v1222 = vand.u32 %v1096, 2147483648
    %v1223 = vsel %vm1221, %v1222, %v1220
    %v1224 = vrsqrt.pop %v1097
    %v1225 = vmul.f32 %v1224, %v1097
    %v1226 = vmul.f32 %v1225, %v1224
    %v1227 = vmul.f32 0.5, %v1226
    %v1228 = vsub.f32 1.5, %v1227
    %v1229 = vmul.f32 %v1224, %v1228
    %v1230 = vmul.f32 %v1097, %v1229
    %vm1231 = vcmp.eq.f32.partialorder %v1097, inf
    %v1232 = vsel %vm1231, %v1097, %v1230
    %vm1233 = vcmp.eq.f32.partialorder %v1097, 0.0
    %v1234 = vand.u32 %v1097, 2147483648
    %v1235 = vsel %vm1233, %v1234, %v1232
    %v1236 = vrsqrt.pop %v1098
    %v1237 = vmul.f32 %v1236, %v1098
    %v1238 = vmul.f32 %v1237, %v1236
    %v1239 = vmul.f32 0.5, %v1238
    %v1240 = vsub.f32 1.5, %v1239
    %v1241 = vmul.f32 %v1236, %v1240
    %v1242 = vmul.f32 %v1098, %v1241
    %vm1243 = vcmp.eq.f32.partialorder %v1098, inf
    %v1244 = vsel %vm1243, %v1098, %v1242
    %vm1245 = vcmp.eq.f32.partialorder %v1098, 0.0
    %v1246 = vand.u32 %v1098, 2147483648
    %v1247 = vsel %vm1245, %v1246, %v1244
    %v1248 = vrsqrt.pop %v1099
    %v1249 = vmul.f32 %v1248, %v1099
    %v1250 = vmul.f32 %v1249, %v1248
    %v1251 = vmul.f32 0.5, %v1250
    %v1252 = vsub.f32 1.5, %v1251
    %v1253 = vmul.f32 %v1248, %v1252
    %v1254 = vmul.f32 %v1099, %v1253
    %vm1255 = vcmp.eq.f32.partialorder %v1099, inf
    %v1256 = vsel %vm1255, %v1099, %v1254
    %vm1257 = vcmp.eq.f32.partialorder %v1099, 0.0
    %v1258 = vand.u32 %v1099, 2147483648
    %v1259 = vsel %vm1257, %v1258, %v1256
    %v1260 = vrsqrt.pop %v1100
    %v1261 = vmul.f32 %v1260, %v1100
    %v1262 = vmul.f32 %v1261, %v1260
    %v1263 = vmul.f32 0.5, %v1262
    %v1264 = vsub.f32 1.5, %v1263
    %v1265 = vmul.f32 %v1260, %v1264
    %v1266 = vmul.f32 %v1100, %v1265
    %vm1267 = vcmp.eq.f32.partialorder %v1100, inf
    %v1268 = vsel %vm1267, %v1100, %v1266
    %vm1269 = vcmp.eq.f32.partialorder %v1100, 0.0
    %v1270 = vand.u32 %v1100, 2147483648
    %v1271 = vsel %vm1269, %v1270, %v1268
    %v1272 = vrsqrt.pop %v1101
    %v1273 = vmul.f32 %v1272, %v1101
    %v1274 = vmul.f32 %v1273, %v1272
    %v1275 = vmul.f32 0.5, %v1274
    %v1276 = vsub.f32 1.5, %v1275
    %v1277 = vmul.f32 %v1272, %v1276
    %v1278 = vmul.f32 %v1101, %v1277
    %vm1279 = vcmp.eq.f32.partialorder %v1101, inf
    %v1280 = vsel %vm1279, %v1101, %v1278
    %vm1281 = vcmp.eq.f32.partialorder %v1101, 0.0
    %v1282 = vand.u32 %v1101, 2147483648
    %v1283 = vsel %vm1281, %v1282, %v1280
    %v1284 = vrsqrt.pop %v1102
    %v1285 = vmul.f32 %v1284, %v1102
    %v1286 = vmul.f32 %v1285, %v1284
    %v1287 = vmul.f32 0.5, %v1286
    %v1288 = vsub.f32 1.5, %v1287
    %v1289 = vmul.f32 %v1284, %v1288
    %v1290 = vmul.f32 %v1102, %v1289
    %vm1291 = vcmp.eq.f32.partialorder %v1102, inf
    %v1292 = vsel %vm1291, %v1102, %v1290
    %vm1293 = vcmp.eq.f32.partialorder %v1102, 0.0
    %v1294 = vand.u32 %v1102, 2147483648
    %v1295 = vsel %vm1293, %v1294, %v1292
    %v1296 = vrsqrt.pop %v1103
    %v1297 = vmul.f32 %v1296, %v1103
    %v1298 = vmul.f32 %v1297, %v1296
    %v1299 = vmul.f32 0.5, %v1298
    %v1300 = vsub.f32 1.5, %v1299
    %v1301 = vmul.f32 %v1296, %v1300
    %v1302 = vmul.f32 %v1103, %v1301
    %vm1303 = vcmp.eq.f32.partialorder %v1103, inf
    %v1304 = vsel %vm1303, %v1103, %v1302
    %vm1305 = vcmp.eq.f32.partialorder %v1103, 0.0
    %v1306 = vand.u32 %v1103, 2147483648
    %v1307 = vsel %vm1305, %v1306, %v1304
    %1308 = vst [vmem:[#allocation6] sm:$0xff] %v1115
    %1309 = vst [vmem:[#allocation6 + $0x8] sm:$0xff] %v1127
    %1310 = vst [vmem:[#allocation6 + $0x10] sm:$0xff] %v1139
    %1311 = vst [vmem:[#allocation6 + $0x18] sm:$0xff] %v1151
    %1312 = vst [vmem:[#allocation6 + $0x20] sm:$0xff] %v1163
    %1313 = vst [vmem:[#allocation6 + $0x28] sm:$0xff] %v1175
    %1314 = vst [vmem:[#allocation6 + $0x30] sm:$0xff] %v1187
    %1315 = vst [vmem:[#allocation6 + $0x38] sm:$0xff] %v1199
    %1316 = vst [vmem:[#allocation6 + $0x40] sm:$0xff] %v1211
    %1317 = vst [vmem:[#allocation6 + $0x48] sm:$0xff] %v1223
    %1318 = vst [vmem:[#allocation6 + $0x50] sm:$0xff] %v1235
    %1319 = vst [vmem:[#allocation6 + $0x58] sm:$0xff] %v1247
    %1320 = vst [vmem:[#allocation6 + $0x60] sm:$0xff] %v1259
    %1321 = vst [vmem:[#allocation6 + $0x68] sm:$0xff] %v1271
    %1322 = vst [vmem:[#allocation6 + $0x70] sm:$0xff] %v1283
    %1323 = vst [vmem:[#allocation6 + $0x78] sm:$0xff] %v1295
    %1324 = vst [vmem:[#allocation6 + $0x80] sm:$0xf] %v1307
    %v1325 = vpack.c.bf16 %v521, %v521
    %v1326 = vpack.c.bf16 %v522, %v522
    %v1327 = vpack.c.bf16 %v523, %v523
    %v1328 = vpack.c.bf16 %v524, %v524
    %v1329 = vpack.c.bf16 %v525, %v525
    %v1330 = vpack.c.bf16 %v526, %v526
    %v1331 = vpack.c.bf16 %v527, %v527
    %v1332 = vpack.c.bf16 %v528, %v528
    %v1333 = vpack.c.bf16 %v529, %v529
    %v1334 = vpack.c.bf16 %v530, %v530
    %v1335 = vpack.c.bf16 %v531, %v531
    %v1336 = vpack.c.bf16 %v532, %v532
    %v1337 = vpack.c.bf16 %v533, %v533
    %v1338 = vpack.c.bf16 %v534, %v534
    %v1339 = vpack.c.bf16 %v535, %v535
    %v1340 = vpack.c.bf16 %v536, %v536
    %v1341 = vpack.c.bf16 %v537, %v537
    %v1342 = vld [vmem:[%s4] sm:$0xf]
    %v1343 = vld [vmem:[%s4 + $0x4] sm:$0xf]
    %v1344 = vld [vmem:[%s4 + $0x8] sm:$0xf]
    %v1345 = vld [vmem:[%s4 + $0xc] sm:$0xf]
    %v1346 = vld [vmem:[%s4 + $0x10] sm:$0xf]
    %v1347 = vld [vmem:[%s4 + $0x14] sm:$0xf]
    %v1348 = vld [vmem:[%s4 + $0x18] sm:$0xf]
    %v1349 = vld [vmem:[%s4 + $0x1c] sm:$0xf]
    %v1350 = vld [vmem:[%s4 + $0x20] sm:$0xf]
    %v1351 = vld [vmem:[%s4 + $0x24] sm:$0xf]
    %v1352 = vld [vmem:[%s4 + $0x28] sm:$0xf]
    %v1353 = vld [vmem:[%s4 + $0x2c] sm:$0xf]
    %v1354 = vld [vmem:[%s4 + $0x30] sm:$0xf]
    %v1355 = vld [vmem:[%s4 + $0x34] sm:$0xf]
    %v1356 = vld [vmem:[%s4 + $0x38] sm:$0xf]
    %v1357 = vld [vmem:[%s4 + $0x3c] sm:$0xf]
    %v1358 = vld [vmem:[%s4 + $0x40] sm:$0xf]
    %v1359 = vld [vmem:[%s4 + $0x44] sm:$0xf]
    %v1360 = vld [vmem:[%s4 + $0x48] sm:$0xf]
    %v1361 = vld [vmem:[%s4 + $0x4c] sm:$0xf]
    %v1362 = vld [vmem:[%s4 + $0x50] sm:$0xf]
    %v1363 = vld [vmem:[%s4 + $0x54] sm:$0xf]
    %v1364 = vld [vmem:[%s4 + $0x58] sm:$0xf]
    %v1365 = vld [vmem:[%s4 + $0x5c] sm:$0xf]
    %v1366 = vld [vmem:[%s4 + $0x60] sm:$0xf]
    %v1367 = vld [vmem:[%s4 + $0x64] sm:$0xf]
    %v1368 = vld [vmem:[%s4 + $0x68] sm:$0xf]
    %v1369 = vld [vmem:[%s4 + $0x6c] sm:$0xf]
    %v1370 = vld [vmem:[%s4 + $0x70] sm:$0xf]
    %v1371 = vld [vmem:[%s4 + $0x74] sm:$0xf]
    %v1372 = vld [vmem:[%s4 + $0x78] sm:$0xf]
    %v1373 = vld [vmem:[%s4 + $0x7c] sm:$0xf]
    %v1374 = vld [vmem:[%s4 + $0x80] sm:$0xf]
    %v1375 = vld [vmem:[%s4 + $0x84] sm:$0xf]
    %v1376 = vld [vmem:[%s4 + $0x88] sm:$0xf]
    %v1377 = vld [vmem:[%s4 + $0x8c] sm:$0xf]
    %v1378 = vld [vmem:[%s4 + $0x90] sm:$0xf]
    %v1379 = vld [vmem:[%s4 + $0x94] sm:$0xf]
    %v1380 = vld [vmem:[%s4 + $0x98] sm:$0xf]
    %v1381 = vld [vmem:[%s4 + $0x9c] sm:$0xf]
    %v1382 = vld [vmem:[%s4 + $0xa0] sm:$0xf]
    %v1383 = vld [vmem:[%s4 + $0xa4] sm:$0xf]
    %v1384 = vld [vmem:[%s4 + $0xa8] sm:$0xf]
    %v1385 = vld [vmem:[%s4 + $0xac] sm:$0xf]
    %v1386 = vld [vmem:[%s4 + $0xb0] sm:$0xf]
    %v1387 = vld [vmem:[%s4 + $0xb4] sm:$0xf]
    %v1388 = vld [vmem:[%s4 + $0xb8] sm:$0xf]
    %v1389 = vld [vmem:[%s4 + $0xbc] sm:$0xf]
    %v1390 = vld [vmem:[%s4 + $0xc0] sm:$0xf]
    %v1391 = vld [vmem:[%s4 + $0xc4] sm:$0xf]
    %v1392 = vld [vmem:[%s4 + $0xc8] sm:$0xf]
    %v1393 = vld [vmem:[%s4 + $0xcc] sm:$0xf]
    %v1394 = vld [vmem:[%s4 + $0xd0] sm:$0xf]
    %v1395 = vld [vmem:[%s4 + $0xd4] sm:$0xf]
    %v1396 = vld [vmem:[%s4 + $0xd8] sm:$0xf]
    %v1397 = vld [vmem:[%s4 + $0xdc] sm:$0xf]
    %v1398 = vld [vmem:[%s4 + $0xe0] sm:$0xf]
    %v1399 = vld [vmem:[%s4 + $0xe4] sm:$0xf]
    %v1400 = vld [vmem:[%s4 + $0xe8] sm:$0xf]
    %v1401 = vld [vmem:[%s4 + $0xec] sm:$0xf]
    %v1402 = vld [vmem:[%s4 + $0xf0] sm:$0xf]
    %v1403 = vld [vmem:[%s4 + $0xf4] sm:$0xf]
    %v1404 = vld [vmem:[%s4 + $0xf8] sm:$0xf]
    %v1405 = vld [vmem:[%s4 + $0xfc] sm:$0xf]
    %v1406 = vld [vmem:[%s4 + $0x100] sm:$0xf]
    %v1407 = vld [vmem:[%s4 + $0x104] sm:$0xf]
    %v1408 = vld [vmem:[%s4 + $0x108] sm:$0xf]
    %v1409 = vld [vmem:[%s4 + $0x10c] sm:$0xf]
    %v1410 = vld [vmem:[%s4 + $0x110] sm:$0xf]
    %v1411 = vld [vmem:[%s4 + $0x114] sm:$0xf]
    %v1412 = vld [vmem:[%s4 + $0x118] sm:$0xf]
    %v1413 = vld [vmem:[%s4 + $0x11c] sm:$0xf]
    %v1414 = vld [vmem:[%s4 + $0x120] sm:$0xf]
    %v1415 = vld [vmem:[%s4 + $0x124] sm:$0xf]
    %v1416 = vld [vmem:[%s4 + $0x128] sm:$0xf]
    %v1417 = vld [vmem:[%s4 + $0x12c] sm:$0xf]
    %v1418 = vld [vmem:[%s4 + $0x130] sm:$0xf]
    %v1419 = vld [vmem:[%s4 + $0x134] sm:$0xf]
    %v1420 = vld [vmem:[%s4 + $0x138] sm:$0xf]
    %v1421 = vld [vmem:[%s4 + $0x13c] sm:$0xf]
    %v1422 = vld [vmem:[%s4 + $0x140] sm:$0xf]
    %v1423 = vld [vmem:[%s4 + $0x144] sm:$0xf]
    %v1424 = vld [vmem:[%s4 + $0x148] sm:$0xf]
    %v1425 = vld [vmem:[%s4 + $0x14c] sm:$0xf]
    %v1426 = vld [vmem:[%s4 + $0x150] sm:$0xf]
    %v1427 = vld [vmem:[%s4 + $0x154] sm:$0xf]
    %v1428 = vld [vmem:[%s4 + $0x158] sm:$0xf]
    %v1429 = vld [vmem:[%s4 + $0x15c] sm:$0xf]
    %v1430 = vld [vmem:[%s4 + $0x160] sm:$0xf]
    %v1431 = vld [vmem:[%s4 + $0x164] sm:$0xf]
    %v1432 = vld [vmem:[%s4 + $0x168] sm:$0xf]
    %v1433 = vld [vmem:[%s4 + $0x16c] sm:$0xf]
    %v1434 = vld [vmem:[%s4 + $0x170] sm:$0xf]
    %v1435 = vld [vmem:[%s4 + $0x174] sm:$0xf]
    %v1436 = vld [vmem:[%s4 + $0x178] sm:$0xf]
    %v1437 = vld [vmem:[%s4 + $0x17c] sm:$0xf]
    %v1438 = vld [vmem:[%s4 + $0x180] sm:$0xf]
    %v1439 = vld [vmem:[%s4 + $0x184] sm:$0xf]
    %v1440 = vld [vmem:[%s4 + $0x188] sm:$0xf]
    %v1441 = vld [vmem:[%s4 + $0x18c] sm:$0xf]
    %v1442 = vld [vmem:[%s4 + $0x190] sm:$0xf]
    %v1443 = vld [vmem:[%s4 + $0x194] sm:$0xf]
    %v1444 = vld [vmem:[%s4 + $0x198] sm:$0xf]
    %v1445 = vld [vmem:[%s4 + $0x19c] sm:$0xf]
    %v1446 = vld [vmem:[%s4 + $0x1a0] sm:$0xf]
    %v1447 = vld [vmem:[%s4 + $0x1a4] sm:$0xf]
    %v1448 = vld [vmem:[%s4 + $0x1a8] sm:$0xf]
    %v1449 = vld [vmem:[%s4 + $0x1ac] sm:$0xf]
    %v1450 = vld [vmem:[%s4 + $0x1b0] sm:$0xf]
    %v1451 = vld [vmem:[%s4 + $0x1b4] sm:$0xf]
    %v1452 = vld [vmem:[%s4 + $0x1b8] sm:$0xf]
    %v1453 = vld [vmem:[%s4 + $0x1bc] sm:$0xf]
    %v1454 = vld [vmem:[%s4 + $0x1c0] sm:$0xf]
    %v1455 = vld [vmem:[%s4 + $0x1c4] sm:$0xf]
    %v1456 = vld [vmem:[%s4 + $0x1c8] sm:$0xf]
    %v1457 = vld [vmem:[%s4 + $0x1cc] sm:$0xf]
    %v1458 = vld [vmem:[%s4 + $0x1d0] sm:$0xf]
    %v1459 = vld [vmem:[%s4 + $0x1d4] sm:$0xf]
    %v1460 = vld [vmem:[%s4 + $0x1d8] sm:$0xf]
    %v1461 = vld [vmem:[%s4 + $0x1dc] sm:$0xf]
    %v1462 = vld [vmem:[%s4 + $0x1e0] sm:$0xf]
    %v1463 = vld [vmem:[%s4 + $0x1e4] sm:$0xf]
    %v1464 = vld [vmem:[%s4 + $0x1e8] sm:$0xf]
    %v1465 = vld [vmem:[%s4 + $0x1ec] sm:$0xf]
    %v1466 = vld [vmem:[%s4 + $0x1f0] sm:$0xf]
    %v1467 = vld [vmem:[%s4 + $0x1f4] sm:$0xf]
    %v1468 = vld [vmem:[%s4 + $0x1f8] sm:$0xf]
    %v1469 = vld [vmem:[%s4 + $0x1fc] sm:$0xf]
    %v1470 = vld [vmem:[%s4 + $0x200] sm:$0xf]
    %v1471 = vld [vmem:[%s4 + $0x204] sm:$0xf]
    %v1472 = vld [vmem:[%s4 + $0x208] sm:$0xf]
    %v1473 = vld [vmem:[%s4 + $0x20c] sm:$0xf]
    %v1474 = vld [vmem:[%s4 + $0x210] sm:$0xf]
    %v1475 = vld [vmem:[%s4 + $0x214] sm:$0xf]
    %v1476 = vld [vmem:[%s4 + $0x218] sm:$0xf]
    %v1477 = vld [vmem:[%s4 + $0x21c] sm:$0xf]
    %v1478 = vld [vmem:[%s4 + $0x220] sm:$0xf]
    %v1479 = vld [vmem:[%s4 + $0x224] sm:$0xf]
    %v1480 = vld [vmem:[%s4 + $0x228] sm:$0xf]
    %v1481 = vld [vmem:[%s4 + $0x22c] sm:$0xf]
    %v1482 = vld [vmem:[%s4 + $0x230] sm:$0xf]
    %v1483 = vld [vmem:[%s4 + $0x234] sm:$0xf]
    %v1484 = vld [vmem:[%s4 + $0x238] sm:$0xf]
    %v1485 = vld [vmem:[%s4 + $0x23c] sm:$0xf]
    %v1486 = vld [vmem:[%s4 + $0x240] sm:$0xf]
    %v1487 = vld [vmem:[%s4 + $0x244] sm:$0xf]
    %v1488 = vld [vmem:[%s4 + $0x248] sm:$0xf]
    %v1489 = vld [vmem:[%s4 + $0x24c] sm:$0xf]
    %v1490 = vld [vmem:[%s4 + $0x250] sm:$0xf]
    %v1491 = vld [vmem:[%s4 + $0x254] sm:$0xf]
    %v1492 = vld [vmem:[%s4 + $0x258] sm:$0xf]
    %v1493 = vld [vmem:[%s4 + $0x25c] sm:$0xf]
    %v1494 = vld [vmem:[%s4 + $0x260] sm:$0xf]
    %v1495 = vld [vmem:[%s4 + $0x264] sm:$0xf]
    %v1496 = vld [vmem:[%s4 + $0x268] sm:$0xf]
    %v1497 = vld [vmem:[%s4 + $0x26c] sm:$0xf]
    %v1498 = vld [vmem:[%s4 + $0x270] sm:$0xf]
    %v1499 = vld [vmem:[%s4 + $0x274] sm:$0xf]
    %v1500 = vld [vmem:[%s4 + $0x278] sm:$0xf]
    %v1501 = vld [vmem:[%s4 + $0x27c] sm:$0xf]
    %v1502 = vld [vmem:[%s4 + $0x280] sm:$0xf]
    %v1503 = vld [vmem:[%s4 + $0x284] sm:$0xf]
    %v1504 = vld [vmem:[%s4 + $0x288] sm:$0xf]
    %v1505 = vld [vmem:[%s4 + $0x28c] sm:$0xf]
    %v1506 = vld [vmem:[%s4 + $0x290] sm:$0xf]
    %v1507 = vld [vmem:[%s4 + $0x294] sm:$0xf]
    %v1508 = vld [vmem:[%s4 + $0x298] sm:$0xf]
    %v1509 = vld [vmem:[%s4 + $0x29c] sm:$0xf]
    %v1510 = vld [vmem:[%s4 + $0x2a0] sm:$0xf]
    %v1511 = vld [vmem:[%s4 + $0x2a4] sm:$0xf]
    %v1512 = vld [vmem:[%s4 + $0x2a8] sm:$0xf]
    %v1513 = vld [vmem:[%s4 + $0x2ac] sm:$0xf]
    %v1514 = vld [vmem:[%s4 + $0x2b0] sm:$0xf]
    %v1515 = vld [vmem:[%s4 + $0x2b4] sm:$0xf]
    %v1516 = vld [vmem:[%s4 + $0x2b8] sm:$0xf]
    %v1517 = vld [vmem:[%s4 + $0x2bc] sm:$0xf]
    %v1518 = vld [vmem:[%s4 + $0x2c0] sm:$0xf]
    %v1519 = vld [vmem:[%s4 + $0x2c4] sm:$0xf]
    %v1520 = vld [vmem:[%s4 + $0x2c8] sm:$0xf]
    %v1521 = vld [vmem:[%s4 + $0x2cc] sm:$0xf]
    %v1522 = vld [vmem:[%s4 + $0x2d0] sm:$0xf]
    %v1523 = vld [vmem:[%s4 + $0x2d4] sm:$0xf]
    %v1524 = vld [vmem:[%s4 + $0x2d8] sm:$0xf]
    %v1525 = vld [vmem:[%s4 + $0x2dc] sm:$0xf]
    %v1526 = vld [vmem:[%s4 + $0x2e0] sm:$0xf]
    %v1527 = vld [vmem:[%s4 + $0x2e4] sm:$0xf]
    %v1528 = vld [vmem:[%s4 + $0x2e8] sm:$0xf]
    %v1529 = vld [vmem:[%s4 + $0x2ec] sm:$0xf]
    %v1530 = vld [vmem:[%s4 + $0x2f0] sm:$0xf]
    %v1531 = vld [vmem:[%s4 + $0x2f4] sm:$0xf]
    %v1532 = vld [vmem:[%s4 + $0x2f8] sm:$0xf]
    %v1533 = vld [vmem:[%s4 + $0x2fc] sm:$0xf]
    %v1534 = vld [vmem:[%s4 + $0x300] sm:$0xf]
    %v1535 = vld [vmem:[%s4 + $0x304] sm:$0xf]
    %v1536 = vld [vmem:[%s4 + $0x308] sm:$0xf]
    %v1537 = vld [vmem:[%s4 + $0x30c] sm:$0xf]
    %v1538 = vld [vmem:[%s4 + $0x310] sm:$0xf]
    %v1539 = vld [vmem:[%s4 + $0x314] sm:$0xf]
    %v1540 = vld [vmem:[%s4 + $0x318] sm:$0xf]
    %v1541 = vld [vmem:[%s4 + $0x31c] sm:$0xf]
    %v1542 = vld [vmem:[%s4 + $0x320] sm:$0xf]
    %v1543 = vld [vmem:[%s4 + $0x324] sm:$0xf]
    %v1544 = vld [vmem:[%s4 + $0x328] sm:$0xf]
    %v1545 = vld [vmem:[%s4 + $0x32c] sm:$0xf]
    %v1546 = vld [vmem:[%s4 + $0x330] sm:$0xf]
    %v1547 = vld [vmem:[%s4 + $0x334] sm:$0xf]
    %v1548 = vld [vmem:[%s4 + $0x338] sm:$0xf]
    %v1549 = vld [vmem:[%s4 + $0x33c] sm:$0xf]
    %v1550 = vld [vmem:[%s4 + $0x340] sm:$0xf]
    %v1551 = vld [vmem:[%s4 + $0x344] sm:$0xf]
    %v1552 = vld [vmem:[%s4 + $0x348] sm:$0xf]
    %v1553 = vld [vmem:[%s4 + $0x34c] sm:$0xf]
    %v1554 = vld [vmem:[%s4 + $0x350] sm:$0xf]
    %v1555 = vld [vmem:[%s4 + $0x354] sm:$0xf]
    %v1556 = vld [vmem:[%s4 + $0x358] sm:$0xf]
    %v1557 = vld [vmem:[%s4 + $0x35c] sm:$0xf]
    %v1558 = vld [vmem:[%s4 + $0x360] sm:$0xf]
    %v1559 = vld [vmem:[%s4 + $0x364] sm:$0xf]
    %v1560 = vld [vmem:[%s4 + $0x368] sm:$0xf]
    %v1561 = vld [vmem:[%s4 + $0x36c] sm:$0xf]
    %v1562 = vld [vmem:[%s4 + $0x370] sm:$0xf]
    %v1563 = vld [vmem:[%s4 + $0x374] sm:$0xf]
    %v1564 = vld [vmem:[%s4 + $0x378] sm:$0xf]
    %v1565 = vld [vmem:[%s4 + $0x37c] sm:$0xf]
    %v1566 = vld [vmem:[%s4 + $0x380] sm:$0xf]
    %v1567 = vld [vmem:[%s4 + $0x384] sm:$0xf]
    %v1568 = vld [vmem:[%s4 + $0x388] sm:$0xf]
    %v1569 = vld [vmem:[%s4 + $0x38c] sm:$0xf]
    %v1570 = vld [vmem:[%s4 + $0x390] sm:$0xf]
    %v1571 = vld [vmem:[%s4 + $0x394] sm:$0xf]
    %v1572 = vld [vmem:[%s4 + $0x398] sm:$0xf]
    %v1573 = vld [vmem:[%s4 + $0x39c] sm:$0xf]
    %v1574 = vld [vmem:[%s4 + $0x3a0] sm:$0xf]
    %v1575 = vld [vmem:[%s4 + $0x3a4] sm:$0xf]
    %v1576 = vld [vmem:[%s4 + $0x3a8] sm:$0xf]
    %v1577 = vld [vmem:[%s4 + $0x3ac] sm:$0xf]
    %v1578 = vld [vmem:[%s4 + $0x3b0] sm:$0xf]
    %v1579 = vld [vmem:[%s4 + $0x3b4] sm:$0xf]
    %v1580 = vld [vmem:[%s4 + $0x3b8] sm:$0xf]
    %v1581 = vld [vmem:[%s4 + $0x3bc] sm:$0xf]
    %v1582 = vld [vmem:[%s4 + $0x3c0] sm:$0xf]
    %v1583 = vld [vmem:[%s4 + $0x3c4] sm:$0xf]
    %v1584 = vld [vmem:[%s4 + $0x3c8] sm:$0xf]
    %v1585 = vld [vmem:[%s4 + $0x3cc] sm:$0xf]
    %v1586 = vld [vmem:[%s4 + $0x3d0] sm:$0xf]
    %v1587 = vld [vmem:[%s4 + $0x3d4] sm:$0xf]
    %v1588 = vld [vmem:[%s4 + $0x3d8] sm:$0xf]
    %v1589 = vld [vmem:[%s4 + $0x3dc] sm:$0xf]
    %v1590 = vld [vmem:[%s4 + $0x3e0] sm:$0xf]
    %v1591 = vld [vmem:[%s4 + $0x3e4] sm:$0xf]
    %v1592 = vld [vmem:[%s4 + $0x3e8] sm:$0xf]
    %v1593 = vld [vmem:[%s4 + $0x3ec] sm:$0xf]
    %v1594 = vld [vmem:[%s4 + $0x3f0] sm:$0xf]
    %v1595 = vld [vmem:[%s4 + $0x3f4] sm:$0xf]
    %v1596 = vld [vmem:[%s4 + $0x3f8] sm:$0xf]
    %v1597 = vld [vmem:[%s4 + $0x3fc] sm:$0xf]
    %v1598 = vld [vmem:[%s4 + $0x400] sm:$0xf]
    %v1599 = vld [vmem:[%s4 + $0x404] sm:$0xf]
    %v1600 = vld [vmem:[%s4 + $0x408] sm:$0xf]
    %v1601 = vld [vmem:[%s4 + $0x40c] sm:$0xf]
    %v1602 = vld [vmem:[%s4 + $0x410] sm:$0xf]
    %v1603 = vld [vmem:[%s4 + $0x414] sm:$0xf]
    %v1604 = vld [vmem:[%s4 + $0x418] sm:$0xf]
    %v1605 = vld [vmem:[%s4 + $0x41c] sm:$0xf]
    %v1606 = vld [vmem:[%s4 + $0x420] sm:$0xf]
    %v1607 = vld [vmem:[%s4 + $0x424] sm:$0xf]
    %v1608 = vld [vmem:[%s4 + $0x428] sm:$0xf]
    %v1609 = vld [vmem:[%s4 + $0x42c] sm:$0xf]
    %v1610 = vld [vmem:[%s4 + $0x430] sm:$0xf]
    %v1611 = vld [vmem:[%s4 + $0x434] sm:$0xf]
    %v1612 = vld [vmem:[%s4 + $0x438] sm:$0xf]
    %v1613 = vld [vmem:[%s4 + $0x43c] sm:$0xf]
    %v1614 = vld [vmem:[%s5] sm:$0x1]
    %v1616 = vperm.slane %v1614, 0
    %v1890 = vunpack.c.l.b16 %v1342
    %v1891 = vunpack.c.l.b16 %v1343
    %v1892 = vunpack.c.l.b16 %v1344
    %v1893 = vunpack.c.l.b16 %v1345
    %v1894 = vunpack.c.l.b16 %v1346
    %v1895 = vunpack.c.l.b16 %v1347
    %v1896 = vunpack.c.l.b16 %v1348
    %v1897 = vunpack.c.l.b16 %v1349
    %v1898 = vunpack.c.l.b16 %v1350
    %v1899 = vunpack.c.l.b16 %v1351
    %v1900 = vunpack.c.l.b16 %v1352
    %v1901 = vunpack.c.l.b16 %v1353
    %v1902 = vunpack.c.l.b16 %v1354
    %v1903 = vunpack.c.l.b16 %v1355
    %v1904 = vunpack.c.l.b16 %v1356
    %v1905 = vunpack.c.l.b16 %v1357
    %v1906 = vunpack.c.l.b16 %v1358
    %v1907 = vunpack.c.l.b16 %v1359
    %v1908 = vunpack.c.l.b16 %v1360
    %v1909 = vunpack.c.l.b16 %v1361
    %v1910 = vunpack.c.l.b16 %v1362
    %v1911 = vunpack.c.l.b16 %v1363
    %v1912 = vunpack.c.l.b16 %v1364
    %v1913 = vunpack.c.l.b16 %v1365
    %v1914 = vunpack.c.l.b16 %v1366
    %v1915 = vunpack.c.l.b16 %v1367
    %v1916 = vunpack.c.l.b16 %v1368
    %v1917 = vunpack.c.l.b16 %v1369
    %v1918 = vunpack.c.l.b16 %v1370
    %v1919 = vunpack.c.l.b16 %v1371
    %v1920 = vunpack.c.l.b16 %v1372
    %v1921 = vunpack.c.l.b16 %v1373
    %v1922 = vunpack.c.l.b16 %v1374
    %v1923 = vunpack.c.l.b16 %v1375
    %v1924 = vunpack.c.l.b16 %v1376
    %v1925 = vunpack.c.l.b16 %v1377
    %v1926 = vunpack.c.l.b16 %v1378
    %v1927 = vunpack.c.l.b16 %v1379
    %v1928 = vunpack.c.l.b16 %v1380
    %v1929 = vunpack.c.l.b16 %v1381
    %v1930 = vunpack.c.l.b16 %v1382
    %v1931 = vunpack.c.l.b16 %v1383
    %v1932 = vunpack.c.l.b16 %v1384
    %v1933 = vunpack.c.l.b16 %v1385
    %v1934 = vunpack.c.l.b16 %v1386
    %v1935 = vunpack.c.l.b16 %v1387
    %v1936 = vunpack.c.l.b16 %v1388
    %v1937 = vunpack.c.l.b16 %v1389
    %v1938 = vunpack.c.l.b16 %v1390
    %v1939 = vunpack.c.l.b16 %v1391
    %v1940 = vunpack.c.l.b16 %v1392
    %v1941 = vunpack.c.l.b16 %v1393
    %v1942 = vunpack.c.l.b16 %v1394
    %v1943 = vunpack.c.l.b16 %v1395
    %v1944 = vunpack.c.l.b16 %v1396
    %v1945 = vunpack.c.l.b16 %v1397
    %v1946 = vunpack.c.l.b16 %v1398
    %v1947 = vunpack.c.l.b16 %v1399
    %v1948 = vunpack.c.l.b16 %v1400
    %v1949 = vunpack.c.l.b16 %v1401
    %v1950 = vunpack.c.l.b16 %v1402
    %v1951 = vunpack.c.l.b16 %v1403
    %v1952 = vunpack.c.l.b16 %v1404
    %v1953 = vunpack.c.l.b16 %v1405
    %v1954 = vunpack.c.l.b16 %v1406
    %v1955 = vunpack.c.l.b16 %v1407
    %v1956 = vunpack.c.l.b16 %v1408
    %v1957 = vunpack.c.l.b16 %v1409
    %v1958 = vunpack.c.l.b16 %v1410
    %v1959 = vunpack.c.l.b16 %v1411
    %v1960 = vunpack.c.l.b16 %v1412
    %v1961 = vunpack.c.l.b16 %v1413
    %v1962 = vunpack.c.l.b16 %v1414
    %v1963 = vunpack.c.l.b16 %v1415
    %v1964 = vunpack.c.l.b16 %v1416
    %v1965 = vunpack.c.l.b16 %v1417
    %v1966 = vunpack.c.l.b16 %v1418
    %v1967 = vunpack.c.l.b16 %v1419
    %v1968 = vunpack.c.l.b16 %v1420
    %v1969 = vunpack.c.l.b16 %v1421
    %v1970 = vunpack.c.l.b16 %v1422
    %v1971 = vunpack.c.l.b16 %v1423
    %v1972 = vunpack.c.l.b16 %v1424
    %v1973 = vunpack.c.l.b16 %v1425
    %v1974 = vunpack.c.l.b16 %v1426
    %v1975 = vunpack.c.l.b16 %v1427
    %v1976 = vunpack.c.l.b16 %v1428
    %v1977 = vunpack.c.l.b16 %v1429
    %v1978 = vunpack.c.l.b16 %v1430
    %v1979 = vunpack.c.l.b16 %v1431
    %v1980 = vunpack.c.l.b16 %v1432
    %v1981 = vunpack.c.l.b16 %v1433
    %v1982 = vunpack.c.l.b16 %v1434
    %v1983 = vunpack.c.l.b16 %v1435
    %v1984 = vunpack.c.l.b16 %v1436
    %v1985 = vunpack.c.l.b16 %v1437
    %v1986 = vunpack.c.l.b16 %v1438
    %v1987 = vunpack.c.l.b16 %v1439
    %v1988 = vunpack.c.l.b16 %v1440
    %v1989 = vunpack.c.l.b16 %v1441
    %v1990 = vunpack.c.l.b16 %v1442
    %v1991 = vunpack.c.l.b16 %v1443
    %v1992 = vunpack.c.l.b16 %v1444
    %v1993 = vunpack.c.l.b16 %v1445
    %v1994 = vunpack.c.l.b16 %v1446
    %v1995 = vunpack.c.l.b16 %v1447
    %v1996 = vunpack.c.l.b16 %v1448
    %v1997 = vunpack.c.l.b16 %v1449
    %v1998 = vunpack.c.l.b16 %v1450
    %v1999 = vunpack.c.l.b16 %v1451
    %v2000 = vunpack.c.l.b16 %v1452
    %v2001 = vunpack.c.l.b16 %v1453
    %v2002 = vunpack.c.l.b16 %v1454
    %v2003 = vunpack.c.l.b16 %v1455
    %v2004 = vunpack.c.l.b16 %v1456
    %v2005 = vunpack.c.l.b16 %v1457
    %v2006 = vunpack.c.l.b16 %v1458
    %v2007 = vunpack.c.l.b16 %v1459
    %v2008 = vunpack.c.l.b16 %v1460
    %v2009 = vunpack.c.l.b16 %v1461
    %v2010 = vunpack.c.l.b16 %v1462
    %v2011 = vunpack.c.l.b16 %v1463
    %v2012 = vunpack.c.l.b16 %v1464
    %v2013 = vunpack.c.l.b16 %v1465
    %v2014 = vunpack.c.l.b16 %v1466
    %v2015 = vunpack.c.l.b16 %v1467
    %v2016 = vunpack.c.l.b16 %v1468
    %v2017 = vunpack.c.l.b16 %v1469
    %v2018 = vunpack.c.l.b16 %v1470
    %v2019 = vunpack.c.l.b16 %v1471
    %v2020 = vunpack.c.l.b16 %v1472
    %v2021 = vunpack.c.l.b16 %v1473
    %v2022 = vunpack.c.l.b16 %v1474
    %v2023 = vunpack.c.l.b16 %v1475
    %v2024 = vunpack.c.l.b16 %v1476
    %v2025 = vunpack.c.l.b16 %v1477
    %v2026 = vunpack.c.l.b16 %v1478
    %v2027 = vunpack.c.l.b16 %v1479
    %v2028 = vunpack.c.l.b16 %v1480
    %v2029 = vunpack.c.l.b16 %v1481
    %v2030 = vunpack.c.l.b16 %v1482
    %v2031 = vunpack.c.l.b16 %v1483
    %v2032 = vunpack.c.l.b16 %v1484
    %v2033 = vunpack.c.l.b16 %v1485
    %v2034 = vunpack.c.l.b16 %v1486
    %v2035 = vunpack.c.l.b16 %v1487
    %v2036 = vunpack.c.l.b16 %v1488
    %v2037 = vunpack.c.l.b16 %v1489
    %v2038 = vunpack.c.l.b16 %v1490
    %v2039 = vunpack.c.l.b16 %v1491
    %v2040 = vunpack.c.l.b16 %v1492
    %v2041 = vunpack.c.l.b16 %v1493
    %v2042 = vunpack.c.l.b16 %v1494
    %v2043 = vunpack.c.l.b16 %v1495
    %v2044 = vunpack.c.l.b16 %v1496
    %v2045 = vunpack.c.l.b16 %v1497
    %v2046 = vunpack.c.l.b16 %v1498
    %v2047 = vunpack.c.l.b16 %v1499
    %v2048 = vunpack.c.l.b16 %v1500
    %v2049 = vunpack.c.l.b16 %v1501
    %v2050 = vunpack.c.l.b16 %v1502
    %v2051 = vunpack.c.l.b16 %v1503
    %v2052 = vunpack.c.l.b16 %v1504
    %v2053 = vunpack.c.l.b16 %v1505
    %v2054 = vunpack.c.l.b16 %v1506
    %v2055 = vunpack.c.l.b16 %v1507
    %v2056 = vunpack.c.l.b16 %v1508
    %v2057 = vunpack.c.l.b16 %v1509
    %v2058 = vunpack.c.l.b16 %v1510
    %v2059 = vunpack.c.l.b16 %v1511
    %v2060 = vunpack.c.l.b16 %v1512
    %v2061 = vunpack.c.l.b16 %v1513
    %v2062 = vunpack.c.l.b16 %v1514
    %v2063 = vunpack.c.l.b16 %v1515
    %v2064 = vunpack.c.l.b16 %v1516
    %v2065 = vunpack.c.l.b16 %v1517
    %v2066 = vunpack.c.l.b16 %v1518
    %v2067 = vunpack.c.l.b16 %v1519
    %v2068 = vunpack.c.l.b16 %v1520
    %v2069 = vunpack.c.l.b16 %v1521
    %v2070 = vunpack.c.l.b16 %v1522
    %v2071 = vunpack.c.l.b16 %v1523
    %v2072 = vunpack.c.l.b16 %v1524
    %v2073 = vunpack.c.l.b16 %v1525
    %v2074 = vunpack.c.l.b16 %v1526
    %v2075 = vunpack.c.l.b16 %v1527
    %v2076 = vunpack.c.l.b16 %v1528
    %v2077 = vunpack.c.l.b16 %v1529
    %v2078 = vunpack.c.l.b16 %v1530
    %v2079 = vunpack.c.l.b16 %v1531
    %v2080 = vunpack.c.l.b16 %v1532
    %v2081 = vunpack.c.l.b16 %v1533
    %v2082 = vunpack.c.l.b16 %v1534
    %v2083 = vunpack.c.l.b16 %v1535
    %v2084 = vunpack.c.l.b16 %v1536
    %v2085 = vunpack.c.l.b16 %v1537
    %v2086 = vunpack.c.l.b16 %v1538
    %v2087 = vunpack.c.l.b16 %v1539
    %v2088 = vunpack.c.l.b16 %v1540
    %v2089 = vunpack.c.l.b16 %v1541
    %v2090 = vunpack.c.l.b16 %v1542
    %v2091 = vunpack.c.l.b16 %v1543
    %v2092 = vunpack.c.l.b16 %v1544
    %v2093 = vunpack.c.l.b16 %v1545
    %v2094 = vunpack.c.l.b16 %v1546
    %v2095 = vunpack.c.l.b16 %v1547
    %v2096 = vunpack.c.l.b16 %v1548
    %v2097 = vunpack.c.l.b16 %v1549
    %v2098 = vunpack.c.l.b16 %v1550
    %v2099 = vunpack.c.l.b16 %v1551
    %v2100 = vunpack.c.l.b16 %v1552
    %v2101 = vunpack.c.l.b16 %v1553
    %v2102 = vunpack.c.l.b16 %v1554
    %v2103 = vunpack.c.l.b16 %v1555
    %v2104 = vunpack.c.l.b16 %v1556
    %v2105 = vunpack.c.l.b16 %v1557
    %v2106 = vunpack.c.l.b16 %v1558
    %v2107 = vunpack.c.l.b16 %v1559
    %v2108 = vunpack.c.l.b16 %v1560
    %v2109 = vunpack.c.l.b16 %v1561
    %v2110 = vunpack.c.l.b16 %v1562
    %v2111 = vunpack.c.l.b16 %v1563
    %v2112 = vunpack.c.l.b16 %v1564
    %v2113 = vunpack.c.l.b16 %v1565
    %v2114 = vunpack.c.l.b16 %v1566
    %v2115 = vunpack.c.l.b16 %v1567
    %v2116 = vunpack.c.l.b16 %v1568
    %v2117 = vunpack.c.l.b16 %v1569
    %v2118 = vunpack.c.l.b16 %v1570
    %v2119 = vunpack.c.l.b16 %v1571
    %v2120 = vunpack.c.l.b16 %v1572
    %v2121 = vunpack.c.l.b16 %v1573
    %v2122 = vunpack.c.l.b16 %v1574
    %v2123 = vunpack.c.l.b16 %v1575
    %v2124 = vunpack.c.l.b16 %v1576
    %v2125 = vunpack.c.l.b16 %v1577
    %v2126 = vunpack.c.l.b16 %v1578
    %v2127 = vunpack.c.l.b16 %v1579
    %v2128 = vunpack.c.l.b16 %v1580
    %v2129 = vunpack.c.l.b16 %v1581
    %v2130 = vunpack.c.l.b16 %v1582
    %v2131 = vunpack.c.l.b16 %v1583
    %v2132 = vunpack.c.l.b16 %v1584
    %v2133 = vunpack.c.l.b16 %v1585
    %v2134 = vunpack.c.l.b16 %v1586
    %v2135 = vunpack.c.l.b16 %v1587
    %v2136 = vunpack.c.l.b16 %v1588
    %v2137 = vunpack.c.l.b16 %v1589
    %v2138 = vunpack.c.l.b16 %v1590
    %v2139 = vunpack.c.l.b16 %v1591
    %v2140 = vunpack.c.l.b16 %v1592
    %v2141 = vunpack.c.l.b16 %v1593
    %v2142 = vunpack.c.l.b16 %v1594
    %v2143 = vunpack.c.l.b16 %v1595
    %v2144 = vunpack.c.l.b16 %v1596
    %v2145 = vunpack.c.l.b16 %v1597
    %v2146 = vunpack.c.l.b16 %v1598
    %v2147 = vunpack.c.l.b16 %v1599
    %v2148 = vunpack.c.l.b16 %v1600
    %v2149 = vunpack.c.l.b16 %v1601
    %v2150 = vunpack.c.l.b16 %v1602
    %v2151 = vunpack.c.l.b16 %v1603
    %v2152 = vunpack.c.l.b16 %v1604
    %v2153 = vunpack.c.l.b16 %v1605
    %v2154 = vunpack.c.l.b16 %v1606
    %v2155 = vunpack.c.l.b16 %v1607
    %v2156 = vunpack.c.l.b16 %v1608
    %v2157 = vunpack.c.l.b16 %v1609
    %v2158 = vunpack.c.l.b16 %v1610
    %v2159 = vunpack.c.l.b16 %v1611
    %v2160 = vunpack.c.l.b16 %v1612
    %v2161 = vunpack.c.l.b16 %v1613
    %v2162 = vpack.c.b16 %v1891, %v1890
    %v2163 = vpack.c.b16 %v1893, %v1892
    %v2164 = vpack.c.b16 %v1895, %v1894
    %v2165 = vpack.c.b16 %v1897, %v1896
    %v2166 = vpack.c.b16 %v1899, %v1898
    %v2167 = vpack.c.b16 %v1901, %v1900
    %v2168 = vpack.c.b16 %v1903, %v1902
    %v2169 = vpack.c.b16 %v1905, %v1904
    %v2170 = vpack.c.b16 %v1907, %v1906
    %v2171 = vpack.c.b16 %v1909, %v1908
    %v2172 = vpack.c.b16 %v1911, %v1910
    %v2173 = vpack.c.b16 %v1913, %v1912
    %v2174 = vpack.c.b16 %v1915, %v1914
    %v2175 = vpack.c.b16 %v1917, %v1916
    %v2176 = vpack.c.b16 %v1919, %v1918
    %v2177 = vpack.c.b16 %v1921, %v1920
    %v2178 = vpack.c.b16 %v1923, %v1922
    %v2179 = vpack.c.b16 %v1925, %v1924
    %v2180 = vpack.c.b16 %v1927, %v1926
    %v2181 = vpack.c.b16 %v1929, %v1928
    %v2182 = vpack.c.b16 %v1931, %v1930
    %v2183 = vpack.c.b16 %v1933, %v1932
    %v2184 = vpack.c.b16 %v1935, %v1934
    %v2185 = vpack.c.b16 %v1937, %v1936
    %v2186 = vpack.c.b16 %v1939, %v1938
    %v2187 = vpack.c.b16 %v1941, %v1940
    %v2188 = vpack.c.b16 %v1943, %v1942
    %v2189 = vpack.c.b16 %v1945, %v1944
    %v2190 = vpack.c.b16 %v1947, %v1946
    %v2191 = vpack.c.b16 %v1949, %v1948
    %v2192 = vpack.c.b16 %v1951, %v1950
    %v2193 = vpack.c.b16 %v1953, %v1952
    %v2194 = vpack.c.b16 %v1955, %v1954
    %v2195 = vpack.c.b16 %v1957, %v1956
    %v2196 = vpack.c.b16 %v1959, %v1958
    %v2197 = vpack.c.b16 %v1961, %v1960
    %v2198 = vpack.c.b16 %v1963, %v1962
    %v2199 = vpack.c.b16 %v1965, %v1964
    %v2200 = vpack.c.b16 %v1967, %v1966
    %v2201 = vpack.c.b16 %v1969, %v1968
    %v2202 = vpack.c.b16 %v1971, %v1970
    %v2203 = vpack.c.b16 %v1973, %v1972
    %v2204 = vpack.c.b16 %v1975, %v1974
    %v2205 = vpack.c.b16 %v1977, %v1976
    %v2206 = vpack.c.b16 %v1979, %v1978
    %v2207 = vpack.c.b16 %v1981, %v1980
    %v2208 = vpack.c.b16 %v1983, %v1982
    %v2209 = vpack.c.b16 %v1985, %v1984
    %v2210 = vpack.c.b16 %v1987, %v1986
    %v2211 = vpack.c.b16 %v1989, %v1988
    %v2212 = vpack.c.b16 %v1991, %v1990
    %v2213 = vpack.c.b16 %v1993, %v1992
    %v2214 = vpack.c.b16 %v1995, %v1994
    %v2215 = vpack.c.b16 %v1997, %v1996
    %v2216 = vpack.c.b16 %v1999, %v1998
    %v2217 = vpack.c.b16 %v2001, %v2000
    %v2218 = vpack.c.b16 %v2003, %v2002
    %v2219 = vpack.c.b16 %v2005, %v2004
    %v2220 = vpack.c.b16 %v2007, %v2006
    %v2221 = vpack.c.b16 %v2009, %v2008
    %v2222 = vpack.c.b16 %v2011, %v2010
    %v2223 = vpack.c.b16 %v2013, %v2012
    %v2224 = vpack.c.b16 %v2015, %v2014
    %v2225 = vpack.c.b16 %v2017, %v2016
    %v2226 = vpack.c.b16 %v2019, %v2018
    %v2227 = vpack.c.b16 %v2021, %v2020
    %v2228 = vpack.c.b16 %v2023, %v2022
    %v2229 = vpack.c.b16 %v2025, %v2024
    %v2230 = vpack.c.b16 %v2027, %v2026
    %v2231 = vpack.c.b16 %v2029, %v2028
    %v2232 = vpack.c.b16 %v2031, %v2030
    %v2233 = vpack.c.b16 %v2033, %v2032
    %v2234 = vpack.c.b16 %v2035, %v2034
    %v2235 = vpack.c.b16 %v2037, %v2036
    %v2236 = vpack.c.b16 %v2039, %v2038
    %v2237 = vpack.c.b16 %v2041, %v2040
    %v2238 = vpack.c.b16 %v2043, %v2042
    %v2239 = vpack.c.b16 %v2045, %v2044
    %v2240 = vpack.c.b16 %v2047, %v2046
    %v2241 = vpack.c.b16 %v2049, %v2048
    %v2242 = vpack.c.b16 %v2051, %v2050
    %v2243 = vpack.c.b16 %v2053, %v2052
    %v2244 = vpack.c.b16 %v2055, %v2054
    %v2245 = vpack.c.b16 %v2057, %v2056
    %v2246 = vpack.c.b16 %v2059, %v2058
    %v2247 = vpack.c.b16 %v2061, %v2060
    %v2248 = vpack.c.b16 %v2063, %v2062
    %v2249 = vpack.c.b16 %v2065, %v2064
    %v2250 = vpack.c.b16 %v2067, %v2066
    %v2251 = vpack.c.b16 %v2069, %v2068
    %v2252 = vpack.c.b16 %v2071, %v2070
    %v2253 = vpack.c.b16 %v2073, %v2072
    %v2254 = vpack.c.b16 %v2075, %v2074
    %v2255 = vpack.c.b16 %v2077, %v2076
    %v2256 = vpack.c.b16 %v2079, %v2078
    %v2257 = vpack.c.b16 %v2081, %v2080
    %v2258 = vpack.c.b16 %v2083, %v2082
    %v2259 = vpack.c.b16 %v2085, %v2084
    %v2260 = vpack.c.b16 %v2087, %v2086
    %v2261 = vpack.c.b16 %v2089, %v2088
    %v2262 = vpack.c.b16 %v2091, %v2090
    %v2263 = vpack.c.b16 %v2093, %v2092
    %v2264 = vpack.c.b16 %v2095, %v2094
    %v2265 = vpack.c.b16 %v2097, %v2096
    %v2266 = vpack.c.b16 %v2099, %v2098
    %v2267 = vpack.c.b16 %v2101, %v2100
    %v2268 = vpack.c.b16 %v2103, %v2102
    %v2269 = vpack.c.b16 %v2105, %v2104
    %v2270 = vpack.c.b16 %v2107, %v2106
    %v2271 = vpack.c.b16 %v2109, %v2108
    %v2272 = vpack.c.b16 %v2111, %v2110
    %v2273 = vpack.c.b16 %v2113, %v2112
    %v2274 = vpack.c.b16 %v2115, %v2114
    %v2275 = vpack.c.b16 %v2117, %v2116
    %v2276 = vpack.c.b16 %v2119, %v2118
    %v2277 = vpack.c.b16 %v2121, %v2120
    %v2278 = vpack.c.b16 %v2123, %v2122
    %v2279 = vpack.c.b16 %v2125, %v2124
    %v2280 = vpack.c.b16 %v2127, %v2126
    %v2281 = vpack.c.b16 %v2129, %v2128
    %v2282 = vpack.c.b16 %v2131, %v2130
    %v2283 = vpack.c.b16 %v2133, %v2132
    %v2284 = vpack.c.b16 %v2135, %v2134
    %v2285 = vpack.c.b16 %v2137, %v2136
    %v2286 = vpack.c.b16 %v2139, %v2138
    %v2287 = vpack.c.b16 %v2141, %v2140
    %v2288 = vpack.c.b16 %v2143, %v2142
    %v2289 = vpack.c.b16 %v2145, %v2144
    %v2290 = vpack.c.b16 %v2147, %v2146
    %v2291 = vpack.c.b16 %v2149, %v2148
    %v2292 = vpack.c.b16 %v2151, %v2150
    %v2293 = vpack.c.b16 %v2153, %v2152
    %v2294 = vpack.c.b16 %v2155, %v2154
    %v2295 = vpack.c.b16 %v2157, %v2156
    %v2296 = vpack.c.b16 %v2159, %v2158
    %v2297 = vpack.c.b16 %v2161, %v2160
    %2434 = vmatpush.bf16.msra.mxu0 %v2169
    %2435 = vmatpush.bf16.msra.mxu0 %v2168
    %2436 = vmatpush.bf16.msra.mxu0 %v2167
    %2437 = vmatpush.bf16.msra.mxu0 %v2166
    %2438 = vmatpush.bf16.msra.mxu0 %v2165
    %2439 = vmatpush.bf16.msra.mxu0 %v2164
    %2440 = vmatpush.bf16.msra.mxu0 %v2163
    %2441 = vmatpush.bf16.msra.mxu0 %v2162
    %2442 = vmatmul.bf16.gmra.mxu0 %v1325
    %v2443 = vpop.f32.mrf.mxu0
    %v2444 = vadd.f32 %v1616, %v2443
    %v2445 = vpop.f32.mrf.mxu0
    %2446 = vdwg.mxu0
    %2447 = vmatpush.bf16.msra.mxu0 %v2177
    %2448 = vmatpush.bf16.msra.mxu0 %v2176
    %2449 = vmatpush.bf16.msra.mxu0 %v2175
    %2450 = vmatpush.bf16.msra.mxu0 %v2174
    %2451 = vmatpush.bf16.msra.mxu0 %v2173
    %2452 = vmatpush.bf16.msra.mxu0 %v2172
    %2453 = vmatpush.bf16.msra.mxu0 %v2171
    %2454 = vmatpush.bf16.msra.mxu0 %v2170
    %2455 = vmatmul.bf16.gmra.mxu0 %v1326
    %v2456 = vpop.f32.mrf.mxu0
    %v2457 = vadd.f32 %v2444, %v2456
    %v2458 = vpop.f32.mrf.mxu0
    %2459 = vdwg.mxu0
    %2460 = vmatpush.bf16.msra.mxu0 %v2185
    %2461 = vmatpush.bf16.msra.mxu0 %v2184
    %2462 = vmatpush.bf16.msra.mxu0 %v2183
    %2463 = vmatpush.bf16.msra.mxu0 %v2182
    %2464 = vmatpush.bf16.msra.mxu0 %v2181
    %2465 = vmatpush.bf16.msra.mxu0 %v2180
    %2466 = vmatpush.bf16.msra.mxu0 %v2179
    %2467 = vmatpush.bf16.msra.mxu0 %v2178
    %2468 = vmatmul.bf16.gmra.mxu0 %v1327
    %v2469 = vpop.f32.mrf.mxu0
    %v2470 = vadd.f32 %v2457, %v2469
    %v2471 = vpop.f32.mrf.mxu0
    %2472 = vdwg.mxu0
    %2473 = vmatpush.bf16.msra.mxu0 %v2193
    %2474 = vmatpush.bf16.msra.mxu0 %v2192
    %2475 = vmatpush.bf16.msra.mxu0 %v2191
    %2476 = vmatpush.bf16.msra.mxu0 %v2190
    %2477 = vmatpush.bf16.msra.mxu0 %v2189
    %2478 = vmatpush.bf16.msra.mxu0 %v2188
    %2479 = vmatpush.bf16.msra.mxu0 %v2187
    %2480 = vmatpush.bf16.msra.mxu0 %v2186
    %2481 = vmatmul.bf16.gmra.mxu0 %v1328
    %v2482 = vpop.f32.mrf.mxu0
    %v2483 = vadd.f32 %v2470, %v2482
    %v2484 = vpop.f32.mrf.mxu0
    %2485 = vdwg.mxu0
    %2486 = vmatpush.bf16.msra.mxu0 %v2201
    %2487 = vmatpush.bf16.msra.mxu0 %v2200
    %2488 = vmatpush.bf16.msra.mxu0 %v2199
    %2489 = vmatpush.bf16.msra.mxu0 %v2198
    %2490 = vmatpush.bf16.msra.mxu0 %v2197
    %2491 = vmatpush.bf16.msra.mxu0 %v2196
    %2492 = vmatpush.bf16.msra.mxu0 %v2195
    %2493 = vmatpush.bf16.msra.mxu0 %v2194
    %2494 = vmatmul.bf16.gmra.mxu0 %v1329
    %v2495 = vpop.f32.mrf.mxu0
    %v2496 = vadd.f32 %v2483, %v2495
    %v2497 = vpop.f32.mrf.mxu0
    %2498 = vdwg.mxu0
    %2499 = vmatpush.bf16.msra.mxu0 %v2209
    %2500 = vmatpush.bf16.msra.mxu0 %v2208
    %2501 = vmatpush.bf16.msra.mxu0 %v2207
    %2502 = vmatpush.bf16.msra.mxu0 %v2206
    %2503 = vmatpush.bf16.msra.mxu0 %v2205
    %2504 = vmatpush.bf16.msra.mxu0 %v2204
    %2505 = vmatpush.bf16.msra.mxu0 %v2203
    %2506 = vmatpush.bf16.msra.mxu0 %v2202
    %2507 = vmatmul.bf16.gmra.mxu0 %v1330
    %v2508 = vpop.f32.mrf.mxu0
    %v2509 = vadd.f32 %v2496, %v2508
    %v2510 = vpop.f32.mrf.mxu0
    %2511 = vdwg.mxu0
    %2512 = vmatpush.bf16.msra.mxu0 %v2217
    %2513 = vmatpush.bf16.msra.mxu0 %v2216
    %2514 = vmatpush.bf16.msra.mxu0 %v2215
    %2515 = vmatpush.bf16.msra.mxu0 %v2214
    %2516 = vmatpush.bf16.msra.mxu0 %v2213
    %2517 = vmatpush.bf16.msra.mxu0 %v2212
    %2518 = vmatpush.bf16.msra.mxu0 %v2211
    %2519 = vmatpush.bf16.msra.mxu0 %v2210
    %2520 = vmatmul.bf16.gmra.mxu0 %v1331
    %v2521 = vpop.f32.mrf.mxu0
    %v2522 = vadd.f32 %v2509, %v2521
    %v2523 = vpop.f32.mrf.mxu0
    %2524 = vdwg.mxu0
    %2525 = vmatpush.bf16.msra.mxu0 %v2225
    %2526 = vmatpush.bf16.msra.mxu0 %v2224
    %2527 = vmatpush.bf16.msra.mxu0 %v2223
    %2528 = vmatpush.bf16.msra.mxu0 %v2222
    %2529 = vmatpush.bf16.msra.mxu0 %v2221
    %2530 = vmatpush.bf16.msra.mxu0 %v2220
    %2531 = vmatpush.bf16.msra.mxu0 %v2219
    %2532 = vmatpush.bf16.msra.mxu0 %v2218
    %2533 = vmatmul.bf16.gmra.mxu0 %v1332
    %v2534 = vpop.f32.mrf.mxu0
    %v2535 = vadd.f32 %v2522, %v2534
    %v2536 = vpop.f32.mrf.mxu0
    %2537 = vdwg.mxu0
    %2538 = vmatpush.bf16.msra.mxu0 %v2233
    %2539 = vmatpush.bf16.msra.mxu0 %v2232
    %2540 = vmatpush.bf16.msra.mxu0 %v2231
    %2541 = vmatpush.bf16.msra.mxu0 %v2230
    %2542 = vmatpush.bf16.msra.mxu0 %v2229
    %2543 = vmatpush.bf16.msra.mxu0 %v2228
    %2544 = vmatpush.bf16.msra.mxu0 %v2227
    %2545 = vmatpush.bf16.msra.mxu0 %v2226
    %2546 = vmatmul.bf16.gmra.mxu0 %v1333
    %v2547 = vpop.f32.mrf.mxu0
    %v2548 = vadd.f32 %v2535, %v2547
    %v2549 = vpop.f32.mrf.mxu0
    %2550 = vdwg.mxu0
    %2551 = vmatpush.bf16.msra.mxu0 %v2241
    %2552 = vmatpush.bf16.msra.mxu0 %v2240
    %2553 = vmatpush.bf16.msra.mxu0 %v2239
    %2554 = vmatpush.bf16.msra.mxu0 %v2238
    %2555 = vmatpush.bf16.msra.mxu0 %v2237
    %2556 = vmatpush.bf16.msra.mxu0 %v2236
    %2557 = vmatpush.bf16.msra.mxu0 %v2235
    %2558 = vmatpush.bf16.msra.mxu0 %v2234
    %2559 = vmatmul.bf16.gmra.mxu0 %v1334
    %v2560 = vpop.f32.mrf.mxu0
    %v2561 = vadd.f32 %v2548, %v2560
    %v2562 = vpop.f32.mrf.mxu0
    %2563 = vdwg.mxu0
    %2564 = vmatpush.bf16.msra.mxu0 %v2249
    %2565 = vmatpush.bf16.msra.mxu0 %v2248
    %2566 = vmatpush.bf16.msra.mxu0 %v2247
    %2567 = vmatpush.bf16.msra.mxu0 %v2246
    %2568 = vmatpush.bf16.msra.mxu0 %v2245
    %2569 = vmatpush.bf16.msra.mxu0 %v2244
    %2570 = vmatpush.bf16.msra.mxu0 %v2243
    %2571 = vmatpush.bf16.msra.mxu0 %v2242
    %2572 = vmatmul.bf16.gmra.mxu0 %v1335
    %v2573 = vpop.f32.mrf.mxu0
    %v2574 = vadd.f32 %v2561, %v2573
    %v2575 = vpop.f32.mrf.mxu0
    %2576 = vdwg.mxu0
    %2577 = vmatpush.bf16.msra.mxu0 %v2257
    %2578 = vmatpush.bf16.msra.mxu0 %v2256
    %2579 = vmatpush.bf16.msra.mxu0 %v2255
    %2580 = vmatpush.bf16.msra.mxu0 %v2254
    %2581 = vmatpush.bf16.msra.mxu0 %v2253
    %2582 = vmatpush.bf16.msra.mxu0 %v2252
    %2583 = vmatpush.bf16.msra.mxu0 %v2251
    %2584 = vmatpush.bf16.msra.mxu0 %v2250
    %2585 = vmatmul.bf16.gmra.mxu0 %v1336
    %v2586 = vpop.f32.mrf.mxu0
    %v2587 = vadd.f32 %v2574, %v2586
    %v2588 = vpop.f32.mrf.mxu0
    %2589 = vdwg.mxu0
    %2590 = vmatpush.bf16.msra.mxu0 %v2265
    %2591 = vmatpush.bf16.msra.mxu0 %v2264
    %2592 = vmatpush.bf16.msra.mxu0 %v2263
    %2593 = vmatpush.bf16.msra.mxu0 %v2262
    %2594 = vmatpush.bf16.msra.mxu0 %v2261
    %2595 = vmatpush.bf16.msra.mxu0 %v2260
    %2596 = vmatpush.bf16.msra.mxu0 %v2259
    %2597 = vmatpush.bf16.msra.mxu0 %v2258
    %2598 = vmatmul.bf16.gmra.mxu0 %v1337
    %v2599 = vpop.f32.mrf.mxu0
    %v2600 = vadd.f32 %v2587, %v2599
    %v2601 = vpop.f32.mrf.mxu0
    %2602 = vdwg.mxu0
    %2603 = vmatpush.bf16.msra.mxu0 %v2273
    %2604 = vmatpush.bf16.msra.mxu0 %v2272
    %2605 = vmatpush.bf16.msra.mxu0 %v2271
    %2606 = vmatpush.bf16.msra.mxu0 %v2270
    %2607 = vmatpush.bf16.msra.mxu0 %v2269
    %2608 = vmatpush.bf16.msra.mxu0 %v2268
    %2609 = vmatpush.bf16.msra.mxu0 %v2267
    %2610 = vmatpush.bf16.msra.mxu0 %v2266
    %2611 = vmatmul.bf16.gmra.mxu0 %v1338
    %v2612 = vpop.f32.mrf.mxu0
    %v2613 = vadd.f32 %v2600, %v2612
    %v2614 = vpop.f32.mrf.mxu0
    %2615 = vdwg.mxu0
    %2616 = vmatpush.bf16.msra.mxu0 %v2281
    %2617 = vmatpush.bf16.msra.mxu0 %v2280
    %2618 = vmatpush.bf16.msra.mxu0 %v2279
    %2619 = vmatpush.bf16.msra.mxu0 %v2278
    %2620 = vmatpush.bf16.msra.mxu0 %v2277
    %2621 = vmatpush.bf16.msra.mxu0 %v2276
    %2622 = vmatpush.bf16.msra.mxu0 %v2275
    %2623 = vmatpush.bf16.msra.mxu0 %v2274
    %2624 = vmatmul.bf16.gmra.mxu0 %v1339
    %v2625 = vpop.f32.mrf.mxu0
    %v2626 = vadd.f32 %v2613, %v2625
    %v2627 = vpop.f32.mrf.mxu0
    %2628 = vdwg.mxu0
    %2629 = vmatpush.bf16.msra.mxu0 %v2289
    %2630 = vmatpush.bf16.msra.mxu0 %v2288
    %2631 = vmatpush.bf16.msra.mxu0 %v2287
    %2632 = vmatpush.bf16.msra.mxu0 %v2286
    %2633 = vmatpush.bf16.msra.mxu0 %v2285
    %2634 = vmatpush.bf16.msra.mxu0 %v2284
    %2635 = vmatpush.bf16.msra.mxu0 %v2283
    %2636 = vmatpush.bf16.msra.mxu0 %v2282
    %2637 = vmatmul.bf16.gmra.mxu0 %v1340
    %v2638 = vpop.f32.mrf.mxu0
    %v2639 = vadd.f32 %v2626, %v2638
    %v2640 = vpop.f32.mrf.mxu0
    %2641 = vdwg.mxu0
    %2642 = vmatpush.bf16.msra.mxu0 %v2297
    %2643 = vmatpush.bf16.msra.mxu0 %v2296
    %2644 = vmatpush.bf16.msra.mxu0 %v2295
    %2645 = vmatpush.bf16.msra.mxu0 %v2294
    %2646 = vmatpush.bf16.msra.mxu0 %v2293
    %2647 = vmatpush.bf16.msra.mxu0 %v2292
    %2648 = vmatpush.bf16.msra.mxu0 %v2291
    %2649 = vmatpush.bf16.msra.mxu0 %v2290
    %2650 = vmatmul.bf16.gmra.mxu0 %v1341
    %v2651 = vpop.f32.mrf.mxu0
    %v2652 = vadd.f32 %v2639, %v2651
    %v2653 = vpop.f32.mrf.mxu0
    %2654 = vdwg.mxu0
    %v2655 = vtanh.pop %v2652
    %v2656 = vpack.c.bf16 %v2655, %v2655
    %v2657 = vld [vmem:[%s6] sm:$0xf]
    %v2658 = vld [vmem:[%s6 + $0x4] sm:$0xf]
    %v2659 = vld [vmem:[%s6 + $0x8] sm:$0xf]
    %v2660 = vld [vmem:[%s6 + $0xc] sm:$0xf]
    %v2661 = vld [vmem:[%s7] sm:$0x1]
    %v2663 = vperm.slane %v2661, 0
    %v2669 = vunpack.c.l.b16 %v2657
    %v2670 = vunpack.c.l.b16 %v2658
    %v2671 = vunpack.c.l.b16 %v2659
    %v2672 = vunpack.c.l.b16 %v2660
    %v2673 = vpack.c.b16 %v2670, %v2669
    %v2674 = vpack.c.b16 %v2672, %v2671
    %v2678 = vsel %vm72, %v2656, 0
    %2680 = vmatpush.bf16.msra.mxu0 0
    %2681 = vmatpush.bf16.msra.mxu0 0
    %2682 = vmatpush.bf16.msra.mxu0 0
    %2683 = vmatpush.bf16.msra.mxu0 0
    %2684 = vmatpush.bf16.msra.mxu0 0
    %2685 = vmatpush.bf16.msra.mxu0 0
    %2686 = vmatpush.bf16.msra.mxu0 %v2674
    %2687 = vmatpush.bf16.msra.mxu0 %v2673
    %2688 = vmatmul.bf16.gmra.mxu0 %v2678
    %v2689 = vpop.f32.mrf.mxu0
    %v2690 = vadd.f32 %v2663, %v2689
    %v2691 = vpop.f32.mrf.mxu0
    %2692 = vdwg.mxu0
    %v2693 = vld [vmem:[%s1] sm:$0xff]
    %v2694 = vld [vmem:[%s1 + $0x8] sm:$0xff]
    %2696 = vset.pattern.permute.xlu0 0
    %2697 = vperm.xlu0 %2696, %v2690
    %v2698 = vpop.permute.xlu0 %2697
    %2702 = vst [vmem:[#allocation1] ss:$2 sm:$0xff] %v2693
    %s2703 = scalar_lea.vmem [#allocation1], 16
    %2704 = vst [vmem:[%s2703] ss:$2 sm:$0xff] %v2694
    %v2705 = vld.sshfl [vmem:[#allocation1] sm:$0xff pattern:$0x75316420]
    %v2706 = vld.sshfl [vmem:[#allocation1 + $0x8] sm:$0xff pattern:$0x75316420]
    %v2707 = vld.sshfl [vmem:[#allocation1 + $0x10] sm:$0xff pattern:$0x75316420]
    %v2708 = vld.sshfl [vmem:[#allocation1 + $0x18] sm:$0xff pattern:$0x75316420]
    %v2713 = vmul.f32 %v2698, %v2705
    %v2714 = vmul.f32 %v2698, %v2706
    %v2715 = vmul.f32 %v2698, %v2707
    %v2716 = vmul.f32 %v2698, %v2708
    %2717 = vst [vmem:[#allocation1] ss:$2 sm:$0xff] %v2693
    %s2718 = scalar_lea.vmem [#allocation1], 16
    %2719 = vst [vmem:[%s2718] ss:$2 sm:$0xff] %v2694
    %v2720 = vld.sshfl [vmem:[#allocation1] sm:$0xff pattern:$0x75316420]
    %v2721 = vld.sshfl [vmem:[#allocation1 + $0x8] sm:$0xff pattern:$0x75316420]
    %v2722 = vld.sshfl [vmem:[#allocation1 + $0x10] sm:$0xff pattern:$0x75316420]
    %v2723 = vld.sshfl [vmem:[#allocation1 + $0x18] sm:$0xff pattern:$0x75316420]
    %2724 = vrot.lane.b32.xlu0 %v2720, 15
    %v2725 = vpop.permute.xlu0 %2724
    %2726 = vrot.lane.b32.xlu0 %v2721, 15
    %v2727 = vpop.permute.xlu0 %2726
    %2728 = vrot.lane.b32.xlu0 %v2722, 15
    %v2729 = vpop.permute.xlu0 %2728
    %2730 = vrot.lane.b32.xlu0 %v2723, 15
    %v2731 = vpop.permute.xlu0 %2730
    %vm2732 = vcmask 121856
    %v2733 = vsel %vm2732, %v2725, %v2727
    %v2734 = vsel %vm2732, %v2727, %v2729
    %v2735 = vsel %vm2732, %v2729, %v2731
    %v2741 = vsel %vm2732, 0.0, %v2725
    %2742 = vset.pattern.permute.xlu0 1
    %2743 = vperm.xlu0 %2742, %v2690
    %v2744 = vpop.permute.xlu0 %2743
    %v2746 = vmul.f32 %v2744, %v2741
    %v2747 = vmul.f32 %v2744, %v2733
    %v2748 = vmul.f32 %v2744, %v2734
    %v2749 = vmul.f32 %v2744, %v2735
    %v2750 = vmul.f32 %v2744, %v2731
    %2756 = vrot.lane.b32.xlu0 %v2746, 114
    %v2757 = vpop.permute.xlu0 %2756
    %2758 = vrot.lane.b32.xlu0 %v2747, 114
    %v2759 = vpop.permute.xlu0 %2758
    %2760 = vrot.lane.b32.xlu0 %v2748, 114
    %v2761 = vpop.permute.xlu0 %2760
    %2762 = vrot.lane.b32.xlu0 %v2749, 114
    %v2763 = vpop.permute.xlu0 %2762
    %2764 = vrot.lane.b32.xlu0 %v2750, 114
    %v2765 = vpop.permute.xlu0 %2764
    %vm2766 = vcmask 932864
    %v2767 = vsel %vm2766, %v2757, %v2759
    %v2768 = vsel %vm2766, %v2759, %v2761
    %v2769 = vsel %vm2766, %v2761, %v2763
    %v2770 = vsel %vm2766, %v2763, %v2765
    %v2775 = vadd.f32 %v2713, %v2767
    %v2776 = vadd.f32 %v2714, %v2768
    %v2777 = vadd.f32 %v2715, %v2769
    %v2778 = vadd.f32 %v2716, %v2770
    %2779 = vset.pattern.permute.xlu0 2
    %2780 = vperm.xlu0 %2779, %v2690
    %v2781 = vpop.permute.xlu0 %2780
    %v2783 = vmul.f32 %v2781, %v2741
    %v2784 = vmul.f32 %v2781, %v2733
    %v2785 = vmul.f32 %v2781, %v2734
    %v2786 = vmul.f32 %v2781, %v2735
    %v2787 = vmul.f32 %v2781, %v2731
    %2793 = vrot.lane.b32.xlu0 %v2783, 115
    %v2794 = vpop.permute.xlu0 %2793
    %2795 = vrot.lane.b32.xlu0 %v2784, 115
    %v2796 = vpop.permute.xlu0 %2795
    %2797 = vrot.lane.b32.xlu0 %v2785, 115
    %v2798 = vpop.permute.xlu0 %2797
    %2799 = vrot.lane.b32.xlu0 %v2786, 115
    %v2800 = vpop.permute.xlu0 %2799
    %2801 = vrot.lane.b32.xlu0 %v2787, 115
    %v2802 = vpop.permute.xlu0 %2801
    %vm2803 = vcmask 941056
    %v2804 = vsel %vm2803, %v2794, %v2796
    %v2805 = vsel %vm2803, %v2796, %v2798
    %v2806 = vsel %vm2803, %v2798, %v2800
    %v2807 = vsel %vm2803, %v2800, %v2802
    %v2812 = vadd.f32 %v2775, %v2804
    %v2813 = vadd.f32 %v2776, %v2805
    %v2814 = vadd.f32 %v2777, %v2806
    %v2815 = vadd.f32 %v2778, %v2807
    %2816 = vset.pattern.permute.xlu0 3
    %2817 = vperm.xlu0 %2816, %v2690
    %v2818 = vpop.permute.xlu0 %2817
    %v2820 = vmul.f32 %v2818, %v2741
    %v2821 = vmul.f32 %v2818, %v2733
    %v2822 = vmul.f32 %v2818, %v2734
    %v2823 = vmul.f32 %v2818, %v2735
    %v2824 = vmul.f32 %v2818, %v2731
    %2830 = vrot.lane.b32.xlu0 %v2820, 116
    %v2831 = vpop.permute.xlu0 %2830
    %2832 = vrot.lane.b32.xlu0 %v2821, 116
    %v2833 = vpop.permute.xlu0 %2832
    %2834 = vrot.lane.b32.xlu0 %v2822, 116
    %v2835 = vpop.permute.xlu0 %2834
    %2836 = vrot.lane.b32.xlu0 %v2823, 116
    %v2837 = vpop.permute.xlu0 %2836
    %2838 = vrot.lane.b32.xlu0 %v2824, 116
    %v2839 = vpop.permute.xlu0 %2838
    %vm2840 = vcmask 949248
    %v2841 = vsel %vm2840, %v2831, %v2833
    %v2842 = vsel %vm2840, %v2833, %v2835
    %v2843 = vsel %vm2840, %v2835, %v2837
    %v2844 = vsel %vm2840, %v2837, %v2839
    %v2849 = vadd.f32 %v2812, %v2841
    %v2850 = vadd.f32 %v2813, %v2842
    %v2851 = vadd.f32 %v2814, %v2843
    %v2852 = vadd.f32 %v2815, %v2844
    %2853 = vset.pattern.permute.xlu0 4
    %2854 = vperm.xlu0 %2853, %v2690
    %v2855 = vpop.permute.xlu0 %2854
    %v2857 = vmul.f32 %v2855, %v2741
    %v2858 = vmul.f32 %v2855, %v2733
    %v2859 = vmul.f32 %v2855, %v2734
    %v2860 = vmul.f32 %v2855, %v2735
    %v2861 = vmul.f32 %v2855, %v2731
    %2867 = vrot.lane.b32.xlu0 %v2857, 117
    %v2868 = vpop.permute.xlu0 %2867
    %2869 = vrot.lane.b32.xlu0 %v2858, 117
    %v2870 = vpop.permute.xlu0 %2869
    %2871 = vrot.lane.b32.xlu0 %v2859, 117
    %v2872 = vpop.permute.xlu0 %2871
    %2873 = vrot.lane.b32.xlu0 %v2860, 117
    %v2874 = vpop.permute.xlu0 %2873
    %2875 = vrot.lane.b32.xlu0 %v2861, 117
    %v2876 = vpop.permute.xlu0 %2875
    %vm2877 = vcmask 957440
    %v2878 = vsel %vm2877, %v2868, %v2870
    %v2879 = vsel %vm2877, %v2870, %v2872
    %v2880 = vsel %vm2877, %v2872, %v2874
    %v2881 = vsel %vm2877, %v2874, %v2876
    %v2886 = vadd.f32 %v2849, %v2878
    %v2887 = vadd.f32 %v2850, %v2879
    %v2888 = vadd.f32 %v2851, %v2880
    %v2889 = vadd.f32 %v2852, %v2881
    %2890 = vset.pattern.permute.xlu0 5
    %2891 = vperm.xlu0 %2890, %v2690
    %v2892 = vpop.permute.xlu0 %2891
    %v2894 = vmul.f32 %v2892, %v2741
    %v2895 = vmul.f32 %v2892, %v2733
    %v2896 = vmul.f32 %v2892, %v2734
    %v2897 = vmul.f32 %v2892, %v2735
    %v2898 = vmul.f32 %v2892, %v2731
    %2904 = vrot.lane.b32.xlu0 %v2894, 118
    %v2905 = vpop.permute.xlu0 %2904
    %2906 = vrot.lane.b32.xlu0 %v2895, 118
    %v2907 = vpop.permute.xlu0 %2906
    %2908 = vrot.lane.b32.xlu0 %v2896, 118
    %v2909 = vpop.permute.xlu0 %2908
    %2910 = vrot.lane.b32.xlu0 %v2897, 118
    %v2911 = vpop.permute.xlu0 %2910
    %2912 = vrot.lane.b32.xlu0 %v2898, 118
    %v2913 = vpop.permute.xlu0 %2912
    %vm2914 = vcmask 965632
    %v2915 = vsel %vm2914, %v2905, %v2907
    %v2916 = vsel %vm2914, %v2907, %v2909
    %v2917 = vsel %vm2914, %v2909, %v2911
    %v2918 = vsel %vm2914, %v2911, %v2913
    %v2923 = vadd.f32 %v2886, %v2915
    %v2924 = vadd.f32 %v2887, %v2916
    %v2925 = vadd.f32 %v2888, %v2917
    %v2926 = vadd.f32 %v2889, %v2918
    %2927 = vset.pattern.permute.xlu0 6
    %2928 = vperm.xlu0 %2927, %v2690
    %v2929 = vpop.permute.xlu0 %2928
    %v2931 = vmul.f32 %v2929, %v2741
    %v2932 = vmul.f32 %v2929, %v2733
    %v2933 = vmul.f32 %v2929, %v2734
    %v2934 = vmul.f32 %v2929, %v2735
    %v2935 = vmul.f32 %v2929, %v2731
    %2941 = vrot.lane.b32.xlu0 %v2931, 119
    %v2942 = vpop.permute.xlu0 %2941
    %2943 = vrot.lane.b32.xlu0 %v2932, 119
    %v2944 = vpop.permute.xlu0 %2943
    %2945 = vrot.lane.b32.xlu0 %v2933, 119
    %v2946 = vpop.permute.xlu0 %2945
    %2947 = vrot.lane.b32.xlu0 %v2934, 119
    %v2948 = vpop.permute.xlu0 %2947
    %2949 = vrot.lane.b32.xlu0 %v2935, 119
    %v2950 = vpop.permute.xlu0 %2949
    %vm2951 = vcmask 973824
    %v2952 = vsel %vm2951, %v2942, %v2944
    %v2953 = vsel %vm2951, %v2944, %v2946
    %v2954 = vsel %vm2951, %v2946, %v2948
    %v2955 = vsel %vm2951, %v2948, %v2950
    %v2960 = vadd.f32 %v2923, %v2952
    %v2961 = vadd.f32 %v2924, %v2953
    %v2962 = vadd.f32 %v2925, %v2954
    %v2963 = vadd.f32 %v2926, %v2955
    %2964 = vset.pattern.permute.xlu0 7
    %2965 = vperm.xlu0 %2964, %v2690
    %v2966 = vpop.permute.xlu0 %2965
    %v2968 = vmul.f32 %v2966, %v2741
    %v2969 = vmul.f32 %v2966, %v2733
    %v2970 = vmul.f32 %v2966, %v2734
    %v2971 = vmul.f32 %v2966, %v2735
    %v2972 = vmul.f32 %v2966, %v2731
    %2978 = vrot.lane.b32.xlu0 %v2968, 120
    %v2979 = vpop.permute.xlu0 %2978
    %2980 = vrot.lane.b32.xlu0 %v2969, 120
    %v2981 = vpop.permute.xlu0 %2980
    %2982 = vrot.lane.b32.xlu0 %v2970, 120
    %v2983 = vpop.permute.xlu0 %2982
    %2984 = vrot.lane.b32.xlu0 %v2971, 120
    %v2985 = vpop.permute.xlu0 %2984
    %2986 = vrot.lane.b32.xlu0 %v2972, 120
    %v2987 = vpop.permute.xlu0 %2986
    %vm2988 = vcmask 982016
    %v2989 = vsel %vm2988, %v2979, %v2981
    %v2990 = vsel %vm2988, %v2981, %v2983
    %v2991 = vsel %vm2988, %v2983, %v2985
    %v2992 = vsel %vm2988, %v2985, %v2987
    %v2997 = vadd.f32 %v2960, %v2989
    %v2998 = vadd.f32 %v2961, %v2990
    %v2999 = vadd.f32 %v2962, %v2991
    %v3000 = vadd.f32 %v2963, %v2992
    %3001 = vset.pattern.permute.xlu0 8
    %3002 = vperm.xlu0 %3001, %v2690
    %v3003 = vpop.permute.xlu0 %3002
    %v3005 = vmul.f32 %v3003, %v2741
    %v3006 = vmul.f32 %v3003, %v2733
    %v3007 = vmul.f32 %v3003, %v2734
    %v3008 = vmul.f32 %v3003, %v2735
    %v3009 = vmul.f32 %v3003, %v2731
    %3015 = vrot.lane.b32.xlu0 %v3005, 121
    %v3016 = vpop.permute.xlu0 %3015
    %3017 = vrot.lane.b32.xlu0 %v3006, 121
    %v3018 = vpop.permute.xlu0 %3017
    %3019 = vrot.lane.b32.xlu0 %v3007, 121
    %v3020 = vpop.permute.xlu0 %3019
    %3021 = vrot.lane.b32.xlu0 %v3008, 121
    %v3022 = vpop.permute.xlu0 %3021
    %3023 = vrot.lane.b32.xlu0 %v3009, 121
    %v3024 = vpop.permute.xlu0 %3023
    %vm3025 = vcmask 990208
    %v3026 = vsel %vm3025, %v3016, %v3018
    %v3027 = vsel %vm3025, %v3018, %v3020
    %v3028 = vsel %vm3025, %v3020, %v3022
    %v3029 = vsel %vm3025, %v3022, %v3024
    %v3034 = vadd.f32 %v2997, %v3026
    %v3035 = vadd.f32 %v2998, %v3027
    %v3036 = vadd.f32 %v2999, %v3028
    %v3037 = vadd.f32 %v3000, %v3029
    %3038 = vset.pattern.permute.xlu0 9
    %3039 = vperm.xlu0 %3038, %v2690
    %v3040 = vpop.permute.xlu0 %3039
    %v3042 = vmul.f32 %v3040, %v2741
    %v3043 = vmul.f32 %v3040, %v2733
    %v3044 = vmul.f32 %v3040, %v2734
    %v3045 = vmul.f32 %v3040, %v2735
    %v3046 = vmul.f32 %v3040, %v2731
    %3052 = vrot.lane.b32.xlu0 %v3042, 122
    %v3053 = vpop.permute.xlu0 %3052
    %3054 = vrot.lane.b32.xlu0 %v3043, 122
    %v3055 = vpop.permute.xlu0 %3054
    %3056 = vrot.lane.b32.xlu0 %v3044, 122
    %v3057 = vpop.permute.xlu0 %3056
    %3058 = vrot.lane.b32.xlu0 %v3045, 122
    %v3059 = vpop.permute.xlu0 %3058
    %3060 = vrot.lane.b32.xlu0 %v3046, 122
    %v3061 = vpop.permute.xlu0 %3060
    %vm3062 = vcmask 998400
    %v3063 = vsel %vm3062, %v3053, %v3055
    %v3064 = vsel %vm3062, %v3055, %v3057
    %v3065 = vsel %vm3062, %v3057, %v3059
    %v3066 = vsel %vm3062, %v3059, %v3061
    %v3071 = vadd.f32 %v3034, %v3063
    %v3072 = vadd.f32 %v3035, %v3064
    %v3073 = vadd.f32 %v3036, %v3065
    %v3074 = vadd.f32 %v3037, %v3066
    %3075 = vset.pattern.permute.xlu0 10
    %3076 = vperm.xlu0 %3075, %v2690
    %v3077 = vpop.permute.xlu0 %3076
    %v3079 = vmul.f32 %v3077, %v2741
    %v3080 = vmul.f32 %v3077, %v2733
    %v3081 = vmul.f32 %v3077, %v2734
    %v3082 = vmul.f32 %v3077, %v2735
    %v3083 = vmul.f32 %v3077, %v2731
    %3089 = vrot.lane.b32.xlu0 %v3079, 123
    %v3090 = vpop.permute.xlu0 %3089
    %3091 = vrot.lane.b32.xlu0 %v3080, 123
    %v3092 = vpop.permute.xlu0 %3091
    %3093 = vrot.lane.b32.xlu0 %v3081, 123
    %v3094 = vpop.permute.xlu0 %3093
    %3095 = vrot.lane.b32.xlu0 %v3082, 123
    %v3096 = vpop.permute.xlu0 %3095
    %3097 = vrot.lane.b32.xlu0 %v3083, 123
    %v3098 = vpop.permute.xlu0 %3097
    %vm3099 = vcmask 1006592
    %v3100 = vsel %vm3099, %v3090, %v3092
    %v3101 = vsel %vm3099, %v3092, %v3094
    %v3102 = vsel %vm3099, %v3094, %v3096
    %v3103 = vsel %vm3099, %v3096, %v3098
    %v3108 = vadd.f32 %v3071, %v3100
    %v3109 = vadd.f32 %v3072, %v3101
    %v3110 = vadd.f32 %v3073, %v3102
    %v3111 = vadd.f32 %v3074, %v3103
    %3112 = vset.pattern.permute.xlu0 11
    %3113 = vperm.xlu0 %3112, %v2690
    %v3114 = vpop.permute.xlu0 %3113
    %v3116 = vmul.f32 %v3114, %v2741
    %v3117 = vmul.f32 %v3114, %v2733
    %v3118 = vmul.f32 %v3114, %v2734
    %v3119 = vmul.f32 %v3114, %v2735
    %v3120 = vmul.f32 %v3114, %v2731
    %3126 = vrot.lane.b32.xlu0 %v3116, 124
    %v3127 = vpop.permute.xlu0 %3126
    %3128 = vrot.lane.b32.xlu0 %v3117, 124
    %v3129 = vpop.permute.xlu0 %3128
    %3130 = vrot.lane.b32.xlu0 %v3118, 124
    %v3131 = vpop.permute.xlu0 %3130
    %3132 = vrot.lane.b32.xlu0 %v3119, 124
    %v3133 = vpop.permute.xlu0 %3132
    %3134 = vrot.lane.b32.xlu0 %v3120, 124
    %v3135 = vpop.permute.xlu0 %3134
    %vm3136 = vcmask 1014784
    %v3137 = vsel %vm3136, %v3127, %v3129
    %v3138 = vsel %vm3136, %v3129, %v3131
    %v3139 = vsel %vm3136, %v3131, %v3133
    %v3140 = vsel %vm3136, %v3133, %v3135
    %v3145 = vadd.f32 %v3108, %v3137
    %v3146 = vadd.f32 %v3109, %v3138
    %v3147 = vadd.f32 %v3110, %v3139
    %v3148 = vadd.f32 %v3111, %v3140
    %3149 = vset.pattern.permute.xlu0 12
    %3150 = vperm.xlu0 %3149, %v2690
    %v3151 = vpop.permute.xlu0 %3150
    %v3153 = vmul.f32 %v3151, %v2741
    %v3154 = vmul.f32 %v3151, %v2733
    %v3155 = vmul.f32 %v3151, %v2734
    %v3156 = vmul.f32 %v3151, %v2735
    %v3157 = vmul.f32 %v3151, %v2731
    %3163 = vrot.lane.b32.xlu0 %v3153, 125
    %v3164 = vpop.permute.xlu0 %3163
    %3165 = vrot.lane.b32.xlu0 %v3154, 125
    %v3166 = vpop.permute.xlu0 %3165
    %3167 = vrot.lane.b32.xlu0 %v3155, 125
    %v3168 = vpop.permute.xlu0 %3167
    %3169 = vrot.lane.b32.xlu0 %v3156, 125
    %v3170 = vpop.permute.xlu0 %3169
    %3171 = vrot.lane.b32.xlu0 %v3157, 125
    %v3172 = vpop.permute.xlu0 %3171
    %vm3173 = vcmask 1022976
    %v3174 = vsel %vm3173, %v3164, %v3166
    %v3175 = vsel %vm3173, %v3166, %v3168
    %v3176 = vsel %vm3173, %v3168, %v3170
    %v3177 = vsel %vm3173, %v3170, %v3172
    %v3182 = vadd.f32 %v3145, %v3174
    %v3183 = vadd.f32 %v3146, %v3175
    %v3184 = vadd.f32 %v3147, %v3176
    %v3185 = vadd.f32 %v3148, %v3177
    %3186 = vset.pattern.permute.xlu0 13
    %3187 = vperm.xlu0 %3186, %v2690
    %v3188 = vpop.permute.xlu0 %3187
    %v3190 = vmul.f32 %v3188, %v2741
    %v3191 = vmul.f32 %v3188, %v2733
    %v3192 = vmul.f32 %v3188, %v2734
    %v3193 = vmul.f32 %v3188, %v2735
    %v3194 = vmul.f32 %v3188, %v2731
    %3200 = vrot.lane.b32.xlu0 %v3190, 126
    %v3201 = vpop.permute.xlu0 %3200
    %3202 = vrot.lane.b32.xlu0 %v3191, 126
    %v3203 = vpop.permute.xlu0 %3202
    %3204 = vrot.lane.b32.xlu0 %v3192, 126
    %v3205 = vpop.permute.xlu0 %3204
    %3206 = vrot.lane.b32.xlu0 %v3193, 126
    %v3207 = vpop.permute.xlu0 %3206
    %3208 = vrot.lane.b32.xlu0 %v3194, 126
    %v3209 = vpop.permute.xlu0 %3208
    %vm3210 = vcmask 1031168
    %v3211 = vsel %vm3210, %v3201, %v3203
    %v3212 = vsel %vm3210, %v3203, %v3205
    %v3213 = vsel %vm3210, %v3205, %v3207
    %v3214 = vsel %vm3210, %v3207, %v3209
    %v3219 = vadd.f32 %v3182, %v3211
    %v3220 = vadd.f32 %v3183, %v3212
    %v3221 = vadd.f32 %v3184, %v3213
    %v3222 = vadd.f32 %v3185, %v3214
    %3223 = vset.pattern.permute.xlu0 14
    %3224 = vperm.xlu0 %3223, %v2690
    %v3225 = vpop.permute.xlu0 %3224
    %v3227 = vmul.f32 %v3225, %v2741
    %v3228 = vmul.f32 %v3225, %v2733
    %v3229 = vmul.f32 %v3225, %v2734
    %v3230 = vmul.f32 %v3225, %v2735
    %v3231 = vmul.f32 %v3225, %v2731
    %3237 = vrot.lane.b32.xlu0 %v3227, 127
    %v3238 = vpop.permute.xlu0 %3237
    %3239 = vrot.lane.b32.xlu0 %v3228, 127
    %v3240 = vpop.permute.xlu0 %3239
    %3241 = vrot.lane.b32.xlu0 %v3229, 127
    %v3242 = vpop.permute.xlu0 %3241
    %3243 = vrot.lane.b32.xlu0 %v3230, 127
    %v3244 = vpop.permute.xlu0 %3243
    %3245 = vrot.lane.b32.xlu0 %v3231, 127
    %v3246 = vpop.permute.xlu0 %3245
    %vm3247 = vcmask 1039360
    %v3248 = vsel %vm3247, %v3238, %v3240
    %v3249 = vsel %vm3247, %v3240, %v3242
    %v3250 = vsel %vm3247, %v3242, %v3244
    %v3251 = vsel %vm3247, %v3244, %v3246
    %v3256 = vadd.f32 %v3219, %v3248
    %v3257 = vadd.f32 %v3220, %v3249
    %v3258 = vadd.f32 %v3221, %v3250
    %v3259 = vadd.f32 %v3222, %v3251
    %3260 = vset.pattern.permute.xlu0 15
    %3261 = vperm.xlu0 %3260, %v2690
    %v3262 = vpop.permute.xlu0 %3261
    %v3264 = vmul.f32 %v3262, %v2741
    %v3265 = vmul.f32 %v3262, %v2733
    %v3266 = vmul.f32 %v3262, %v2734
    %v3267 = vmul.f32 %v3262, %v2735
    %v3268 = vadd.f32 %v3256, %v3264
    %v3269 = vadd.f32 %v3257, %v3265
    %v3270 = vadd.f32 %v3258, %v3266
    %v3271 = vadd.f32 %v3259, %v3267
    %v3276 = vrot.slane %v3269, 4
    %v3277 = vrot.slane %v3271, 4
    %vm3278 = vcmask 1043456
    %v3279 = vsel %vm3278, %v3268, %v3276
    %v3280 = vsel %vm3278, %v3270, %v3277
    %3283 = vst [vmem:[#allocation8] sm:$0xff] %v3279
    %3284 = vst [vmem:[#allocation8 + $0x8] sm:$0xff] %v3280
    // Predicated region
    $region34: #{tpu_custom_call.1} parent=1 // pred_check
      _
    $region35: #{tpu_custom_call.1} parent=1 // pred_check_branch
      %3286 = sbr.rel (0) target = $region37
    $region36: #{tpu_custom_call.1} parent=1 // pred_region
      %3288 = vsyncadd [#allocation5], 0
      %s3289 = sshll.u32 [#allocation4], 4
      %s3290 = int_to_ptr.vmem [resolvable:$true] %s3289
      %s3291 = sshll.u32 %s8, 4
      %s3292 = int_to_ptr.hbm [resolvable:$true] %s3291
      %3297 = dma.vmem_to_hbm [thread:$0]  %s3290, 1152, %s3292, [#allocation5], 128, 128, 8
    $region37: #{tpu_custom_call.1} parent=1 // pred_fallthru
      _
    // Predicated region
    $region38: #{tpu_custom_call.1} parent=1 // pred_check
      _
    $region39: #{tpu_custom_call.1} parent=1 // pred_check_branch
      %3299 = sbr.rel (0) target = $region41
    $region40: #{tpu_custom_call.1} parent=1 // pred_region
      %3301 = vsyncadd [#allocation7], 0
      %s3302 = sshll.u32 [#allocation6], 4
      %s3303 = int_to_ptr.vmem [resolvable:$true] %s3302
      %s3304 = sshll.u32 %s9, 4
      %s3305 = int_to_ptr.hbm [resolvable:$true] %s3304
      %3310 = dma.vmem_to_hbm [thread:$0]  %s3303, 2176, %s3305, [#allocation7], 128, 128, 8
    $region41: #{tpu_custom_call.1} parent=1 // pred_fallthru
      _
    // Predicated region
    $region42: #{tpu_custom_call.1} parent=1 // pred_check
      _
    $region43: #{tpu_custom_call.1} parent=1 // pred_check_branch
      %3312 = sbr.rel (0) target = $region45
    $region44: #{tpu_custom_call.1} parent=1 // pred_region
      %3314 = vsyncadd [#allocation7], 0
      %s3316 = sshll.u32 [#allocation8], 4
      %s3317 = int_to_ptr.vmem [resolvable:$true] %s3316
      %s3318 = sshll.u32 %s10, 4
      %s3319 = int_to_ptr.hbm [resolvable:$true] %s3318
      %3321 = dma.vmem_to_hbm [thread:$0]  %s3317, 256, %s3319, [#allocation7]
    $region45: #{tpu_custom_call.1} parent=1 // pred_fallthru
      _
    // Predicated region
    $region46: #{tpu_custom_call.1} parent=1 // pred_check
      _
    $region47: #{tpu_custom_call.1} parent=1 // pred_check_branch
      %3323 = sbr.rel (0) target = $region49
    $region48: #{tpu_custom_call.1} parent=1 // pred_region
      %3325 = dma.done [#allocation5], 1152
    $region49: #{tpu_custom_call.1} parent=1 // pred_fallthru
      _
    // Predicated region
    $region50: #{tpu_custom_call.1} parent=1 // pred_check
      _
    $region51: #{tpu_custom_call.1} parent=1 // pred_check_branch
      %3327 = sbr.rel (0) target = $region53
    $region52: #{tpu_custom_call.1} parent=1 // pred_region
      %3329 = dma.done [#allocation7], 2176
    $region53: #{tpu_custom_call.1} parent=1 // pred_fallthru
      _
    // Predicated region
    $region54: #{tpu_custom_call.1} parent=1 // pred_check
      _
    $region55: #{tpu_custom_call.1} parent=1 // pred_check_branch
      %3331 = sbr.rel (0) target = $region57
    $region56: #{tpu_custom_call.1} parent=1 // pred_region
      %3333 = dma.done [#allocation7], 256
    $region57: #{tpu_custom_call.1} parent=1 // pred_fallthru
      _
    %3334 = vsyncpa [#allocation5], 1
    %3335 = vsyncpa [#allocation7], 1

</llo_original>
